<compile_context>
chip_gen: v7x
topology: tpu7x:2x2x1
jax: 0.10.0
libtpu: 0.0.40
codegen_flags: <defaults>
</compile_context>

<pallas_src>
import jax
import jax.numpy as jnp
import numpy as np
from jax import lax
from jax.experimental import pallas as pl
from jax.experimental.pallas import tpu as pltpu

_EPS = 1e-5


def _basic_block_kernel(xw_ref, w1_ref, b1_ref, w2_ref, b2_ref, o_ref):
    # xw_ref : (TH+4, W+2, Cin)  padded input window (H pad 2, W pad 1), NHWC
    # w1_ref : (9*Cin,  Cout)    conv1 taps, BN1 scale folded in, (kh,kw,cin) major
    # b1_ref : (1, Cout)         folded BN1 bias
    # w2_ref : (9*Cout, Cout)    conv2 taps, BN2 scale folded in
    # b2_ref : (1, Cout)         folded BN2 bias
    # o_ref  : (TH, W, Cout)
    TH, W, Cout = o_ref.shape
    Cin = xw_ref.shape[2]
    R1 = TH + 2                       # conv1 rows: TH output rows + 1 halo row each side

    i = pl.program_id(1)
    H_img = pl.num_programs(1) * TH   # total (un-padded) image height

    # ---- conv1 (+ folded BN1 scale) as a single fat-K matmul, then bias + ReLU ----
    patches1 = jnp.concatenate(
        [xw_ref[kh:kh + R1, kw:kw + W, :] for kh in range(3) for kw in range(3)],
        axis=-1)                                              # (R1, W, 9*Cin)
    mid = jnp.dot(patches1.reshape(R1 * W, 9 * Cin), w1_ref[...],
                  preferred_element_type=jnp.float32)
    mid = jnp.maximum(mid.reshape(R1, W, Cout) + b1_ref[...], 0.0)

    # Halo rows of `mid` that fall outside the image act as conv2's zero H-padding.
    g = i * TH - 1 + lax.broadcasted_iota(jnp.int32, (R1, 1, 1), 0)
    mid = jnp.where((g >= 0) & (g < H_img), mid, 0.0)

    # conv2's zero W-padding: value-level concat, no scratch round trip.
    zcol = jnp.zeros((R1, 1, Cout), jnp.float32)
    midp = jnp.concatenate([zcol, mid, zcol], axis=1)         # (R1, W+2, Cout)

    # ---- conv2 (+ folded BN2 scale) as a single fat-K matmul ----
    patches2 = jnp.concatenate(
        [midp[kh:kh + TH, kw:kw + W, :] for kh in range(3) for kw in range(3)],
        axis=-1)                                              # (TH, W, 9*Cout)
    out2 = jnp.dot(patches2.reshape(TH * W, 9 * Cout), w2_ref[...],
                   preferred_element_type=jnp.float32)
    out2 = out2.reshape(TH, W, Cout) + b2_ref[...]

    # ---- residual add + final ReLU (identity sliced lazily from the input ref) ----
    identity = xw_ref[2:2 + TH, 1:1 + W, :].astype(jnp.float32)
    o_ref[...] = jnp.maximum(out2 + identity, 0.0).astype(o_ref.dtype)


def _fold_bn(gamma, beta, mean, var, eps=_EPS):
    scale = gamma / jnp.sqrt(var + eps)
    bias = beta - mean * scale
    return scale, bias


def _pick_row_block(H):
    """Largest convenient row-block size that divides H."""
    if H <= 32:
        return H
    for cand in (32, 28, 16, 14, 8, 7, 4, 2):
        if H % cand == 0:
            return cand
    return H


def basic_block_forward(x_nchw, params):
    """BasicBlock(inplanes=planes, stride=1, downsample=None) forward. NCHW in/out."""
    w1, g1, be1, rm1, rv1, w2, g2, be2, rm2, rv2 = params
    s1, b1 = _fold_bn(g1, be1, rm1, rv1)
    s2, b2 = _fold_bn(g2, be2, rm2, rv2)

    x = jnp.transpose(x_nchw, (0, 2, 3, 1)).astype(jnp.float32)   # NCHW -> NHWC
    N, H, W, Cin = x.shape
    Cout = w1.shape[0]
    if Cin != Cout:
        raise ValueError("BasicBlock kernel requires inplanes == planes "
                         "(stride=1, no downsample).")

    TH = _pick_row_block(H)
    nblk = H // TH

    # Overlapping row windows (2-row halo each side) of the zero-padded input,
    # so the grid can use plain Blocked indexing (no in-kernel halo DMA).
    xpad = jnp.pad(x, ((0, 0), (2, 2), (1, 1), (0, 0)))           # (N, H+4, W+2, Cin)
    xwin = jnp.stack([xpad[:, i * TH: i * TH + TH + 4] for i in range(nblk)],
                     axis=1)                                      # (N, nblk, TH+4, W+2, Cin)

    # PyTorch conv weight [out, in, kh, kw] -> [(kh,kw,in), out], BN scale folded in.
    w1k = jnp.transpose(w1, (2, 3, 1, 0)).reshape(9 * Cin, Cout) * s1[None, :]
    w2k = jnp.transpose(w2, (2, 3, 1, 0)).reshape(9 * Cout, Cout) * s2[None, :]
    b1k = b1.reshape(1, Cout)
    b2k = b2.reshape(1, Cout)

    flops = 2 * N * H * W * 9 * Cout * (Cin + Cout)
    bytes_accessed = 4 * (xwin.size + w1k.size + w2k.size + 2 * Cout + N * H * W * Cout)

    out_nhwc = pl.pallas_call(
        _basic_block_kernel,
        out_shape=jax.ShapeDtypeStruct((N, H, W, Cout), jnp.float32),
        grid=(N, nblk),
        in_specs=[
            pl.BlockSpec((None, None, TH + 4, W + 2, Cin),
                         lambda n, i: (n, i, 0, 0, 0)),
            pl.BlockSpec((9 * Cin, Cout), lambda n, i: (0, 0)),
            pl.BlockSpec((1, Cout), lambda n, i: (0, 0)),
            pl.BlockSpec((9 * Cout, Cout), lambda n, i: (0, 0)),
            pl.BlockSpec((1, Cout), lambda n, i: (0, 0)),
        ],
        out_specs=pl.BlockSpec((None, TH, W, Cout), lambda n, i: (n, i, 0, 0)),
        compiler_params=pltpu.CompilerParams(
            dimension_semantics=("parallel", "parallel"),
            vmem_limit_bytes=32 * 1024 * 1024,
        ),
        cost_estimate=pl.CostEstimate(flops=int(flops), transcendentals=0,
                                      bytes_accessed=int(bytes_accessed)),
    )(xwin, w1k, b1k, w2k, b2k)

    return jnp.transpose(out_nhwc, (0, 3, 1, 2))                  # NHWC -> NCHW


def _reference_forward(x_nchw, params):
    """Pure-JAX reference (lax.conv) for correctness checking."""
    w1, g1, be1, rm1, rv1, w2, g2, be2, rm2, rv2 = params
    s1, b1 = _fold_bn(g1, be1, rm1, rv1)
    s2, b2 = _fold_bn(g2, be2, rm2, rv2)

    x = jnp.transpose(x_nchw, (0, 2, 3, 1)).astype(jnp.float32)

    def conv3x3(inp, w_oihw):
        w_hwio = jnp.transpose(w_oihw, (2, 3, 1, 0))
        return lax.conv_general_dilated(
            inp, w_hwio, window_strides=(1, 1), padding=((1, 1), (1, 1)),
            dimension_numbers=("NHWC", "HWIO", "NHWC"))

    o = conv3x3(x, w1) * s1 + b1
    o = jnp.maximum(o, 0.0)
    o = conv3x3(o, w2) * s2 + b2
    o = jnp.maximum(o + x, 0.0)
    return jnp.transpose(o, (0, 3, 1, 2))


def init_params(key, inplanes, planes):
    """Deterministic synthetic parameters matching BasicBlock.__init__ shapes."""
    k = jax.random.split(key, 8)
    w1 = jax.random.normal(k[0], (planes, inplanes, 3, 3), jnp.float32) * 0.1
    w2 = jax.random.normal(k[1], (planes, planes, 3, 3), jnp.float32) * 0.1
    g1 = 1.0 + 0.1 * jax.random.normal(k[2], (planes,), jnp.float32)
    be1 = 0.1 * jax.random.normal(k[3], (planes,), jnp.float32)
    rm1 = 0.1 * jax.random.normal(k[4], (planes,), jnp.float32)
    rv1 = jnp.abs(jax.random.normal(k[5], (planes,), jnp.float32)) + 0.5
    g2 = 1.0 + 0.1 * jax.random.normal(k[6], (planes,), jnp.float32)
    be2 = 0.1 * jax.random.normal(k[7], (planes,), jnp.float32)
    rm2 = jnp.zeros((planes,), jnp.float32)
    rv2 = jnp.ones((planes,), jnp.float32)
    return (w1, g1, be1, rm1, rv1, w2, g2, be2, rm2, rv2)


if __name__ == "__main__":
    key = jax.random.PRNGKey(0)
    kx, kp = jax.random.split(key)

    N, C, H, W = 2, 4, 16, 16           # inplanes = planes = 4, stride=1, no downsample
    x = jax.random.normal(kx, (N, C, H, W), jnp.float32)
    params = init_params(kp, C, C)

    out = basic_block_forward(x, params)
    out = jax.block_until_ready(out)

    ref = jax.block_until_ready(_reference_forward(x, params))
    np.testing.assert_allclose(np.asarray(out), np.asarray(ref), atol=5e-2, rtol=5e-2)
    assert out.shape == (N, C, H, W)

    print("KERNEL_OK")
</pallas_src>

<mosaic_0001>
module attributes {stable_mosaic.version = 11 : i64} {
  func.func @_basic_block_kernel(%arg0: i32, %arg1: i32, %arg2: memref<1x1x20x18x4xf32, #tpu.memory_space<vmem>>, %arg3: memref<36x4xf32, #tpu.memory_space<vmem>>, %arg4: memref<1x4xf32, #tpu.memory_space<vmem>>, %arg5: memref<36x4xf32, #tpu.memory_space<vmem>>, %arg6: memref<1x4xf32, #tpu.memory_space<vmem>>, %arg7: memref<1x16x16x4xf32, #tpu.memory_space<vmem>>) attributes {dimension_semantics = [#tpu.dimension_semantics<parallel>, #tpu.dimension_semantics<parallel>], iteration_bounds = array<i64: 2, 1>, scalar_prefetch = 0 : i64, scratch_operands = 0 : i64, tpu.core_type = #tpu.core_type<tc>, window_params = [{transform_indices = @transform_0, window_bounds = array<i64: 1, 1, 20, 18, 4>}, {pipeline_mode = #tpu.pipeline_mode<synchronous>, transform_indices = @transform_1, window_bounds = array<i64: 36, 4>}, {pipeline_mode = #tpu.pipeline_mode<synchronous>, transform_indices = @transform_2, window_bounds = array<i64: 1, 4>}, {pipeline_mode = #tpu.pipeline_mode<synchronous>, transform_indices = @transform_3, window_bounds = array<i64: 36, 4>}, {pipeline_mode = #tpu.pipeline_mode<synchronous>, transform_indices = @transform_4, window_bounds = array<i64: 1, 4>}, {transform_indices = @transform_5, window_bounds = array<i64: 1, 16, 16, 4>}]} {
    %c0 = arith.constant 0 : index
    %c0_0 = arith.constant 0 : index
    %c0_1 = arith.constant 0 : index
    %c0_2 = arith.constant 0 : index
    %c0_3 = arith.constant 0 : index
    %0 = vector.load %arg2[%c0, %c0_0, %c0_1, %c0_2, %c0_3] : memref<1x1x20x18x4xf32, #tpu.memory_space<vmem>>, vector<1x1x18x16x4xf32>
    %1 = vector.shape_cast %0 : vector<1x1x18x16x4xf32> to vector<18x16x4xf32>
    %c0_4 = arith.constant 0 : index
    %c0_5 = arith.constant 0 : index
    %c0_6 = arith.constant 0 : index
    %c1 = arith.constant 1 : index
    %c0_7 = arith.constant 0 : index
    %2 = vector.load %arg2[%c0_4, %c0_5, %c0_6, %c1, %c0_7] : memref<1x1x20x18x4xf32, #tpu.memory_space<vmem>>, vector<1x1x18x16x4xf32>
    %3 = vector.shape_cast %2 : vector<1x1x18x16x4xf32> to vector<18x16x4xf32>
    %c0_8 = arith.constant 0 : index
    %c0_9 = arith.constant 0 : index
    %c0_10 = arith.constant 0 : index
    %c2 = arith.constant 2 : index
    %c0_11 = arith.constant 0 : index
    %4 = vector.load %arg2[%c0_8, %c0_9, %c0_10, %c2, %c0_11] : memref<1x1x20x18x4xf32, #tpu.memory_space<vmem>>, vector<1x1x18x16x4xf32>
    %5 = vector.shape_cast %4 : vector<1x1x18x16x4xf32> to vector<18x16x4xf32>
    %c0_12 = arith.constant 0 : index
    %c0_13 = arith.constant 0 : index
    %c1_14 = arith.constant 1 : index
    %c0_15 = arith.constant 0 : index
    %c0_16 = arith.constant 0 : index
    %6 = vector.load %arg2[%c0_12, %c0_13, %c1_14, %c0_15, %c0_16] : memref<1x1x20x18x4xf32, #tpu.memory_space<vmem>>, vector<1x1x18x16x4xf32>
    %7 = vector.shape_cast %6 : vector<1x1x18x16x4xf32> to vector<18x16x4xf32>
    %c0_17 = arith.constant 0 : index
    %c0_18 = arith.constant 0 : index
    %c1_19 = arith.constant 1 : index
    %c1_20 = arith.constant 1 : index
    %c0_21 = arith.constant 0 : index
    %8 = vector.load %arg2[%c0_17, %c0_18, %c1_19, %c1_20, %c0_21] : memref<1x1x20x18x4xf32, #tpu.memory_space<vmem>>, vector<1x1x18x16x4xf32>
    %9 = vector.shape_cast %8 : vector<1x1x18x16x4xf32> to vector<18x16x4xf32>
    %c0_22 = arith.constant 0 : index
    %c0_23 = arith.constant 0 : index
    %c1_24 = arith.constant 1 : index
    %c2_25 = arith.constant 2 : index
    %c0_26 = arith.constant 0 : index
    %10 = vector.load %arg2[%c0_22, %c0_23, %c1_24, %c2_25, %c0_26] : memref<1x1x20x18x4xf32, #tpu.memory_space<vmem>>, vector<1x1x18x16x4xf32>
    %11 = vector.shape_cast %10 : vector<1x1x18x16x4xf32> to vector<18x16x4xf32>
    %c0_27 = arith.constant 0 : index
    %c0_28 = arith.constant 0 : index
    %c2_29 = arith.constant 2 : index
    %c0_30 = arith.constant 0 : index
    %c0_31 = arith.constant 0 : index
    %12 = vector.load %arg2[%c0_27, %c0_28, %c2_29, %c0_30, %c0_31] : memref<1x1x20x18x4xf32, #tpu.memory_space<vmem>>, vector<1x1x18x16x4xf32>
    %13 = vector.shape_cast %12 : vector<1x1x18x16x4xf32> to vector<18x16x4xf32>
    %c0_32 = arith.constant 0 : index
    %c0_33 = arith.constant 0 : index
    %c2_34 = arith.constant 2 : index
    %c1_35 = arith.constant 1 : index
    %c0_36 = arith.constant 0 : index
    %14 = vector.load %arg2[%c0_32, %c0_33, %c2_34, %c1_35, %c0_36] : memref<1x1x20x18x4xf32, #tpu.memory_space<vmem>>, vector<1x1x18x16x4xf32>
    %15 = vector.shape_cast %14 : vector<1x1x18x16x4xf32> to vector<18x16x4xf32>
    %c0_37 = arith.constant 0 : index
    %c0_38 = arith.constant 0 : index
    %c2_39 = arith.constant 2 : index
    %c2_40 = arith.constant 2 : index
    %c0_41 = arith.constant 0 : index
    %16 = vector.load %arg2[%c0_37, %c0_38, %c2_39, %c2_40, %c0_41] : memref<1x1x20x18x4xf32, #tpu.memory_space<vmem>>, vector<1x1x18x16x4xf32>
    %17 = vector.shape_cast %16 : vector<1x1x18x16x4xf32> to vector<18x16x4xf32>
    %18 = tpu.concatenate %1, %3, %5, %7, %9, %11, %13, %15, %17 in 2 : vector<18x16x4xf32>, vector<18x16x4xf32>, vector<18x16x4xf32>, vector<18x16x4xf32>, vector<18x16x4xf32>, vector<18x16x4xf32>, vector<18x16x4xf32>, vector<18x16x4xf32>, vector<18x16x4xf32> -> vector<18x16x36xf32>
    %19 = vector.shape_cast %18 : vector<18x16x36xf32> to vector<288x36xf32>
    %c0_42 = arith.constant 0 : index
    %c0_43 = arith.constant 0 : index
    %20 = vector.load %arg3[%c0_42, %c0_43] : memref<36x4xf32, #tpu.memory_space<vmem>>, vector<36x4xf32>
    %cst = arith.constant dense<0.000000e+00> : vector<288x4xf32>
    %21 = tpu.matmul %19, %20, %cst {dimension_numbers = #tpu.dot_dimension_numbers<[1], [0], [0], [1], [0, 0, 1, 1], [], []>} : vector<288x36xf32>, vector<36x4xf32>, vector<288x4xf32> -> vector<288x4xf32>
    %22 = vector.shape_cast %21 : vector<288x4xf32> to vector<18x16x4xf32>
    %c0_44 = arith.constant 0 : index
    %c0_45 = arith.constant 0 : index
    %23 = vector.load %arg4[%c0_44, %c0_45] : memref<1x4xf32, #tpu.memory_space<vmem>>, vector<1x4xf32>
    %24 = vector.shape_cast %23 : vector<1x4xf32> to vector<1x1x4xf32>
    %25 = vector.broadcast %24 : vector<1x1x4xf32> to vector<18x16x4xf32>
    %26 = arith.addf %22, %25 : vector<18x16x4xf32>
    %cst_46 = arith.constant 0.000000e+00 : f32
    %27 = vector.broadcast %cst_46 : f32 to vector<18x16x4xf32>
    %28 = arith.maximumf %26, %27 : vector<18x16x4xf32>
    %c16_i32 = arith.constant 16 : i32
    %29 = arith.muli %arg1, %c16_i32 : i32
    %c1_i32 = arith.constant 1 : i32
    %30 = arith.subi %29, %c1_i32 : i32
    %31 = tpu.iota {dimensions = array<i32: 0>} : vector<18x1x1xi32>
    %32 = vector.broadcast %30 : i32 to vector<18x1x1xi32>
    %33 = arith.addi %32, %31 : vector<18x1x1xi32>
    %c0_i32 = arith.constant 0 : i32
    %34 = vector.broadcast %c0_i32 : i32 to vector<18x1x1xi32>
    %35 = arith.cmpi sge, %33, %34 : vector<18x1x1xi32>
    %c16_i32_47 = arith.constant 16 : i32
    %36 = vector.broadcast %c16_i32_47 : i32 to vector<18x1x1xi32>
    %37 = arith.cmpi slt, %33, %36 : vector<18x1x1xi32>
    %38 = arith.andi %35, %37 : vector<18x1x1xi1>
    %cst_48 = arith.constant 0.000000e+00 : f32
    %39 = vector.shape_cast %38 : vector<18x1x1xi1> to vector<18x1x1xi1>
    %40 = vector.broadcast %39 : vector<18x1x1xi1> to vector<18x16x4xi1>
    %41 = vector.broadcast %cst_48 : f32 to vector<18x16x4xf32>
    %42 = arith.select %40, %28, %41 : vector<18x16x4xi1>, vector<18x16x4xf32>
    %cst_49 = arith.constant 0.000000e+00 : f32
    %43 = vector.broadcast %cst_49 : f32 to vector<18x1x4xf32>
    %44 = tpu.concatenate %43, %42, %43 in 1 : vector<18x1x4xf32>, vector<18x16x4xf32>, vector<18x1x4xf32> -> vector<18x18x4xf32>
    %45 = vector.extract_strided_slice %44 {offsets = [0, 0, 0], sizes = [16, 16, 4], strides = [1, 1, 1]} : vector<18x18x4xf32> to vector<16x16x4xf32>
    %46 = vector.extract_strided_slice %44 {offsets = [0, 1, 0], sizes = [16, 16, 4], strides = [1, 1, 1]} : vector<18x18x4xf32> to vector<16x16x4xf32>
    %47 = vector.extract_strided_slice %44 {offsets = [0, 2, 0], sizes = [16, 16, 4], strides = [1, 1, 1]} : vector<18x18x4xf32> to vector<16x16x4xf32>
    %48 = vector.extract_strided_slice %44 {offsets = [1, 0, 0], sizes = [16, 16, 4], strides = [1, 1, 1]} : vector<18x18x4xf32> to vector<16x16x4xf32>
    %49 = vector.extract_strided_slice %44 {offsets = [1, 1, 0], sizes = [16, 16, 4], strides = [1, 1, 1]} : vector<18x18x4xf32> to vector<16x16x4xf32>
    %50 = vector.extract_strided_slice %44 {offsets = [1, 2, 0], sizes = [16, 16, 4], strides = [1, 1, 1]} : vector<18x18x4xf32> to vector<16x16x4xf32>
    %51 = vector.extract_strided_slice %44 {offsets = [2, 0, 0], sizes = [16, 16, 4], strides = [1, 1, 1]} : vector<18x18x4xf32> to vector<16x16x4xf32>
    %52 = vector.extract_strided_slice %44 {offsets = [2, 1, 0], sizes = [16, 16, 4], strides = [1, 1, 1]} : vector<18x18x4xf32> to vector<16x16x4xf32>
    %53 = vector.extract_strided_slice %44 {offsets = [2, 2, 0], sizes = [16, 16, 4], strides = [1, 1, 1]} : vector<18x18x4xf32> to vector<16x16x4xf32>
    %54 = tpu.concatenate %45, %46, %47, %48, %49, %50, %51, %52, %53 in 2 : vector<16x16x4xf32>, vector<16x16x4xf32>, vector<16x16x4xf32>, vector<16x16x4xf32>, vector<16x16x4xf32>, vector<16x16x4xf32>, vector<16x16x4xf32>, vector<16x16x4xf32>, vector<16x16x4xf32> -> vector<16x16x36xf32>
    %55 = vector.shape_cast %54 : vector<16x16x36xf32> to vector<256x36xf32>
    %c0_50 = arith.constant 0 : index
    %c0_51 = arith.constant 0 : index
    %56 = vector.load %arg5[%c0_50, %c0_51] : memref<36x4xf32, #tpu.memory_space<vmem>>, vector<36x4xf32>
    %cst_52 = arith.constant dense<0.000000e+00> : vector<256x4xf32>
    %57 = tpu.matmul %55, %56, %cst_52 {dimension_numbers = #tpu.dot_dimension_numbers<[1], [0], [0], [1], [0, 0, 1, 1], [], []>} : vector<256x36xf32>, vector<36x4xf32>, vector<256x4xf32> -> vector<256x4xf32>
    %58 = vector.shape_cast %57 : vector<256x4xf32> to vector<16x16x4xf32>
    %c0_53 = arith.constant 0 : index
    %c0_54 = arith.constant 0 : index
    %59 = vector.load %arg6[%c0_53, %c0_54] : memref<1x4xf32, #tpu.memory_space<vmem>>, vector<1x4xf32>
    %60 = vector.shape_cast %59 : vector<1x4xf32> to vector<1x1x4xf32>
    %61 = vector.broadcast %60 : vector<1x1x4xf32> to vector<16x16x4xf32>
    %62 = arith.addf %58, %61 : vector<16x16x4xf32>
    %c0_55 = arith.constant 0 : index
    %c0_56 = arith.constant 0 : index
    %c2_57 = arith.constant 2 : index
    %c1_58 = arith.constant 1 : index
    %c0_59 = arith.constant 0 : index
    %63 = vector.load %arg2[%c0_55, %c0_56, %c2_57, %c1_58, %c0_59] : memref<1x1x20x18x4xf32, #tpu.memory_space<vmem>>, vector<1x1x16x16x4xf32>
    %64 = vector.shape_cast %63 : vector<1x1x16x16x4xf32> to vector<16x16x4xf32>
    %65 = arith.addf %62, %64 : vector<16x16x4xf32>
    %cst_60 = arith.constant 0.000000e+00 : f32
    %66 = vector.broadcast %cst_60 : f32 to vector<16x16x4xf32>
    %67 = arith.maximumf %65, %66 : vector<16x16x4xf32>
    %c0_61 = arith.constant 0 : index
    %c0_62 = arith.constant 0 : index
    %c0_63 = arith.constant 0 : index
    %c0_64 = arith.constant 0 : index
    %68 = vector.load %arg7[%c0_61, %c0_62, %c0_63, %c0_64] : memref<1x16x16x4xf32, #tpu.memory_space<vmem>>, vector<1x16x16x4xf32>
    %69 = vector.shape_cast %68 : vector<1x16x16x4xf32> to vector<16x16x4xf32>
    %70 = vector.shape_cast %67 : vector<16x16x4xf32> to vector<1x16x16x4xf32>
    tpu.vector_store %arg7[%c0_61, %c0_62, %c0_63, %c0_64], %70 {strides = array<i32>} : memref<1x16x16x4xf32, #tpu.memory_space<vmem>>, vector<1x16x16x4xf32>,
    return
  }
  func.func @transform_0(%arg0: i32, %arg1: i32) -> (i32, i32, i32, i32, i32) {
    %c0_i32 = arith.constant 0 : i32
    %c0_i32_0 = arith.constant 0 : i32
    %c0_i32_1 = arith.constant 0 : i32
    %c0_i32_2 = arith.constant 0 : i32
    return %arg0, %arg1, %c0_i32, %c0_i32_0, %c0_i32_1 : i32, i32, i32, i32, i32
  }
  func.func @transform_1(%arg0: i32, %arg1: i32) -> (i32, i32) {
    %c0_i32 = arith.constant 0 : i32
    %c0_i32_0 = arith.constant 0 : i32
    %c0_i32_1 = arith.constant 0 : i32
    return %c0_i32, %c0_i32_0 : i32, i32
  }
  func.func @transform_2(%arg0: i32, %arg1: i32) -> (i32, i32) {
    %c0_i32 = arith.constant 0 : i32
    %c0_i32_0 = arith.constant 0 : i32
    %c0_i32_1 = arith.constant 0 : i32
    return %c0_i32, %c0_i32_0 : i32, i32
  }
  func.func @transform_3(%arg0: i32, %arg1: i32) -> (i32, i32) {
    %c0_i32 = arith.constant 0 : i32
    %c0_i32_0 = arith.constant 0 : i32
    %c0_i32_1 = arith.constant 0 : i32
    return %c0_i32, %c0_i32_0 : i32, i32
  }
  func.func @transform_4(%arg0: i32, %arg1: i32) -> (i32, i32) {
    %c0_i32 = arith.constant 0 : i32
    %c0_i32_0 = arith.constant 0 : i32
    %c0_i32_1 = arith.constant 0 : i32
    return %c0_i32, %c0_i32_0 : i32, i32
  }
  func.func @transform_5(%arg0: i32, %arg1: i32) -> (i32, i32, i32, i32) {
    %c0_i32 = arith.constant 0 : i32
    %c0_i32_0 = arith.constant 0 : i32
    %c0_i32_1 = arith.constant 0 : i32
    return %arg0, %arg1, %c0_i32, %c0_i32_0 : i32, i32, i32, i32
  }
}

</mosaic_0001>

<llo_original>
// kernel: tpu_custom_call.1
$region0: #{tpu_custom_call.1}
  #allocation0 [shape = 'u32[]', space=smem, size = 0x4, offset = 0x4, fixed_abs, tag = 'smem constant byte address 0x4 - core index']
  #allocation1 [shape = 'u32[144,128]{1,0:T(1,128)}', space=vmem, size = 0x12000, scoped, tag = 'internal scratch']
  %s0 = inlined_call_operand.vmem [shape: f32[2,1,20,18,4], index: 0, kind: input, shape index: {}]
  %s1 = inlined_call_operand.vmem [shape: f32[36,4], index: 1, kind: input, shape index: {}]
  %s2 = inlined_call_operand.vmem [shape: f32[1,4], index: 2, kind: input, shape index: {}]
  %s3 = inlined_call_operand.vmem [shape: f32[36,4], index: 3, kind: input, shape index: {}]
  %s4 = inlined_call_operand.vmem [shape: f32[1,4], index: 4, kind: input, shape index: {}]
  %s5 = inlined_call_operand.vmem [shape: f32[2,16,16,4], index: 5, kind: output, shape index: {}]
  %s6 = sld [smem:[#allocation0]]
  $region53: #{tpu_custom_call.1} parent=0
    _
  %s8 = ssub.s32 1, %s6
  %s9 = scalar_select 0, %s8, %s6
  loop: start=0, step=1, limit=4
  $region2: #{tpu_custom_call.1} parent=0 // loop_pre_header
    _
  $region3: #{tpu_custom_call.1} parent=0 // loop_header
    %s11 = sphi 0, %s15
    %p12 = scmp.ge.s32.totalorder %s11, 4
    %s18 = sphi 0, %s30
    %s19 = sphi 0, %s26
    %s20 = sphi 0, %s18
    %s21 = sphi 0, %s19
    %s22 = sphi 0, %s20
    %s23 = sphi 0, %s21
    %s35 = sphi 0, %s37
    %s38 = sphi 0, %s35
    %s39 = sphi 0, %s38
    %s55 = sphi 0, %s39
    %s59 = sphi 0, %s59
    %s61 = sphi 0, %s59
    %s62 = sphi 0, %s61
    %s76 = sphi 0, %s62
    %s80 = sphi 0, %s80
    %s82 = sphi 0, %s80
    %s83 = sphi 0, %s82
    %s97 = sphi 0, %s83
    %s101 = sphi 0, %s101
    %s103 = sphi 0, %s101
    %s104 = sphi 0, %s103
    %s118 = sphi 0, %s104
    %s122 = sphi 0, %s122
    %s124 = sphi 0, %s122
    %s125 = sphi 0, %s124
    %s139 = sphi 0, %s125
    %s147 = sphi 0, %s149
    %s150 = sphi 0, %s147
    %s151 = sphi 0, %s150
    %s167 = sphi 0, %s151
  $region4: #{tpu_custom_call.1} parent=0 // loop_header_branch
    %14 = sbr.rel (%p12) target = $region8
  $region5: #{tpu_custom_call.1} parent=0 // loop_body
    %s16 = ssub.s32 %s11, 1
    %s17 = ssub.s32 %s11, 2
    %s24 = sadd.s32 1, %s19
    %p25 = scmp.ge.s32.totalorder %s24, 1
    %s26 = scalar_select %p25, 0, %s24
    %s27 = sadd.s32 1, %s18
    %s28 = scalar_select %p25, %s27, %s18
    %p29 = scmp.ge.s32.totalorder %s28, 2
    %s30 = scalar_select %p29, 0, %s28
    %s31 = ssub.s32 %s18, %s30
    %s32 = ssub.s32 %s19, %s26
    %s33 = sor.u32 %s31, %s32
    %p34 = scmp.eq.s32.totalorder %s33, 0
    %s36 = sadd.s32 %s35, 1
    %s37 = scalar_select %p34, %s35, %s36
    %p40 = pneg %p34
    %p41 = scmp.eq.s32.totalorder %s11, 1
    %p42 = por %p40, %p41
    %p43 = scmp.ne.s32.totalorder %s35, %s38
    %p44 = scmp.eq.s32.totalorder %s11, 0
    %p45 = por %p43, %p44
    %p46 = scmp.ne.s32.totalorder %s35, %s38
    %p47 = scmp.eq.s32.totalorder %s16, 1
    %p48 = por %p46, %p47
    %p49 = scmp.ne.s32.totalorder %s38, %s39
    %p50 = scmp.eq.s32.totalorder %s16, 0
    %p51 = por %p49, %p50
    %p52 = scmp.ne.s32.totalorder %s38, %s39
    %p53 = scmp.eq.s32.totalorder %s17, 1
    %p54 = por %p52, %p53
    %p56 = scmp.ne.s32.totalorder %s39, %s55
    %p57 = scmp.eq.s32.totalorder %s17, 0
    %p58 = por %p56, %p57
    %s60 = sadd.s32 %s59, 1
    %p63 = scmp.eq.s32.totalorder %s11, 1
    %p64 = scmp.ne.s32.totalorder %s59, %s61
    %p65 = scmp.eq.s32.totalorder %s11, 0
    %p66 = por %p64, %p65
    %p67 = scmp.ne.s32.totalorder %s59, %s61
    %p68 = scmp.eq.s32.totalorder %s16, 1
    %p69 = por %p67, %p68
    %p70 = scmp.ne.s32.totalorder %s61, %s62
    %p71 = scmp.eq.s32.totalorder %s16, 0
    %p72 = por %p70, %p71
    %p73 = scmp.ne.s32.totalorder %s61, %s62
    %p74 = scmp.eq.s32.totalorder %s17, 1
    %p75 = por %p73, %p74
    %p77 = scmp.ne.s32.totalorder %s62, %s76
    %p78 = scmp.eq.s32.totalorder %s17, 0
    %p79 = por %p77, %p78
    %s81 = sadd.s32 %s80, 1
    %p84 = scmp.eq.s32.totalorder %s11, 1
    %p85 = scmp.ne.s32.totalorder %s80, %s82
    %p86 = scmp.eq.s32.totalorder %s11, 0
    %p87 = por %p85, %p86
    %p88 = scmp.ne.s32.totalorder %s80, %s82
    %p89 = scmp.eq.s32.totalorder %s16, 1
    %p90 = por %p88, %p89
    %p91 = scmp.ne.s32.totalorder %s82, %s83
    %p92 = scmp.eq.s32.totalorder %s16, 0
    %p93 = por %p91, %p92
    %p94 = scmp.ne.s32.totalorder %s82, %s83
    %p95 = scmp.eq.s32.totalorder %s17, 1
    %p96 = por %p94, %p95
    %p98 = scmp.ne.s32.totalorder %s83, %s97
    %p99 = scmp.eq.s32.totalorder %s17, 0
    %p100 = por %p98, %p99
    %s102 = sadd.s32 %s101, 1
    %p105 = scmp.eq.s32.totalorder %s11, 1
    %p106 = scmp.ne.s32.totalorder %s101, %s103
    %p107 = scmp.eq.s32.totalorder %s11, 0
    %p108 = por %p106, %p107
    %p109 = scmp.ne.s32.totalorder %s101, %s103
    %p110 = scmp.eq.s32.totalorder %s16, 1
    %p111 = por %p109, %p110
    %p112 = scmp.ne.s32.totalorder %s103, %s104
    %p113 = scmp.eq.s32.totalorder %s16, 0
    %p114 = por %p112, %p113
    %p115 = scmp.ne.s32.totalorder %s103, %s104
    %p116 = scmp.eq.s32.totalorder %s17, 1
    %p117 = por %p115, %p116
    %p119 = scmp.ne.s32.totalorder %s104, %s118
    %p120 = scmp.eq.s32.totalorder %s17, 0
    %p121 = por %p119, %p120
    %s123 = sadd.s32 %s122, 1
    %p126 = scmp.eq.s32.totalorder %s11, 1
    %p127 = scmp.ne.s32.totalorder %s122, %s124
    %p128 = scmp.eq.s32.totalorder %s11, 0
    %p129 = por %p127, %p128
    %p130 = scmp.ne.s32.totalorder %s122, %s124
    %p131 = scmp.eq.s32.totalorder %s16, 1
    %p132 = por %p130, %p131
    %p133 = scmp.ne.s32.totalorder %s124, %s125
    %p134 = scmp.eq.s32.totalorder %s16, 0
    %p135 = por %p133, %p134
    %p136 = scmp.ne.s32.totalorder %s124, %s125
    %p137 = scmp.eq.s32.totalorder %s17, 1
    %p138 = por %p136, %p137
    %p140 = scmp.ne.s32.totalorder %s125, %s139
    %p141 = scmp.eq.s32.totalorder %s17, 0
    %p142 = por %p140, %p141
    %s143 = ssub.s32 %s18, %s30
    %s144 = ssub.s32 %s19, %s26
    %s145 = sor.u32 %s143, %s144
    %p146 = scmp.eq.s32.totalorder %s145, 0
    %s148 = sadd.s32 %s147, 1
    %s149 = scalar_select %p146, %s147, %s148
    %p152 = pneg %p146
    %p153 = scmp.eq.s32.totalorder %s11, 1
    %p154 = por %p152, %p153
    %p155 = scmp.ne.s32.totalorder %s147, %s150
    %p156 = scmp.eq.s32.totalorder %s11, 0
    %p157 = por %p155, %p156
    %p158 = scmp.ne.s32.totalorder %s147, %s150
    %p159 = scmp.eq.s32.totalorder %s16, 1
    %p160 = por %p158, %p159
    %p161 = scmp.ne.s32.totalorder %s150, %s151
    %p162 = scmp.eq.s32.totalorder %s16, 0
    %p163 = por %p161, %p162
    %p164 = scmp.ne.s32.totalorder %s150, %s151
    %p165 = scmp.eq.s32.totalorder %s17, 1
    %p166 = por %p164, %p165
    %p168 = scmp.ne.s32.totalorder %s151, %s167
    %p169 = scmp.eq.s32.totalorder %s17, 0
    %p170 = por %p168, %p169
    %p171 = scmp.le.s32.totalorder 1, %s11
    %p172 = scmp.lt.s32.totalorder %s11, 3
    %p173 = pnand %p171, %p172
    %p174 = pneg %p173
    // Predicated region
    $region9: #{tpu_custom_call.1} parent=5 // pred_check
      _
    $region10: #{tpu_custom_call.1} parent=5 // pred_check_branch
      %176 = sbr.rel (%p173) target = $region12
    $region11: #{tpu_custom_call.1} parent=5 // pred_region
      %s177 = ssub.s32 %s11, 1
      // Predicated region
      $region13: #{tpu_custom_call.1} parent=11 // pred_check
        %p178 = pneg %p72
      $region14: #{tpu_custom_call.1} parent=11 // pred_check_branch
        %180 = sbr.rel (%p178) target = $region16
      $region15: #{tpu_custom_call.1} parent=11 // pred_region
        _
      $region16: #{tpu_custom_call.1} parent=11 // pred_fallthru
        _
      // Predicated region
      $region17: #{tpu_custom_call.1} parent=11 // pred_check
        %p181 = pneg %p93
      $region18: #{tpu_custom_call.1} parent=11 // pred_check_branch
        %183 = sbr.rel (%p181) target = $region20
      $region19: #{tpu_custom_call.1} parent=11 // pred_region
        _
      $region20: #{tpu_custom_call.1} parent=11 // pred_fallthru
        _
      // Predicated region
      $region21: #{tpu_custom_call.1} parent=11 // pred_check
        %p184 = pneg %p114
      $region22: #{tpu_custom_call.1} parent=11 // pred_check_branch
        %186 = sbr.rel (%p184) target = $region24
      $region23: #{tpu_custom_call.1} parent=11 // pred_region
        _
      $region24: #{tpu_custom_call.1} parent=11 // pred_fallthru
        _
      // Predicated region
      $region25: #{tpu_custom_call.1} parent=11 // pred_check
        %p187 = pneg %p135
      $region26: #{tpu_custom_call.1} parent=11 // pred_check_branch
        %189 = sbr.rel (%p187) target = $region28
      $region27: #{tpu_custom_call.1} parent=11 // pred_region
        _
      $region28: #{tpu_custom_call.1} parent=11 // pred_fallthru
        _
    $region12: #{tpu_custom_call.1} parent=5 // pred_fallthru
      _
    %p190 = scmp.lt.s32.totalorder %s11, 2
    // Predicated region
    $region29: #{tpu_custom_call.1} parent=5 // pred_check
      %p191 = pneg %p190
    $region30: #{tpu_custom_call.1} parent=5 // pred_check_branch
      %193 = sbr.rel (%p191) target = $region32
    $region31: #{tpu_custom_call.1} parent=5 // pred_region
      // Predicated region
      $region33: #{tpu_custom_call.1} parent=31 // pred_check
        %p194 = pneg %p45
      $region34: #{tpu_custom_call.1} parent=31 // pred_check_branch
        %196 = sbr.rel (%p194) target = $region36
      $region35: #{tpu_custom_call.1} parent=31 // pred_region
        %p197 = scmp.lt.s32.totalorder %s18, 1
        %s198 = scalar_select %p197, %s18, 1
        %p199 = scmp.lt.s32.totalorder %s19, 0
        %s200 = scalar_select %p199, %s19, 0
        %s201 = smul.addr %s200, 60
        %s202 = smul.addr %s198, 60
        %s203 = sadd.s32 %s201, %s202
        %s204 = smul.addr %s203, 8
        %s205 = scalar_lea.vmem %s0, %s204
      $region36: #{tpu_custom_call.1} parent=31 // pred_fallthru
        _
    $region32: #{tpu_custom_call.1} parent=5 // pred_fallthru
      _
    %p206 = scmp.le.s32.totalorder 1, %s11
    %p207 = scmp.lt.s32.totalorder %s11, 3
    %p208 = pnand %p206, %p207
    %p209 = pneg %p208
    // Predicated region
    $region37: #{tpu_custom_call.1} parent=5 // pred_check
      _
    $region38: #{tpu_custom_call.1} parent=5 // pred_check_branch
      %211 = sbr.rel (%p208) target = $region40
    $region39: #{tpu_custom_call.1} parent=5 // pred_region
      %s212 = ssub.s32 %s11, 1
      %p213 = scmp.lt.s32.totalorder %s20, 1
      %s214 = scalar_select %p213, %s20, 1
      %p215 = scmp.lt.s32.totalorder %s21, 0
      %s216 = scalar_select %p215, %s21, 0
      %s217 = smul.addr %s216, 60
      %s218 = smul.addr %s214, 60
      %s219 = sadd.s32 %s217, %s218
      %s220 = smul.addr %s219, 8
      %s221 = scalar_lea.vmem %s0, %s220
      %p222 = pneg %p51
      %p223 = pneg %p48
      %p224 = pneg %p72
      %p225 = pneg %p69
      %p226 = pneg %p93
      %p227 = pneg %p90
      %p228 = pneg %p114
      %p229 = pneg %p111
      %p230 = pneg %p135
      %p231 = pneg %p132
      %p232 = pneg %p163
      %p233 = pneg %p160
      %s234 = smul.u32 16, %s21
      %p235 = scmp.lt.s32.totalorder %s20, 1
      %s236 = scalar_select %p235, %s20, 1
      %p237 = scmp.lt.s32.totalorder %s234, 15
      %s238 = scalar_select %p237, %s234, 15
      %s239 = smul.addr %s238, 2
      %s240 = smul.addr %s236, 32
      %s241 = sadd.s32 %s239, %s240
      %s242 = smul.addr %s241, 8
      %s243 = scalar_lea.vmem %s5, %s242
      %p244 = scmp.lt.s32.totalorder %s20, 1
      %s245 = scalar_select %p244, %s20, 1
      %p246 = scmp.lt.s32.totalorder %s21, 0
      %s247 = scalar_select %p246, %s21, 0
      %s248 = smul.addr %s247, 60
      %s249 = smul.addr %s245, 60
      %s250 = sadd.s32 %s248, %s249
      %s251 = smul.addr %s250, 8
      %s252 = scalar_lea.vmem %s0, %s251
      %s253 = smul.u32 16, %s21
      %p254 = scmp.lt.s32.totalorder %s20, 1
      %s255 = scalar_select %p254, %s20, 1
      %p256 = scmp.lt.s32.totalorder %s253, 15
      %s257 = scalar_select %p256, %s253, 15
      %s258 = smul.addr %s257, 2
      %s259 = smul.addr %s255, 32
      %s260 = sadd.s32 %s258, %s259
      %s261 = smul.addr %s260, 8
      %s262 = scalar_lea.vmem %s5, %s261
      %s263 = smul.u32 16, %s21
      %v264 = vld [vmem:[%s252] sm:$0xff]
      %v265 = vld [vmem:[%s252 + $0x8] sm:$0xff]
      %v266 = vld [vmem:[%s252 + $0x18] sm:$0xff]
      %v267 = vld [vmem:[%s252 + $0x20] sm:$0xff]
      %v268 = vld [vmem:[%s252 + $0x30] sm:$0xff]
      %v269 = vld [vmem:[%s252 + $0x38] sm:$0xff]
      %v270 = vld [vmem:[%s252 + $0x48] sm:$0xff]
      %v271 = vld [vmem:[%s252 + $0x50] sm:$0xff]
      %v272 = vld [vmem:[%s252 + $0x60] sm:$0xff]
      %v273 = vld [vmem:[%s252 + $0x68] sm:$0xff]
      %v274 = vld [vmem:[%s252 + $0x78] sm:$0xff]
      %v275 = vld [vmem:[%s252 + $0x80] sm:$0xff]
      %v276 = vld [vmem:[%s252 + $0x90] sm:$0xff]
      %v277 = vld [vmem:[%s252 + $0x98] sm:$0xff]
      %v278 = vld [vmem:[%s252 + $0xa8] sm:$0xff]
      %v279 = vld [vmem:[%s252 + $0xb0] sm:$0xff]
      %v280 = vld [vmem:[%s252 + $0xc0] sm:$0xff]
      %v281 = vld [vmem:[%s252 + $0xc8] sm:$0xff]
      %v282 = vld [vmem:[%s252 + $0xd8] sm:$0xff]
      %v283 = vld [vmem:[%s252 + $0xe0] sm:$0xff]
      %v284 = vld [vmem:[%s252 + $0xf0] sm:$0xff]
      %v285 = vld [vmem:[%s252 + $0xf8] sm:$0xff]
      %v286 = vld [vmem:[%s252 + $0x108] sm:$0xff]
      %v287 = vld [vmem:[%s252 + $0x110] sm:$0xff]
      %v288 = vld [vmem:[%s252 + $0x120] sm:$0xff]
      %v289 = vld [vmem:[%s252 + $0x128] sm:$0xff]
      %v290 = vld [vmem:[%s252 + $0x138] sm:$0xff]
      %v291 = vld [vmem:[%s252 + $0x140] sm:$0xff]
      %v292 = vld [vmem:[%s252 + $0x150] sm:$0xff]
      %v293 = vld [vmem:[%s252 + $0x158] sm:$0xff]
      %v294 = vld [vmem:[%s252 + $0x168] sm:$0xff]
      %v295 = vld [vmem:[%s252 + $0x170] sm:$0xff]
      %v296 = vld [vmem:[%s252 + $0x180] sm:$0xff]
      %v297 = vld [vmem:[%s252 + $0x188] sm:$0xff]
      %v298 = vld [vmem:[%s252 + $0x198] sm:$0xff]
      %v299 = vld [vmem:[%s252 + $0x1a0] sm:$0xff]
      %v300 = vld [vmem:[%s252 + $0x1] sm:$0xff]
      %v301 = vld [vmem:[%s252 + $0x9] sm:$0xff]
      %v302 = vld [vmem:[%s252 + $0x19] sm:$0xff]
      %v303 = vld [vmem:[%s252 + $0x21] sm:$0xff]
      %v304 = vld [vmem:[%s252 + $0x31] sm:$0xff]
      %v305 = vld [vmem:[%s252 + $0x39] sm:$0xff]
      %v306 = vld [vmem:[%s252 + $0x49] sm:$0xff]
      %v307 = vld [vmem:[%s252 + $0x51] sm:$0xff]
      %v308 = vld [vmem:[%s252 + $0x61] sm:$0xff]
      %v309 = vld [vmem:[%s252 + $0x69] sm:$0xff]
      %v310 = vld [vmem:[%s252 + $0x79] sm:$0xff]
      %v311 = vld [vmem:[%s252 + $0x81] sm:$0xff]
      %v312 = vld [vmem:[%s252 + $0x91] sm:$0xff]
      %v313 = vld [vmem:[%s252 + $0x99] sm:$0xff]
      %v314 = vld [vmem:[%s252 + $0xa9] sm:$0xff]
      %v315 = vld [vmem:[%s252 + $0xb1] sm:$0xff]
      %v316 = vld [vmem:[%s252 + $0xc1] sm:$0xff]
      %v317 = vld [vmem:[%s252 + $0xc9] sm:$0xff]
      %v318 = vld [vmem:[%s252 + $0xd9] sm:$0xff]
      %v319 = vld [vmem:[%s252 + $0xe1] sm:$0xff]
      %v320 = vld [vmem:[%s252 + $0xf1] sm:$0xff]
      %v321 = vld [vmem:[%s252 + $0xf9] sm:$0xff]
      %v322 = vld [vmem:[%s252 + $0x109] sm:$0xff]
      %v323 = vld [vmem:[%s252 + $0x111] sm:$0xff]
      %v324 = vld [vmem:[%s252 + $0x121] sm:$0xff]
      %v325 = vld [vmem:[%s252 + $0x129] sm:$0xff]
      %v326 = vld [vmem:[%s252 + $0x139] sm:$0xff]
      %v327 = vld [vmem:[%s252 + $0x141] sm:$0xff]
      %v328 = vld [vmem:[%s252 + $0x151] sm:$0xff]
      %v329 = vld [vmem:[%s252 + $0x159] sm:$0xff]
      %v330 = vld [vmem:[%s252 + $0x169] sm:$0xff]
      %v331 = vld [vmem:[%s252 + $0x171] sm:$0xff]
      %v332 = vld [vmem:[%s252 + $0x181] sm:$0xff]
      %v333 = vld [vmem:[%s252 + $0x189] sm:$0xff]
      %v334 = vld [vmem:[%s252 + $0x199] sm:$0xff]
      %v335 = vld [vmem:[%s252 + $0x1a1] sm:$0xff]
      %v336 = vld [vmem:[%s252 + $0x2] sm:$0xff]
      %v337 = vld [vmem:[%s252 + $0xa] sm:$0xff]
      %v338 = vld [vmem:[%s252 + $0x1a] sm:$0xff]
      %v339 = vld [vmem:[%s252 + $0x22] sm:$0xff]
      %v340 = vld [vmem:[%s252 + $0x32] sm:$0xff]
      %v341 = vld [vmem:[%s252 + $0x3a] sm:$0xff]
      %v342 = vld [vmem:[%s252 + $0x4a] sm:$0xff]
      %v343 = vld [vmem:[%s252 + $0x52] sm:$0xff]
      %v344 = vld [vmem:[%s252 + $0x62] sm:$0xff]
      %v345 = vld [vmem:[%s252 + $0x6a] sm:$0xff]
      %v346 = vld [vmem:[%s252 + $0x7a] sm:$0xff]
      %v347 = vld [vmem:[%s252 + $0x82] sm:$0xff]
      %v348 = vld [vmem:[%s252 + $0x92] sm:$0xff]
      %v349 = vld [vmem:[%s252 + $0x9a] sm:$0xff]
      %v350 = vld [vmem:[%s252 + $0xaa] sm:$0xff]
      %v351 = vld [vmem:[%s252 + $0xb2] sm:$0xff]
      %v352 = vld [vmem:[%s252 + $0xc2] sm:$0xff]
      %v353 = vld [vmem:[%s252 + $0xca] sm:$0xff]
      %v354 = vld [vmem:[%s252 + $0xda] sm:$0xff]
      %v355 = vld [vmem:[%s252 + $0xe2] sm:$0xff]
      %v356 = vld [vmem:[%s252 + $0xf2] sm:$0xff]
      %v357 = vld [vmem:[%s252 + $0xfa] sm:$0xff]
      %v358 = vld [vmem:[%s252 + $0x10a] sm:$0xff]
      %v359 = vld [vmem:[%s252 + $0x112] sm:$0xff]
      %v360 = vld [vmem:[%s252 + $0x122] sm:$0xff]
      %v361 = vld [vmem:[%s252 + $0x12a] sm:$0xff]
      %v362 = vld [vmem:[%s252 + $0x13a] sm:$0xff]
      %v363 = vld [vmem:[%s252 + $0x142] sm:$0xff]
      %v364 = vld [vmem:[%s252 + $0x152] sm:$0xff]
      %v365 = vld [vmem:[%s252 + $0x15a] sm:$0xff]
      %v366 = vld [vmem:[%s252 + $0x16a] sm:$0xff]
      %v367 = vld [vmem:[%s252 + $0x172] sm:$0xff]
      %v368 = vld [vmem:[%s252 + $0x182] sm:$0xff]
      %v369 = vld [vmem:[%s252 + $0x18a] sm:$0xff]
      %v370 = vld [vmem:[%s252 + $0x19a] sm:$0xff]
      %v371 = vld [vmem:[%s252 + $0x1a2] sm:$0xff]
      %s372 = scalar_lea.vmem %s252, 24
      %v373 = vld [vmem:[%s372] sm:$0xff]
      %v374 = vld [vmem:[%s372 + $0x8] sm:$0xff]
      %v375 = vld [vmem:[%s372 + $0x18] sm:$0xff]
      %v376 = vld [vmem:[%s372 + $0x20] sm:$0xff]
      %v377 = vld [vmem:[%s372 + $0x30] sm:$0xff]
      %v378 = vld [vmem:[%s372 + $0x38] sm:$0xff]
      %v379 = vld [vmem:[%s372 + $0x48] sm:$0xff]
      %v380 = vld [vmem:[%s372 + $0x50] sm:$0xff]
      %v381 = vld [vmem:[%s372 + $0x60] sm:$0xff]
      %v382 = vld [vmem:[%s372 + $0x68] sm:$0xff]
      %v383 = vld [vmem:[%s372 + $0x78] sm:$0xff]
      %v384 = vld [vmem:[%s372 + $0x80] sm:$0xff]
      %v385 = vld [vmem:[%s372 + $0x90] sm:$0xff]
      %v386 = vld [vmem:[%s372 + $0x98] sm:$0xff]
      %v387 = vld [vmem:[%s372 + $0xa8] sm:$0xff]
      %v388 = vld [vmem:[%s372 + $0xb0] sm:$0xff]
      %v389 = vld [vmem:[%s372 + $0xc0] sm:$0xff]
      %v390 = vld [vmem:[%s372 + $0xc8] sm:$0xff]
      %v391 = vld [vmem:[%s372 + $0xd8] sm:$0xff]
      %v392 = vld [vmem:[%s372 + $0xe0] sm:$0xff]
      %v393 = vld [vmem:[%s372 + $0xf0] sm:$0xff]
      %v394 = vld [vmem:[%s372 + $0xf8] sm:$0xff]
      %v395 = vld [vmem:[%s372 + $0x108] sm:$0xff]
      %v396 = vld [vmem:[%s372 + $0x110] sm:$0xff]
      %v397 = vld [vmem:[%s372 + $0x120] sm:$0xff]
      %v398 = vld [vmem:[%s372 + $0x128] sm:$0xff]
      %v399 = vld [vmem:[%s372 + $0x138] sm:$0xff]
      %v400 = vld [vmem:[%s372 + $0x140] sm:$0xff]
      %v401 = vld [vmem:[%s372 + $0x150] sm:$0xff]
      %v402 = vld [vmem:[%s372 + $0x158] sm:$0xff]
      %v403 = vld [vmem:[%s372 + $0x168] sm:$0xff]
      %v404 = vld [vmem:[%s372 + $0x170] sm:$0xff]
      %v405 = vld [vmem:[%s372 + $0x180] sm:$0xff]
      %v406 = vld [vmem:[%s372 + $0x188] sm:$0xff]
      %v407 = vld [vmem:[%s372 + $0x198] sm:$0xff]
      %v408 = vld [vmem:[%s372 + $0x1a0] sm:$0xff]
      %v409 = vld [vmem:[%s372 + $0x1] sm:$0xff]
      %v410 = vld [vmem:[%s372 + $0x9] sm:$0xff]
      %v411 = vld [vmem:[%s372 + $0x19] sm:$0xff]
      %v412 = vld [vmem:[%s372 + $0x21] sm:$0xff]
      %v413 = vld [vmem:[%s372 + $0x31] sm:$0xff]
      %v414 = vld [vmem:[%s372 + $0x39] sm:$0xff]
      %v415 = vld [vmem:[%s372 + $0x49] sm:$0xff]
      %v416 = vld [vmem:[%s372 + $0x51] sm:$0xff]
      %v417 = vld [vmem:[%s372 + $0x61] sm:$0xff]
      %v418 = vld [vmem:[%s372 + $0x69] sm:$0xff]
      %v419 = vld [vmem:[%s372 + $0x79] sm:$0xff]
      %v420 = vld [vmem:[%s372 + $0x81] sm:$0xff]
      %v421 = vld [vmem:[%s372 + $0x91] sm:$0xff]
      %v422 = vld [vmem:[%s372 + $0x99] sm:$0xff]
      %v423 = vld [vmem:[%s372 + $0xa9] sm:$0xff]
      %v424 = vld [vmem:[%s372 + $0xb1] sm:$0xff]
      %v425 = vld [vmem:[%s372 + $0xc1] sm:$0xff]
      %v426 = vld [vmem:[%s372 + $0xc9] sm:$0xff]
      %v427 = vld [vmem:[%s372 + $0xd9] sm:$0xff]
      %v428 = vld [vmem:[%s372 + $0xe1] sm:$0xff]
      %v429 = vld [vmem:[%s372 + $0xf1] sm:$0xff]
      %v430 = vld [vmem:[%s372 + $0xf9] sm:$0xff]
      %v431 = vld [vmem:[%s372 + $0x109] sm:$0xff]
      %v432 = vld [vmem:[%s372 + $0x111] sm:$0xff]
      %v433 = vld [vmem:[%s372 + $0x121] sm:$0xff]
      %v434 = vld [vmem:[%s372 + $0x129] sm:$0xff]
      %v435 = vld [vmem:[%s372 + $0x139] sm:$0xff]
      %v436 = vld [vmem:[%s372 + $0x141] sm:$0xff]
      %v437 = vld [vmem:[%s372 + $0x151] sm:$0xff]
      %v438 = vld [vmem:[%s372 + $0x159] sm:$0xff]
      %v439 = vld [vmem:[%s372 + $0x169] sm:$0xff]
      %v440 = vld [vmem:[%s372 + $0x171] sm:$0xff]
      %v441 = vld [vmem:[%s372 + $0x181] sm:$0xff]
      %v442 = vld [vmem:[%s372 + $0x189] sm:$0xff]
      %v443 = vld [vmem:[%s372 + $0x199] sm:$0xff]
      %v444 = vld [vmem:[%s372 + $0x1a1] sm:$0xff]
      %v445 = vld [vmem:[%s372 + $0x2] sm:$0xff]
      %v446 = vld [vmem:[%s372 + $0xa] sm:$0xff]
      %v447 = vld [vmem:[%s372 + $0x1a] sm:$0xff]
      %v448 = vld [vmem:[%s372 + $0x22] sm:$0xff]
      %v449 = vld [vmem:[%s372 + $0x32] sm:$0xff]
      %v450 = vld [vmem:[%s372 + $0x3a] sm:$0xff]
      %v451 = vld [vmem:[%s372 + $0x4a] sm:$0xff]
      %v452 = vld [vmem:[%s372 + $0x52] sm:$0xff]
      %v453 = vld [vmem:[%s372 + $0x62] sm:$0xff]
      %v454 = vld [vmem:[%s372 + $0x6a] sm:$0xff]
      %v455 = vld [vmem:[%s372 + $0x7a] sm:$0xff]
      %v456 = vld [vmem:[%s372 + $0x82] sm:$0xff]
      %v457 = vld [vmem:[%s372 + $0x92] sm:$0xff]
      %v458 = vld [vmem:[%s372 + $0x9a] sm:$0xff]
      %v459 = vld [vmem:[%s372 + $0xaa] sm:$0xff]
      %v460 = vld [vmem:[%s372 + $0xb2] sm:$0xff]
      %v461 = vld [vmem:[%s372 + $0xc2] sm:$0xff]
      %v462 = vld [vmem:[%s372 + $0xca] sm:$0xff]
      %v463 = vld [vmem:[%s372 + $0xda] sm:$0xff]
      %v464 = vld [vmem:[%s372 + $0xe2] sm:$0xff]
      %v465 = vld [vmem:[%s372 + $0xf2] sm:$0xff]
      %v466 = vld [vmem:[%s372 + $0xfa] sm:$0xff]
      %v467 = vld [vmem:[%s372 + $0x10a] sm:$0xff]
      %v468 = vld [vmem:[%s372 + $0x112] sm:$0xff]
      %v469 = vld [vmem:[%s372 + $0x122] sm:$0xff]
      %v470 = vld [vmem:[%s372 + $0x12a] sm:$0xff]
      %v471 = vld [vmem:[%s372 + $0x13a] sm:$0xff]
      %v472 = vld [vmem:[%s372 + $0x142] sm:$0xff]
      %v473 = vld [vmem:[%s372 + $0x152] sm:$0xff]
      %v474 = vld [vmem:[%s372 + $0x15a] sm:$0xff]
      %v475 = vld [vmem:[%s372 + $0x16a] sm:$0xff]
      %v476 = vld [vmem:[%s372 + $0x172] sm:$0xff]
      %v477 = vld [vmem:[%s372 + $0x182] sm:$0xff]
      %v478 = vld [vmem:[%s372 + $0x18a] sm:$0xff]
      %v479 = vld [vmem:[%s372 + $0x19a] sm:$0xff]
      %v480 = vld [vmem:[%s372 + $0x1a2] sm:$0xff]
      %s481 = scalar_lea.vmem %s252, 48
      %v482 = vld [vmem:[%s481] sm:$0xff]
      %v483 = vld [vmem:[%s481 + $0x8] sm:$0xff]
      %v484 = vld [vmem:[%s481 + $0x18] sm:$0xff]
      %v485 = vld [vmem:[%s481 + $0x20] sm:$0xff]
      %v486 = vld [vmem:[%s481 + $0x30] sm:$0xff]
      %v487 = vld [vmem:[%s481 + $0x38] sm:$0xff]
      %v488 = vld [vmem:[%s481 + $0x48] sm:$0xff]
      %v489 = vld [vmem:[%s481 + $0x50] sm:$0xff]
      %v490 = vld [vmem:[%s481 + $0x60] sm:$0xff]
      %v491 = vld [vmem:[%s481 + $0x68] sm:$0xff]
      %v492 = vld [vmem:[%s481 + $0x78] sm:$0xff]
      %v493 = vld [vmem:[%s481 + $0x80] sm:$0xff]
      %v494 = vld [vmem:[%s481 + $0x90] sm:$0xff]
      %v495 = vld [vmem:[%s481 + $0x98] sm:$0xff]
      %v496 = vld [vmem:[%s481 + $0xa8] sm:$0xff]
      %v497 = vld [vmem:[%s481 + $0xb0] sm:$0xff]
      %v498 = vld [vmem:[%s481 + $0xc0] sm:$0xff]
      %v499 = vld [vmem:[%s481 + $0xc8] sm:$0xff]
      %v500 = vld [vmem:[%s481 + $0xd8] sm:$0xff]
      %v501 = vld [vmem:[%s481 + $0xe0] sm:$0xff]
      %v502 = vld [vmem:[%s481 + $0xf0] sm:$0xff]
      %v503 = vld [vmem:[%s481 + $0xf8] sm:$0xff]
      %v504 = vld [vmem:[%s481 + $0x108] sm:$0xff]
      %v505 = vld [vmem:[%s481 + $0x110] sm:$0xff]
      %v506 = vld [vmem:[%s481 + $0x120] sm:$0xff]
      %v507 = vld [vmem:[%s481 + $0x128] sm:$0xff]
      %v508 = vld [vmem:[%s481 + $0x138] sm:$0xff]
      %v509 = vld [vmem:[%s481 + $0x140] sm:$0xff]
      %v510 = vld [vmem:[%s481 + $0x150] sm:$0xff]
      %v511 = vld [vmem:[%s481 + $0x158] sm:$0xff]
      %v512 = vld [vmem:[%s481 + $0x168] sm:$0xff]
      %v513 = vld [vmem:[%s481 + $0x170] sm:$0xff]
      %v514 = vld [vmem:[%s481 + $0x180] sm:$0xff]
      %v515 = vld [vmem:[%s481 + $0x188] sm:$0xff]
      %v516 = vld [vmem:[%s481 + $0x198] sm:$0xff]
      %v517 = vld [vmem:[%s481 + $0x1a0] sm:$0xff]
      %v518 = vld [vmem:[%s481 + $0x1] sm:$0xff]
      %v519 = vld [vmem:[%s481 + $0x9] sm:$0xff]
      %v520 = vld [vmem:[%s481 + $0x19] sm:$0xff]
      %v521 = vld [vmem:[%s481 + $0x21] sm:$0xff]
      %v522 = vld [vmem:[%s481 + $0x31] sm:$0xff]
      %v523 = vld [vmem:[%s481 + $0x39] sm:$0xff]
      %v524 = vld [vmem:[%s481 + $0x49] sm:$0xff]
      %v525 = vld [vmem:[%s481 + $0x51] sm:$0xff]
      %v526 = vld [vmem:[%s481 + $0x61] sm:$0xff]
      %v527 = vld [vmem:[%s481 + $0x69] sm:$0xff]
      %v528 = vld [vmem:[%s481 + $0x79] sm:$0xff]
      %v529 = vld [vmem:[%s481 + $0x81] sm:$0xff]
      %v530 = vld [vmem:[%s481 + $0x91] sm:$0xff]
      %v531 = vld [vmem:[%s481 + $0x99] sm:$0xff]
      %v532 = vld [vmem:[%s481 + $0xa9] sm:$0xff]
      %v533 = vld [vmem:[%s481 + $0xb1] sm:$0xff]
      %v534 = vld [vmem:[%s481 + $0xc1] sm:$0xff]
      %v535 = vld [vmem:[%s481 + $0xc9] sm:$0xff]
      %v536 = vld [vmem:[%s481 + $0xd9] sm:$0xff]
      %v537 = vld [vmem:[%s481 + $0xe1] sm:$0xff]
      %v538 = vld [vmem:[%s481 + $0xf1] sm:$0xff]
      %v539 = vld [vmem:[%s481 + $0xf9] sm:$0xff]
      %v540 = vld [vmem:[%s481 + $0x109] sm:$0xff]
      %v541 = vld [vmem:[%s481 + $0x111] sm:$0xff]
      %v542 = vld [vmem:[%s481 + $0x121] sm:$0xff]
      %v543 = vld [vmem:[%s481 + $0x129] sm:$0xff]
      %v544 = vld [vmem:[%s481 + $0x139] sm:$0xff]
      %v545 = vld [vmem:[%s481 + $0x141] sm:$0xff]
      %v546 = vld [vmem:[%s481 + $0x151] sm:$0xff]
      %v547 = vld [vmem:[%s481 + $0x159] sm:$0xff]
      %v548 = vld [vmem:[%s481 + $0x169] sm:$0xff]
      %v549 = vld [vmem:[%s481 + $0x171] sm:$0xff]
      %v550 = vld [vmem:[%s481 + $0x181] sm:$0xff]
      %v551 = vld [vmem:[%s481 + $0x189] sm:$0xff]
      %v552 = vld [vmem:[%s481 + $0x199] sm:$0xff]
      %v553 = vld [vmem:[%s481 + $0x1a1] sm:$0xff]
      %v554 = vld [vmem:[%s481 + $0x2] sm:$0xff]
      %v555 = vld [vmem:[%s481 + $0xa] sm:$0xff]
      %v556 = vld [vmem:[%s481 + $0x1a] sm:$0xff]
      %v557 = vld [vmem:[%s481 + $0x22] sm:$0xff]
      %v558 = vld [vmem:[%s481 + $0x32] sm:$0xff]
      %v559 = vld [vmem:[%s481 + $0x3a] sm:$0xff]
      %v560 = vld [vmem:[%s481 + $0x4a] sm:$0xff]
      %v561 = vld [vmem:[%s481 + $0x52] sm:$0xff]
      %v562 = vld [vmem:[%s481 + $0x62] sm:$0xff]
      %v563 = vld [vmem:[%s481 + $0x6a] sm:$0xff]
      %v564 = vld [vmem:[%s481 + $0x7a] sm:$0xff]
      %v565 = vld [vmem:[%s481 + $0x82] sm:$0xff]
      %v566 = vld [vmem:[%s481 + $0x92] sm:$0xff]
      %v567 = vld [vmem:[%s481 + $0x9a] sm:$0xff]
      %v568 = vld [vmem:[%s481 + $0xaa] sm:$0xff]
      %v569 = vld [vmem:[%s481 + $0xb2] sm:$0xff]
      %v570 = vld [vmem:[%s481 + $0xc2] sm:$0xff]
      %v571 = vld [vmem:[%s481 + $0xca] sm:$0xff]
      %v572 = vld [vmem:[%s481 + $0xda] sm:$0xff]
      %v573 = vld [vmem:[%s481 + $0xe2] sm:$0xff]
      %v574 = vld [vmem:[%s481 + $0xf2] sm:$0xff]
      %v575 = vld [vmem:[%s481 + $0xfa] sm:$0xff]
      %v576 = vld [vmem:[%s481 + $0x10a] sm:$0xff]
      %v577 = vld [vmem:[%s481 + $0x112] sm:$0xff]
      %v578 = vld [vmem:[%s481 + $0x122] sm:$0xff]
      %v579 = vld [vmem:[%s481 + $0x12a] sm:$0xff]
      %v580 = vld [vmem:[%s481 + $0x13a] sm:$0xff]
      %v581 = vld [vmem:[%s481 + $0x142] sm:$0xff]
      %v582 = vld [vmem:[%s481 + $0x152] sm:$0xff]
      %v583 = vld [vmem:[%s481 + $0x15a] sm:$0xff]
      %v584 = vld [vmem:[%s481 + $0x16a] sm:$0xff]
      %v585 = vld [vmem:[%s481 + $0x172] sm:$0xff]
      %v586 = vld [vmem:[%s481 + $0x182] sm:$0xff]
      %v587 = vld [vmem:[%s481 + $0x18a] sm:$0xff]
      %v588 = vld [vmem:[%s481 + $0x19a] sm:$0xff]
      %v589 = vld [vmem:[%s481 + $0x1a2] sm:$0xff]
      %626 = vrot.lane.b32.xlu0 %v300, 4
      %v627 = vpop.permute.xlu0 %626
      %628 = vrot.lane.b32.xlu0 %v301, 4
      %v629 = vpop.permute.xlu0 %628
      %630 = vrot.lane.b32.xlu0 %v302, 4
      %v631 = vpop.permute.xlu0 %630
      %632 = vrot.lane.b32.xlu0 %v303, 4
      %v633 = vpop.permute.xlu0 %632
      %634 = vrot.lane.b32.xlu0 %v304, 4
      %v635 = vpop.permute.xlu0 %634
      %636 = vrot.lane.b32.xlu0 %v305, 4
      %v637 = vpop.permute.xlu0 %636
      %638 = vrot.lane.b32.xlu0 %v306, 4
      %v639 = vpop.permute.xlu0 %638
      %640 = vrot.lane.b32.xlu0 %v307, 4
      %v641 = vpop.permute.xlu0 %640
      %642 = vrot.lane.b32.xlu0 %v308, 4
      %v643 = vpop.permute.xlu0 %642
      %644 = vrot.lane.b32.xlu0 %v309, 4
      %v645 = vpop.permute.xlu0 %644
      %646 = vrot.lane.b32.xlu0 %v310, 4
      %v647 = vpop.permute.xlu0 %646
      %648 = vrot.lane.b32.xlu0 %v311, 4
      %v649 = vpop.permute.xlu0 %648
      %650 = vrot.lane.b32.xlu0 %v312, 4
      %v651 = vpop.permute.xlu0 %650
      %652 = vrot.lane.b32.xlu0 %v313, 4
      %v653 = vpop.permute.xlu0 %652
      %654 = vrot.lane.b32.xlu0 %v314, 4
      %v655 = vpop.permute.xlu0 %654
      %656 = vrot.lane.b32.xlu0 %v315, 4
      %v657 = vpop.permute.xlu0 %656
      %658 = vrot.lane.b32.xlu0 %v316, 4
      %v659 = vpop.permute.xlu0 %658
      %660 = vrot.lane.b32.xlu0 %v317, 4
      %v661 = vpop.permute.xlu0 %660
      %662 = vrot.lane.b32.xlu0 %v318, 4
      %v663 = vpop.permute.xlu0 %662
      %664 = vrot.lane.b32.xlu0 %v319, 4
      %v665 = vpop.permute.xlu0 %664
      %666 = vrot.lane.b32.xlu0 %v320, 4
      %v667 = vpop.permute.xlu0 %666
      %668 = vrot.lane.b32.xlu0 %v321, 4
      %v669 = vpop.permute.xlu0 %668
      %670 = vrot.lane.b32.xlu0 %v322, 4
      %v671 = vpop.permute.xlu0 %670
      %672 = vrot.lane.b32.xlu0 %v323, 4
      %v673 = vpop.permute.xlu0 %672
      %674 = vrot.lane.b32.xlu0 %v324, 4
      %v675 = vpop.permute.xlu0 %674
      %676 = vrot.lane.b32.xlu0 %v325, 4
      %v677 = vpop.permute.xlu0 %676
      %678 = vrot.lane.b32.xlu0 %v326, 4
      %v679 = vpop.permute.xlu0 %678
      %680 = vrot.lane.b32.xlu0 %v327, 4
      %v681 = vpop.permute.xlu0 %680
      %682 = vrot.lane.b32.xlu0 %v328, 4
      %v683 = vpop.permute.xlu0 %682
      %684 = vrot.lane.b32.xlu0 %v329, 4
      %v685 = vpop.permute.xlu0 %684
      %686 = vrot.lane.b32.xlu0 %v330, 4
      %v687 = vpop.permute.xlu0 %686
      %688 = vrot.lane.b32.xlu0 %v331, 4
      %v689 = vpop.permute.xlu0 %688
      %690 = vrot.lane.b32.xlu0 %v332, 4
      %v691 = vpop.permute.xlu0 %690
      %692 = vrot.lane.b32.xlu0 %v333, 4
      %v693 = vpop.permute.xlu0 %692
      %694 = vrot.lane.b32.xlu0 %v334, 4
      %v695 = vpop.permute.xlu0 %694
      %696 = vrot.lane.b32.xlu0 %v335, 4
      %v697 = vpop.permute.xlu0 %696
      %770 = vrot.lane.b32.xlu0 %v336, 8
      %v771 = vpop.permute.xlu0 %770
      %772 = vrot.lane.b32.xlu0 %v337, 8
      %v773 = vpop.permute.xlu0 %772
      %774 = vrot.lane.b32.xlu0 %v338, 8
      %v775 = vpop.permute.xlu0 %774
      %776 = vrot.lane.b32.xlu0 %v339, 8
      %v777 = vpop.permute.xlu0 %776
      %778 = vrot.lane.b32.xlu0 %v340, 8
      %v779 = vpop.permute.xlu0 %778
      %780 = vrot.lane.b32.xlu0 %v341, 8
      %v781 = vpop.permute.xlu0 %780
      %782 = vrot.lane.b32.xlu0 %v342, 8
      %v783 = vpop.permute.xlu0 %782
      %784 = vrot.lane.b32.xlu0 %v343, 8
      %v785 = vpop.permute.xlu0 %784
      %786 = vrot.lane.b32.xlu0 %v344, 8
      %v787 = vpop.permute.xlu0 %786
      %788 = vrot.lane.b32.xlu0 %v345, 8
      %v789 = vpop.permute.xlu0 %788
      %790 = vrot.lane.b32.xlu0 %v346, 8
      %v791 = vpop.permute.xlu0 %790
      %792 = vrot.lane.b32.xlu0 %v347, 8
      %v793 = vpop.permute.xlu0 %792
      %794 = vrot.lane.b32.xlu0 %v348, 8
      %v795 = vpop.permute.xlu0 %794
      %796 = vrot.lane.b32.xlu0 %v349, 8
      %v797 = vpop.permute.xlu0 %796
      %798 = vrot.lane.b32.xlu0 %v350, 8
      %v799 = vpop.permute.xlu0 %798
      %800 = vrot.lane.b32.xlu0 %v351, 8
      %v801 = vpop.permute.xlu0 %800
      %802 = vrot.lane.b32.xlu0 %v352, 8
      %v803 = vpop.permute.xlu0 %802
      %804 = vrot.lane.b32.xlu0 %v353, 8
      %v805 = vpop.permute.xlu0 %804
      %806 = vrot.lane.b32.xlu0 %v354, 8
      %v807 = vpop.permute.xlu0 %806
      %808 = vrot.lane.b32.xlu0 %v355, 8
      %v809 = vpop.permute.xlu0 %808
      %810 = vrot.lane.b32.xlu0 %v356, 8
      %v811 = vpop.permute.xlu0 %810
      %812 = vrot.lane.b32.xlu0 %v357, 8
      %v813 = vpop.permute.xlu0 %812
      %814 = vrot.lane.b32.xlu0 %v358, 8
      %v815 = vpop.permute.xlu0 %814
      %816 = vrot.lane.b32.xlu0 %v359, 8
      %v817 = vpop.permute.xlu0 %816
      %818 = vrot.lane.b32.xlu0 %v360, 8
      %v819 = vpop.permute.xlu0 %818
      %820 = vrot.lane.b32.xlu0 %v361, 8
      %v821 = vpop.permute.xlu0 %820
      %822 = vrot.lane.b32.xlu0 %v362, 8
      %v823 = vpop.permute.xlu0 %822
      %824 = vrot.lane.b32.xlu0 %v363, 8
      %v825 = vpop.permute.xlu0 %824
      %826 = vrot.lane.b32.xlu0 %v364, 8
      %v827 = vpop.permute.xlu0 %826
      %828 = vrot.lane.b32.xlu0 %v365, 8
      %v829 = vpop.permute.xlu0 %828
      %830 = vrot.lane.b32.xlu0 %v366, 8
      %v831 = vpop.permute.xlu0 %830
      %832 = vrot.lane.b32.xlu0 %v367, 8
      %v833 = vpop.permute.xlu0 %832
      %834 = vrot.lane.b32.xlu0 %v368, 8
      %v835 = vpop.permute.xlu0 %834
      %836 = vrot.lane.b32.xlu0 %v369, 8
      %v837 = vpop.permute.xlu0 %836
      %838 = vrot.lane.b32.xlu0 %v370, 8
      %v839 = vpop.permute.xlu0 %838
      %840 = vrot.lane.b32.xlu0 %v371, 8
      %v841 = vpop.permute.xlu0 %840
      %914 = vrot.lane.b32.xlu0 %v373, 12
      %v915 = vpop.permute.xlu0 %914
      %916 = vrot.lane.b32.xlu0 %v374, 12
      %v917 = vpop.permute.xlu0 %916
      %918 = vrot.lane.b32.xlu0 %v375, 12
      %v919 = vpop.permute.xlu0 %918
      %920 = vrot.lane.b32.xlu0 %v376, 12
      %v921 = vpop.permute.xlu0 %920
      %922 = vrot.lane.b32.xlu0 %v377, 12
      %v923 = vpop.permute.xlu0 %922
      %924 = vrot.lane.b32.xlu0 %v378, 12
      %v925 = vpop.permute.xlu0 %924
      %926 = vrot.lane.b32.xlu0 %v379, 12
      %v927 = vpop.permute.xlu0 %926
      %928 = vrot.lane.b32.xlu0 %v380, 12
      %v929 = vpop.permute.xlu0 %928
      %930 = vrot.lane.b32.xlu0 %v381, 12
      %v931 = vpop.permute.xlu0 %930
      %932 = vrot.lane.b32.xlu0 %v382, 12
      %v933 = vpop.permute.xlu0 %932
      %934 = vrot.lane.b32.xlu0 %v383, 12
      %v935 = vpop.permute.xlu0 %934
      %936 = vrot.lane.b32.xlu0 %v384, 12
      %v937 = vpop.permute.xlu0 %936
      %938 = vrot.lane.b32.xlu0 %v385, 12
      %v939 = vpop.permute.xlu0 %938
      %940 = vrot.lane.b32.xlu0 %v386, 12
      %v941 = vpop.permute.xlu0 %940
      %942 = vrot.lane.b32.xlu0 %v387, 12
      %v943 = vpop.permute.xlu0 %942
      %944 = vrot.lane.b32.xlu0 %v388, 12
      %v945 = vpop.permute.xlu0 %944
      %946 = vrot.lane.b32.xlu0 %v389, 12
      %v947 = vpop.permute.xlu0 %946
      %948 = vrot.lane.b32.xlu0 %v390, 12
      %v949 = vpop.permute.xlu0 %948
      %950 = vrot.lane.b32.xlu0 %v391, 12
      %v951 = vpop.permute.xlu0 %950
      %952 = vrot.lane.b32.xlu0 %v392, 12
      %v953 = vpop.permute.xlu0 %952
      %954 = vrot.lane.b32.xlu0 %v393, 12
      %v955 = vpop.permute.xlu0 %954
      %956 = vrot.lane.b32.xlu0 %v394, 12
      %v957 = vpop.permute.xlu0 %956
      %958 = vrot.lane.b32.xlu0 %v395, 12
      %v959 = vpop.permute.xlu0 %958
      %960 = vrot.lane.b32.xlu0 %v396, 12
      %v961 = vpop.permute.xlu0 %960
      %962 = vrot.lane.b32.xlu0 %v397, 12
      %v963 = vpop.permute.xlu0 %962
      %964 = vrot.lane.b32.xlu0 %v398, 12
      %v965 = vpop.permute.xlu0 %964
      %966 = vrot.lane.b32.xlu0 %v399, 12
      %v967 = vpop.permute.xlu0 %966
      %968 = vrot.lane.b32.xlu0 %v400, 12
      %v969 = vpop.permute.xlu0 %968
      %970 = vrot.lane.b32.xlu0 %v401, 12
      %v971 = vpop.permute.xlu0 %970
      %972 = vrot.lane.b32.xlu0 %v402, 12
      %v973 = vpop.permute.xlu0 %972
      %974 = vrot.lane.b32.xlu0 %v403, 12
      %v975 = vpop.permute.xlu0 %974
      %976 = vrot.lane.b32.xlu0 %v404, 12
      %v977 = vpop.permute.xlu0 %976
      %978 = vrot.lane.b32.xlu0 %v405, 12
      %v979 = vpop.permute.xlu0 %978
      %980 = vrot.lane.b32.xlu0 %v406, 12
      %v981 = vpop.permute.xlu0 %980
      %982 = vrot.lane.b32.xlu0 %v407, 12
      %v983 = vpop.permute.xlu0 %982
      %984 = vrot.lane.b32.xlu0 %v408, 12
      %v985 = vpop.permute.xlu0 %984
      %1058 = vrot.lane.b32.xlu0 %v409, 16
      %v1059 = vpop.permute.xlu0 %1058
      %1060 = vrot.lane.b32.xlu0 %v410, 16
      %v1061 = vpop.permute.xlu0 %1060
      %1062 = vrot.lane.b32.xlu0 %v411, 16
      %v1063 = vpop.permute.xlu0 %1062
      %1064 = vrot.lane.b32.xlu0 %v412, 16
      %v1065 = vpop.permute.xlu0 %1064
      %1066 = vrot.lane.b32.xlu0 %v413, 16
      %v1067 = vpop.permute.xlu0 %1066
      %1068 = vrot.lane.b32.xlu0 %v414, 16
      %v1069 = vpop.permute.xlu0 %1068
      %1070 = vrot.lane.b32.xlu0 %v415, 16
      %v1071 = vpop.permute.xlu0 %1070
      %1072 = vrot.lane.b32.xlu0 %v416, 16
      %v1073 = vpop.permute.xlu0 %1072
      %1074 = vrot.lane.b32.xlu0 %v417, 16
      %v1075 = vpop.permute.xlu0 %1074
      %1076 = vrot.lane.b32.xlu0 %v418, 16
      %v1077 = vpop.permute.xlu0 %1076
      %1078 = vrot.lane.b32.xlu0 %v419, 16
      %v1079 = vpop.permute.xlu0 %1078
      %1080 = vrot.lane.b32.xlu0 %v420, 16
      %v1081 = vpop.permute.xlu0 %1080
      %1082 = vrot.lane.b32.xlu0 %v421, 16
      %v1083 = vpop.permute.xlu0 %1082
      %1084 = vrot.lane.b32.xlu0 %v422, 16
      %v1085 = vpop.permute.xlu0 %1084
      %1086 = vrot.lane.b32.xlu0 %v423, 16
      %v1087 = vpop.permute.xlu0 %1086
      %1088 = vrot.lane.b32.xlu0 %v424, 16
      %v1089 = vpop.permute.xlu0 %1088
      %1090 = vrot.lane.b32.xlu0 %v425, 16
      %v1091 = vpop.permute.xlu0 %1090
      %1092 = vrot.lane.b32.xlu0 %v426, 16
      %v1093 = vpop.permute.xlu0 %1092
      %1094 = vrot.lane.b32.xlu0 %v427, 16
      %v1095 = vpop.permute.xlu0 %1094
      %1096 = vrot.lane.b32.xlu0 %v428, 16
      %v1097 = vpop.permute.xlu0 %1096
      %1098 = vrot.lane.b32.xlu0 %v429, 16
      %v1099 = vpop.permute.xlu0 %1098
      %1100 = vrot.lane.b32.xlu0 %v430, 16
      %v1101 = vpop.permute.xlu0 %1100
      %1102 = vrot.lane.b32.xlu0 %v431, 16
      %v1103 = vpop.permute.xlu0 %1102
      %1104 = vrot.lane.b32.xlu0 %v432, 16
      %v1105 = vpop.permute.xlu0 %1104
      %1106 = vrot.lane.b32.xlu0 %v433, 16
      %v1107 = vpop.permute.xlu0 %1106
      %1108 = vrot.lane.b32.xlu0 %v434, 16
      %v1109 = vpop.permute.xlu0 %1108
      %1110 = vrot.lane.b32.xlu0 %v435, 16
      %v1111 = vpop.permute.xlu0 %1110
      %1112 = vrot.lane.b32.xlu0 %v436, 16
      %v1113 = vpop.permute.xlu0 %1112
      %1114 = vrot.lane.b32.xlu0 %v437, 16
      %v1115 = vpop.permute.xlu0 %1114
      %1116 = vrot.lane.b32.xlu0 %v438, 16
      %v1117 = vpop.permute.xlu0 %1116
      %1118 = vrot.lane.b32.xlu0 %v439, 16
      %v1119 = vpop.permute.xlu0 %1118
      %1120 = vrot.lane.b32.xlu0 %v440, 16
      %v1121 = vpop.permute.xlu0 %1120
      %1122 = vrot.lane.b32.xlu0 %v441, 16
      %v1123 = vpop.permute.xlu0 %1122
      %1124 = vrot.lane.b32.xlu0 %v442, 16
      %v1125 = vpop.permute.xlu0 %1124
      %1126 = vrot.lane.b32.xlu0 %v443, 16
      %v1127 = vpop.permute.xlu0 %1126
      %1128 = vrot.lane.b32.xlu0 %v444, 16
      %v1129 = vpop.permute.xlu0 %1128
      %1202 = vrot.lane.b32.xlu0 %v445, 20
      %v1203 = vpop.permute.xlu0 %1202
      %1204 = vrot.lane.b32.xlu0 %v446, 20
      %v1205 = vpop.permute.xlu0 %1204
      %1206 = vrot.lane.b32.xlu0 %v447, 20
      %v1207 = vpop.permute.xlu0 %1206
      %1208 = vrot.lane.b32.xlu0 %v448, 20
      %v1209 = vpop.permute.xlu0 %1208
      %1210 = vrot.lane.b32.xlu0 %v449, 20
      %v1211 = vpop.permute.xlu0 %1210
      %1212 = vrot.lane.b32.xlu0 %v450, 20
      %v1213 = vpop.permute.xlu0 %1212
      %1214 = vrot.lane.b32.xlu0 %v451, 20
      %v1215 = vpop.permute.xlu0 %1214
      %1216 = vrot.lane.b32.xlu0 %v452, 20
      %v1217 = vpop.permute.xlu0 %1216
      %1218 = vrot.lane.b32.xlu0 %v453, 20
      %v1219 = vpop.permute.xlu0 %1218
      %1220 = vrot.lane.b32.xlu0 %v454, 20
      %v1221 = vpop.permute.xlu0 %1220
      %1222 = vrot.lane.b32.xlu0 %v455, 20
      %v1223 = vpop.permute.xlu0 %1222
      %1224 = vrot.lane.b32.xlu0 %v456, 20
      %v1225 = vpop.permute.xlu0 %1224
      %1226 = vrot.lane.b32.xlu0 %v457, 20
      %v1227 = vpop.permute.xlu0 %1226
      %1228 = vrot.lane.b32.xlu0 %v458, 20
      %v1229 = vpop.permute.xlu0 %1228
      %1230 = vrot.lane.b32.xlu0 %v459, 20
      %v1231 = vpop.permute.xlu0 %1230
      %1232 = vrot.lane.b32.xlu0 %v460, 20
      %v1233 = vpop.permute.xlu0 %1232
      %1234 = vrot.lane.b32.xlu0 %v461, 20
      %v1235 = vpop.permute.xlu0 %1234
      %1236 = vrot.lane.b32.xlu0 %v462, 20
      %v1237 = vpop.permute.xlu0 %1236
      %1238 = vrot.lane.b32.xlu0 %v463, 20
      %v1239 = vpop.permute.xlu0 %1238
      %1240 = vrot.lane.b32.xlu0 %v464, 20
      %v1241 = vpop.permute.xlu0 %1240
      %1242 = vrot.lane.b32.xlu0 %v465, 20
      %v1243 = vpop.permute.xlu0 %1242
      %1244 = vrot.lane.b32.xlu0 %v466, 20
      %v1245 = vpop.permute.xlu0 %1244
      %1246 = vrot.lane.b32.xlu0 %v467, 20
      %v1247 = vpop.permute.xlu0 %1246
      %1248 = vrot.lane.b32.xlu0 %v468, 20
      %v1249 = vpop.permute.xlu0 %1248
      %1250 = vrot.lane.b32.xlu0 %v469, 20
      %v1251 = vpop.permute.xlu0 %1250
      %1252 = vrot.lane.b32.xlu0 %v470, 20
      %v1253 = vpop.permute.xlu0 %1252
      %1254 = vrot.lane.b32.xlu0 %v471, 20
      %v1255 = vpop.permute.xlu0 %1254
      %1256 = vrot.lane.b32.xlu0 %v472, 20
      %v1257 = vpop.permute.xlu0 %1256
      %1258 = vrot.lane.b32.xlu0 %v473, 20
      %v1259 = vpop.permute.xlu0 %1258
      %1260 = vrot.lane.b32.xlu0 %v474, 20
      %v1261 = vpop.permute.xlu0 %1260
      %1262 = vrot.lane.b32.xlu0 %v475, 20
      %v1263 = vpop.permute.xlu0 %1262
      %1264 = vrot.lane.b32.xlu0 %v476, 20
      %v1265 = vpop.permute.xlu0 %1264
      %1266 = vrot.lane.b32.xlu0 %v477, 20
      %v1267 = vpop.permute.xlu0 %1266
      %1268 = vrot.lane.b32.xlu0 %v478, 20
      %v1269 = vpop.permute.xlu0 %1268
      %1270 = vrot.lane.b32.xlu0 %v479, 20
      %v1271 = vpop.permute.xlu0 %1270
      %1272 = vrot.lane.b32.xlu0 %v480, 20
      %v1273 = vpop.permute.xlu0 %1272
      %1346 = vrot.lane.b32.xlu0 %v482, 24
      %v1347 = vpop.permute.xlu0 %1346
      %1348 = vrot.lane.b32.xlu0 %v483, 24
      %v1349 = vpop.permute.xlu0 %1348
      %1350 = vrot.lane.b32.xlu0 %v484, 24
      %v1351 = vpop.permute.xlu0 %1350
      %1352 = vrot.lane.b32.xlu0 %v485, 24
      %v1353 = vpop.permute.xlu0 %1352
      %1354 = vrot.lane.b32.xlu0 %v486, 24
      %v1355 = vpop.permute.xlu0 %1354
      %1356 = vrot.lane.b32.xlu0 %v487, 24
      %v1357 = vpop.permute.xlu0 %1356
      %1358 = vrot.lane.b32.xlu0 %v488, 24
      %v1359 = vpop.permute.xlu0 %1358
      %1360 = vrot.lane.b32.xlu0 %v489, 24
      %v1361 = vpop.permute.xlu0 %1360
      %1362 = vrot.lane.b32.xlu0 %v490, 24
      %v1363 = vpop.permute.xlu0 %1362
      %1364 = vrot.lane.b32.xlu0 %v491, 24
      %v1365 = vpop.permute.xlu0 %1364
      %1366 = vrot.lane.b32.xlu0 %v492, 24
      %v1367 = vpop.permute.xlu0 %1366
      %1368 = vrot.lane.b32.xlu0 %v493, 24
      %v1369 = vpop.permute.xlu0 %1368
      %1370 = vrot.lane.b32.xlu0 %v494, 24
      %v1371 = vpop.permute.xlu0 %1370
      %1372 = vrot.lane.b32.xlu0 %v495, 24
      %v1373 = vpop.permute.xlu0 %1372
      %1374 = vrot.lane.b32.xlu0 %v496, 24
      %v1375 = vpop.permute.xlu0 %1374
      %1376 = vrot.lane.b32.xlu0 %v497, 24
      %v1377 = vpop.permute.xlu0 %1376
      %1378 = vrot.lane.b32.xlu0 %v498, 24
      %v1379 = vpop.permute.xlu0 %1378
      %1380 = vrot.lane.b32.xlu0 %v499, 24
      %v1381 = vpop.permute.xlu0 %1380
      %1382 = vrot.lane.b32.xlu0 %v500, 24
      %v1383 = vpop.permute.xlu0 %1382
      %1384 = vrot.lane.b32.xlu0 %v501, 24
      %v1385 = vpop.permute.xlu0 %1384
      %1386 = vrot.lane.b32.xlu0 %v502, 24
      %v1387 = vpop.permute.xlu0 %1386
      %1388 = vrot.lane.b32.xlu0 %v503, 24
      %v1389 = vpop.permute.xlu0 %1388
      %1390 = vrot.lane.b32.xlu0 %v504, 24
      %v1391 = vpop.permute.xlu0 %1390
      %1392 = vrot.lane.b32.xlu0 %v505, 24
      %v1393 = vpop.permute.xlu0 %1392
      %1394 = vrot.lane.b32.xlu0 %v506, 24
      %v1395 = vpop.permute.xlu0 %1394
      %1396 = vrot.lane.b32.xlu0 %v507, 24
      %v1397 = vpop.permute.xlu0 %1396
      %1398 = vrot.lane.b32.xlu0 %v508, 24
      %v1399 = vpop.permute.xlu0 %1398
      %1400 = vrot.lane.b32.xlu0 %v509, 24
      %v1401 = vpop.permute.xlu0 %1400
      %1402 = vrot.lane.b32.xlu0 %v510, 24
      %v1403 = vpop.permute.xlu0 %1402
      %1404 = vrot.lane.b32.xlu0 %v511, 24
      %v1405 = vpop.permute.xlu0 %1404
      %1406 = vrot.lane.b32.xlu0 %v512, 24
      %v1407 = vpop.permute.xlu0 %1406
      %1408 = vrot.lane.b32.xlu0 %v513, 24
      %v1409 = vpop.permute.xlu0 %1408
      %1410 = vrot.lane.b32.xlu0 %v514, 24
      %v1411 = vpop.permute.xlu0 %1410
      %1412 = vrot.lane.b32.xlu0 %v515, 24
      %v1413 = vpop.permute.xlu0 %1412
      %1414 = vrot.lane.b32.xlu0 %v516, 24
      %v1415 = vpop.permute.xlu0 %1414
      %1416 = vrot.lane.b32.xlu0 %v517, 24
      %v1417 = vpop.permute.xlu0 %1416
      %1490 = vrot.lane.b32.xlu0 %v518, 28
      %v1491 = vpop.permute.xlu0 %1490
      %1492 = vrot.lane.b32.xlu0 %v519, 28
      %v1493 = vpop.permute.xlu0 %1492
      %1494 = vrot.lane.b32.xlu0 %v520, 28
      %v1495 = vpop.permute.xlu0 %1494
      %1496 = vrot.lane.b32.xlu0 %v521, 28
      %v1497 = vpop.permute.xlu0 %1496
      %1498 = vrot.lane.b32.xlu0 %v522, 28
      %v1499 = vpop.permute.xlu0 %1498
      %1500 = vrot.lane.b32.xlu0 %v523, 28
      %v1501 = vpop.permute.xlu0 %1500
      %1502 = vrot.lane.b32.xlu0 %v524, 28
      %v1503 = vpop.permute.xlu0 %1502
      %1504 = vrot.lane.b32.xlu0 %v525, 28
      %v1505 = vpop.permute.xlu0 %1504
      %1506 = vrot.lane.b32.xlu0 %v526, 28
      %v1507 = vpop.permute.xlu0 %1506
      %1508 = vrot.lane.b32.xlu0 %v527, 28
      %v1509 = vpop.permute.xlu0 %1508
      %1510 = vrot.lane.b32.xlu0 %v528, 28
      %v1511 = vpop.permute.xlu0 %1510
      %1512 = vrot.lane.b32.xlu0 %v529, 28
      %v1513 = vpop.permute.xlu0 %1512
      %1514 = vrot.lane.b32.xlu0 %v530, 28
      %v1515 = vpop.permute.xlu0 %1514
      %1516 = vrot.lane.b32.xlu0 %v531, 28
      %v1517 = vpop.permute.xlu0 %1516
      %1518 = vrot.lane.b32.xlu0 %v532, 28
      %v1519 = vpop.permute.xlu0 %1518
      %1520 = vrot.lane.b32.xlu0 %v533, 28
      %v1521 = vpop.permute.xlu0 %1520
      %1522 = vrot.lane.b32.xlu0 %v534, 28
      %v1523 = vpop.permute.xlu0 %1522
      %1524 = vrot.lane.b32.xlu0 %v535, 28
      %v1525 = vpop.permute.xlu0 %1524
      %1526 = vrot.lane.b32.xlu0 %v536, 28
      %v1527 = vpop.permute.xlu0 %1526
      %1528 = vrot.lane.b32.xlu0 %v537, 28
      %v1529 = vpop.permute.xlu0 %1528
      %1530 = vrot.lane.b32.xlu0 %v538, 28
      %v1531 = vpop.permute.xlu0 %1530
      %1532 = vrot.lane.b32.xlu0 %v539, 28
      %v1533 = vpop.permute.xlu0 %1532
      %1534 = vrot.lane.b32.xlu0 %v540, 28
      %v1535 = vpop.permute.xlu0 %1534
      %1536 = vrot.lane.b32.xlu0 %v541, 28
      %v1537 = vpop.permute.xlu0 %1536
      %1538 = vrot.lane.b32.xlu0 %v542, 28
      %v1539 = vpop.permute.xlu0 %1538
      %1540 = vrot.lane.b32.xlu0 %v543, 28
      %v1541 = vpop.permute.xlu0 %1540
      %1542 = vrot.lane.b32.xlu0 %v544, 28
      %v1543 = vpop.permute.xlu0 %1542
      %1544 = vrot.lane.b32.xlu0 %v545, 28
      %v1545 = vpop.permute.xlu0 %1544
      %1546 = vrot.lane.b32.xlu0 %v546, 28
      %v1547 = vpop.permute.xlu0 %1546
      %1548 = vrot.lane.b32.xlu0 %v547, 28
      %v1549 = vpop.permute.xlu0 %1548
      %1550 = vrot.lane.b32.xlu0 %v548, 28
      %v1551 = vpop.permute.xlu0 %1550
      %1552 = vrot.lane.b32.xlu0 %v549, 28
      %v1553 = vpop.permute.xlu0 %1552
      %1554 = vrot.lane.b32.xlu0 %v550, 28
      %v1555 = vpop.permute.xlu0 %1554
      %1556 = vrot.lane.b32.xlu0 %v551, 28
      %v1557 = vpop.permute.xlu0 %1556
      %1558 = vrot.lane.b32.xlu0 %v552, 28
      %v1559 = vpop.permute.xlu0 %1558
      %1560 = vrot.lane.b32.xlu0 %v553, 28
      %v1561 = vpop.permute.xlu0 %1560
      %1634 = vrot.lane.b32.xlu0 %v554, 32
      %v1635 = vpop.permute.xlu0 %1634
      %1636 = vrot.lane.b32.xlu0 %v555, 32
      %v1637 = vpop.permute.xlu0 %1636
      %1638 = vrot.lane.b32.xlu0 %v556, 32
      %v1639 = vpop.permute.xlu0 %1638
      %1640 = vrot.lane.b32.xlu0 %v557, 32
      %v1641 = vpop.permute.xlu0 %1640
      %1642 = vrot.lane.b32.xlu0 %v558, 32
      %v1643 = vpop.permute.xlu0 %1642
      %1644 = vrot.lane.b32.xlu0 %v559, 32
      %v1645 = vpop.permute.xlu0 %1644
      %1646 = vrot.lane.b32.xlu0 %v560, 32
      %v1647 = vpop.permute.xlu0 %1646
      %1648 = vrot.lane.b32.xlu0 %v561, 32
      %v1649 = vpop.permute.xlu0 %1648
      %1650 = vrot.lane.b32.xlu0 %v562, 32
      %v1651 = vpop.permute.xlu0 %1650
      %1652 = vrot.lane.b32.xlu0 %v563, 32
      %v1653 = vpop.permute.xlu0 %1652
      %1654 = vrot.lane.b32.xlu0 %v564, 32
      %v1655 = vpop.permute.xlu0 %1654
      %1656 = vrot.lane.b32.xlu0 %v565, 32
      %v1657 = vpop.permute.xlu0 %1656
      %1658 = vrot.lane.b32.xlu0 %v566, 32
      %v1659 = vpop.permute.xlu0 %1658
      %1660 = vrot.lane.b32.xlu0 %v567, 32
      %v1661 = vpop.permute.xlu0 %1660
      %1662 = vrot.lane.b32.xlu0 %v568, 32
      %v1663 = vpop.permute.xlu0 %1662
      %1664 = vrot.lane.b32.xlu0 %v569, 32
      %v1665 = vpop.permute.xlu0 %1664
      %1666 = vrot.lane.b32.xlu0 %v570, 32
      %v1667 = vpop.permute.xlu0 %1666
      %1668 = vrot.lane.b32.xlu0 %v571, 32
      %v1669 = vpop.permute.xlu0 %1668
      %1670 = vrot.lane.b32.xlu0 %v572, 32
      %v1671 = vpop.permute.xlu0 %1670
      %1672 = vrot.lane.b32.xlu0 %v573, 32
      %v1673 = vpop.permute.xlu0 %1672
      %1674 = vrot.lane.b32.xlu0 %v574, 32
      %v1675 = vpop.permute.xlu0 %1674
      %1676 = vrot.lane.b32.xlu0 %v575, 32
      %v1677 = vpop.permute.xlu0 %1676
      %1678 = vrot.lane.b32.xlu0 %v576, 32
      %v1679 = vpop.permute.xlu0 %1678
      %1680 = vrot.lane.b32.xlu0 %v577, 32
      %v1681 = vpop.permute.xlu0 %1680
      %1682 = vrot.lane.b32.xlu0 %v578, 32
      %v1683 = vpop.permute.xlu0 %1682
      %1684 = vrot.lane.b32.xlu0 %v579, 32
      %v1685 = vpop.permute.xlu0 %1684
      %1686 = vrot.lane.b32.xlu0 %v580, 32
      %v1687 = vpop.permute.xlu0 %1686
      %1688 = vrot.lane.b32.xlu0 %v581, 32
      %v1689 = vpop.permute.xlu0 %1688
      %1690 = vrot.lane.b32.xlu0 %v582, 32
      %v1691 = vpop.permute.xlu0 %1690
      %1692 = vrot.lane.b32.xlu0 %v583, 32
      %v1693 = vpop.permute.xlu0 %1692
      %1694 = vrot.lane.b32.xlu0 %v584, 32
      %v1695 = vpop.permute.xlu0 %1694
      %1696 = vrot.lane.b32.xlu0 %v585, 32
      %v1697 = vpop.permute.xlu0 %1696
      %1698 = vrot.lane.b32.xlu0 %v586, 32
      %v1699 = vpop.permute.xlu0 %1698
      %1700 = vrot.lane.b32.xlu0 %v587, 32
      %v1701 = vpop.permute.xlu0 %1700
      %1702 = vrot.lane.b32.xlu0 %v588, 32
      %v1703 = vpop.permute.xlu0 %1702
      %1704 = vrot.lane.b32.xlu0 %v589, 32
      %v1705 = vpop.permute.xlu0 %1704
      %vm1742 = vcmask 31744
      %v1743 = vsel %vm1742, %v264, %v627
      %v1744 = vsel %vm1742, %v265, %v629
      %v1745 = vsel %vm1742, %v266, %v631
      %v1746 = vsel %vm1742, %v267, %v633
      %v1747 = vsel %vm1742, %v268, %v635
      %v1748 = vsel %vm1742, %v269, %v637
      %v1749 = vsel %vm1742, %v270, %v639
      %v1750 = vsel %vm1742, %v271, %v641
      %v1751 = vsel %vm1742, %v272, %v643
      %v1752 = vsel %vm1742, %v273, %v645
      %v1753 = vsel %vm1742, %v274, %v647
      %v1754 = vsel %vm1742, %v275, %v649
      %v1755 = vsel %vm1742, %v276, %v651
      %v1756 = vsel %vm1742, %v277, %v653
      %v1757 = vsel %vm1742, %v278, %v655
      %v1758 = vsel %vm1742, %v279, %v657
      %v1759 = vsel %vm1742, %v280, %v659
      %v1760 = vsel %vm1742, %v281, %v661
      %v1761 = vsel %vm1742, %v282, %v663
      %v1762 = vsel %vm1742, %v283, %v665
      %v1763 = vsel %vm1742, %v284, %v667
      %v1764 = vsel %vm1742, %v285, %v669
      %v1765 = vsel %vm1742, %v286, %v671
      %v1766 = vsel %vm1742, %v287, %v673
      %v1767 = vsel %vm1742, %v288, %v675
      %v1768 = vsel %vm1742, %v289, %v677
      %v1769 = vsel %vm1742, %v290, %v679
      %v1770 = vsel %vm1742, %v291, %v681
      %v1771 = vsel %vm1742, %v292, %v683
      %v1772 = vsel %vm1742, %v293, %v685
      %v1773 = vsel %vm1742, %v294, %v687
      %v1774 = vsel %vm1742, %v295, %v689
      %v1775 = vsel %vm1742, %v296, %v691
      %v1776 = vsel %vm1742, %v297, %v693
      %v1777 = vsel %vm1742, %v298, %v695
      %v1778 = vsel %vm1742, %v299, %v697
      %vm1779 = vcmask 64512
      %v1780 = vsel %vm1779, %v1743, %v771
      %v1781 = vsel %vm1779, %v1744, %v773
      %v1782 = vsel %vm1779, %v1745, %v775
      %v1783 = vsel %vm1779, %v1746, %v777
      %v1784 = vsel %vm1779, %v1747, %v779
      %v1785 = vsel %vm1779, %v1748, %v781
      %v1786 = vsel %vm1779, %v1749, %v783
      %v1787 = vsel %vm1779, %v1750, %v785
      %v1788 = vsel %vm1779, %v1751, %v787
      %v1789 = vsel %vm1779, %v1752, %v789
      %v1790 = vsel %vm1779, %v1753, %v791
      %v1791 = vsel %vm1779, %v1754, %v793
      %v1792 = vsel %vm1779, %v1755, %v795
      %v1793 = vsel %vm1779, %v1756, %v797
      %v1794 = vsel %vm1779, %v1757, %v799
      %v1795 = vsel %vm1779, %v1758, %v801
      %v1796 = vsel %vm1779, %v1759, %v803
      %v1797 = vsel %vm1779, %v1760, %v805
      %v1798 = vsel %vm1779, %v1761, %v807
      %v1799 = vsel %vm1779, %v1762, %v809
      %v1800 = vsel %vm1779, %v1763, %v811
      %v1801 = vsel %vm1779, %v1764, %v813
      %v1802 = vsel %vm1779, %v1765, %v815
      %v1803 = vsel %vm1779, %v1766, %v817
      %v1804 = vsel %vm1779, %v1767, %v819
      %v1805 = vsel %vm1779, %v1768, %v821
      %v1806 = vsel %vm1779, %v1769, %v823
      %v1807 = vsel %vm1779, %v1770, %v825
      %v1808 = vsel %vm1779, %v1771, %v827
      %v1809 = vsel %vm1779, %v1772, %v829
      %v1810 = vsel %vm1779, %v1773, %v831
      %v1811 = vsel %vm1779, %v1774, %v833
      %v1812 = vsel %vm1779, %v1775, %v835
      %v1813 = vsel %vm1779, %v1776, %v837
      %v1814 = vsel %vm1779, %v1777, %v839
      %v1815 = vsel %vm1779, %v1778, %v841
      %vm1816 = vcmask 97280
      %v1817 = vsel %vm1816, %v1780, %v915
      %v1818 = vsel %vm1816, %v1781, %v917
      %v1819 = vsel %vm1816, %v1782, %v919
      %v1820 = vsel %vm1816, %v1783, %v921
      %v1821 = vsel %vm1816, %v1784, %v923
      %v1822 = vsel %vm1816, %v1785, %v925
      %v1823 = vsel %vm1816, %v1786, %v927
      %v1824 = vsel %vm1816, %v1787, %v929
      %v1825 = vsel %vm1816, %v1788, %v931
      %v1826 = vsel %vm1816, %v1789, %v933
      %v1827 = vsel %vm1816, %v1790, %v935
      %v1828 = vsel %vm1816, %v1791, %v937
      %v1829 = vsel %vm1816, %v1792, %v939
      %v1830 = vsel %vm1816, %v1793, %v941
      %v1831 = vsel %vm1816, %v1794, %v943
      %v1832 = vsel %vm1816, %v1795, %v945
      %v1833 = vsel %vm1816, %v1796, %v947
      %v1834 = vsel %vm1816, %v1797, %v949
      %v1835 = vsel %vm1816, %v1798, %v951
      %v1836 = vsel %vm1816, %v1799, %v953
      %v1837 = vsel %vm1816, %v1800, %v955
      %v1838 = vsel %vm1816, %v1801, %v957
      %v1839 = vsel %vm1816, %v1802, %v959
      %v1840 = vsel %vm1816, %v1803, %v961
      %v1841 = vsel %vm1816, %v1804, %v963
      %v1842 = vsel %vm1816, %v1805, %v965
      %v1843 = vsel %vm1816, %v1806, %v967
      %v1844 = vsel %vm1816, %v1807, %v969
      %v1845 = vsel %vm1816, %v1808, %v971
      %v1846 = vsel %vm1816, %v1809, %v973
      %v1847 = vsel %vm1816, %v1810, %v975
      %v1848 = vsel %vm1816, %v1811, %v977
      %v1849 = vsel %vm1816, %v1812, %v979
      %v1850 = vsel %vm1816, %v1813, %v981
      %v1851 = vsel %vm1816, %v1814, %v983
      %v1852 = vsel %vm1816, %v1815, %v985
      %vm1853 = vcmask 130048
      %v1854 = vsel %vm1853, %v1817, %v1059
      %v1855 = vsel %vm1853, %v1818, %v1061
      %v1856 = vsel %vm1853, %v1819, %v1063
      %v1857 = vsel %vm1853, %v1820, %v1065
      %v1858 = vsel %vm1853, %v1821, %v1067
      %v1859 = vsel %vm1853, %v1822, %v1069
      %v1860 = vsel %vm1853, %v1823, %v1071
      %v1861 = vsel %vm1853, %v1824, %v1073
      %v1862 = vsel %vm1853, %v1825, %v1075
      %v1863 = vsel %vm1853, %v1826, %v1077
      %v1864 = vsel %vm1853, %v1827, %v1079
      %v1865 = vsel %vm1853, %v1828, %v1081
      %v1866 = vsel %vm1853, %v1829, %v1083
      %v1867 = vsel %vm1853, %v1830, %v1085
      %v1868 = vsel %vm1853, %v1831, %v1087
      %v1869 = vsel %vm1853, %v1832, %v1089
      %v1870 = vsel %vm1853, %v1833, %v1091
      %v1871 = vsel %vm1853, %v1834, %v1093
      %v1872 = vsel %vm1853, %v1835, %v1095
      %v1873 = vsel %vm1853, %v1836, %v1097
      %v1874 = vsel %vm1853, %v1837, %v1099
      %v1875 = vsel %vm1853, %v1838, %v1101
      %v1876 = vsel %vm1853, %v1839, %v1103
      %v1877 = vsel %vm1853, %v1840, %v1105
      %v1878 = vsel %vm1853, %v1841, %v1107
      %v1879 = vsel %vm1853, %v1842, %v1109
      %v1880 = vsel %vm1853, %v1843, %v1111
      %v1881 = vsel %vm1853, %v1844, %v1113
      %v1882 = vsel %vm1853, %v1845, %v1115
      %v1883 = vsel %vm1853, %v1846, %v1117
      %v1884 = vsel %vm1853, %v1847, %v1119
      %v1885 = vsel %vm1853, %v1848, %v1121
      %v1886 = vsel %vm1853, %v1849, %v1123
      %v1887 = vsel %vm1853, %v1850, %v1125
      %v1888 = vsel %vm1853, %v1851, %v1127
      %v1889 = vsel %vm1853, %v1852, %v1129
      %vm1890 = vcmask 162816
      %v1891 = vsel %vm1890, %v1854, %v1203
      %v1892 = vsel %vm1890, %v1855, %v1205
      %v1893 = vsel %vm1890, %v1856, %v1207
      %v1894 = vsel %vm1890, %v1857, %v1209
      %v1895 = vsel %vm1890, %v1858, %v1211
      %v1896 = vsel %vm1890, %v1859, %v1213
      %v1897 = vsel %vm1890, %v1860, %v1215
      %v1898 = vsel %vm1890, %v1861, %v1217
      %v1899 = vsel %vm1890, %v1862, %v1219
      %v1900 = vsel %vm1890, %v1863, %v1221
      %v1901 = vsel %vm1890, %v1864, %v1223
      %v1902 = vsel %vm1890, %v1865, %v1225
      %v1903 = vsel %vm1890, %v1866, %v1227
      %v1904 = vsel %vm1890, %v1867, %v1229
      %v1905 = vsel %vm1890, %v1868, %v1231
      %v1906 = vsel %vm1890, %v1869, %v1233
      %v1907 = vsel %vm1890, %v1870, %v1235
      %v1908 = vsel %vm1890, %v1871, %v1237
      %v1909 = vsel %vm1890, %v1872, %v1239
      %v1910 = vsel %vm1890, %v1873, %v1241
      %v1911 = vsel %vm1890, %v1874, %v1243
      %v1912 = vsel %vm1890, %v1875, %v1245
      %v1913 = vsel %vm1890, %v1876, %v1247
      %v1914 = vsel %vm1890, %v1877, %v1249
      %v1915 = vsel %vm1890, %v1878, %v1251
      %v1916 = vsel %vm1890, %v1879, %v1253
      %v1917 = vsel %vm1890, %v1880, %v1255
      %v1918 = vsel %vm1890, %v1881, %v1257
      %v1919 = vsel %vm1890, %v1882, %v1259
      %v1920 = vsel %vm1890, %v1883, %v1261
      %v1921 = vsel %vm1890, %v1884, %v1263
      %v1922 = vsel %vm1890, %v1885, %v1265
      %v1923 = vsel %vm1890, %v1886, %v1267
      %v1924 = vsel %vm1890, %v1887, %v1269
      %v1925 = vsel %vm1890, %v1888, %v1271
      %v1926 = vsel %vm1890, %v1889, %v1273
      %vm1927 = vcmask 195584
      %v1928 = vsel %vm1927, %v1891, %v1347
      %v1929 = vsel %vm1927, %v1892, %v1349
      %v1930 = vsel %vm1927, %v1893, %v1351
      %v1931 = vsel %vm1927, %v1894, %v1353
      %v1932 = vsel %vm1927, %v1895, %v1355
      %v1933 = vsel %vm1927, %v1896, %v1357
      %v1934 = vsel %vm1927, %v1897, %v1359
      %v1935 = vsel %vm1927, %v1898, %v1361
      %v1936 = vsel %vm1927, %v1899, %v1363
      %v1937 = vsel %vm1927, %v1900, %v1365
      %v1938 = vsel %vm1927, %v1901, %v1367
      %v1939 = vsel %vm1927, %v1902, %v1369
      %v1940 = vsel %vm1927, %v1903, %v1371
      %v1941 = vsel %vm1927, %v1904, %v1373
      %v1942 = vsel %vm1927, %v1905, %v1375
      %v1943 = vsel %vm1927, %v1906, %v1377
      %v1944 = vsel %vm1927, %v1907, %v1379
      %v1945 = vsel %vm1927, %v1908, %v1381
      %v1946 = vsel %vm1927, %v1909, %v1383
      %v1947 = vsel %vm1927, %v1910, %v1385
      %v1948 = vsel %vm1927, %v1911, %v1387
      %v1949 = vsel %vm1927, %v1912, %v1389
      %v1950 = vsel %vm1927, %v1913, %v1391
      %v1951 = vsel %vm1927, %v1914, %v1393
      %v1952 = vsel %vm1927, %v1915, %v1395
      %v1953 = vsel %vm1927, %v1916, %v1397
      %v1954 = vsel %vm1927, %v1917, %v1399
      %v1955 = vsel %vm1927, %v1918, %v1401
      %v1956 = vsel %vm1927, %v1919, %v1403
      %v1957 = vsel %vm1927, %v1920, %v1405
      %v1958 = vsel %vm1927, %v1921, %v1407
      %v1959 = vsel %vm1927, %v1922, %v1409
      %v1960 = vsel %vm1927, %v1923, %v1411
      %v1961 = vsel %vm1927, %v1924, %v1413
      %v1962 = vsel %vm1927, %v1925, %v1415
      %v1963 = vsel %vm1927, %v1926, %v1417
      %vm1964 = vcmask 228352
      %v1965 = vsel %vm1964, %v1928, %v1491
      %v1966 = vsel %vm1964, %v1929, %v1493
      %v1967 = vsel %vm1964, %v1930, %v1495
      %v1968 = vsel %vm1964, %v1931, %v1497
      %v1969 = vsel %vm1964, %v1932, %v1499
      %v1970 = vsel %vm1964, %v1933, %v1501
      %v1971 = vsel %vm1964, %v1934, %v1503
      %v1972 = vsel %vm1964, %v1935, %v1505
      %v1973 = vsel %vm1964, %v1936, %v1507
      %v1974 = vsel %vm1964, %v1937, %v1509
      %v1975 = vsel %vm1964, %v1938, %v1511
      %v1976 = vsel %vm1964, %v1939, %v1513
      %v1977 = vsel %vm1964, %v1940, %v1515
      %v1978 = vsel %vm1964, %v1941, %v1517
      %v1979 = vsel %vm1964, %v1942, %v1519
      %v1980 = vsel %vm1964, %v1943, %v1521
      %v1981 = vsel %vm1964, %v1944, %v1523
      %v1982 = vsel %vm1964, %v1945, %v1525
      %v1983 = vsel %vm1964, %v1946, %v1527
      %v1984 = vsel %vm1964, %v1947, %v1529
      %v1985 = vsel %vm1964, %v1948, %v1531
      %v1986 = vsel %vm1964, %v1949, %v1533
      %v1987 = vsel %vm1964, %v1950, %v1535
      %v1988 = vsel %vm1964, %v1951, %v1537
      %v1989 = vsel %vm1964, %v1952, %v1539
      %v1990 = vsel %vm1964, %v1953, %v1541
      %v1991 = vsel %vm1964, %v1954, %v1543
      %v1992 = vsel %vm1964, %v1955, %v1545
      %v1993 = vsel %vm1964, %v1956, %v1547
      %v1994 = vsel %vm1964, %v1957, %v1549
      %v1995 = vsel %vm1964, %v1958, %v1551
      %v1996 = vsel %vm1964, %v1959, %v1553
      %v1997 = vsel %vm1964, %v1960, %v1555
      %v1998 = vsel %vm1964, %v1961, %v1557
      %v1999 = vsel %vm1964, %v1962, %v1559
      %v2000 = vsel %vm1964, %v1963, %v1561
      %vm2001 = vcmask 261120
      %v2002 = vsel %vm2001, %v1965, %v1635
      %v2003 = vsel %vm2001, %v1966, %v1637
      %v2004 = vsel %vm2001, %v1967, %v1639
      %v2005 = vsel %vm2001, %v1968, %v1641
      %v2006 = vsel %vm2001, %v1969, %v1643
      %v2007 = vsel %vm2001, %v1970, %v1645
      %v2008 = vsel %vm2001, %v1971, %v1647
      %v2009 = vsel %vm2001, %v1972, %v1649
      %v2010 = vsel %vm2001, %v1973, %v1651
      %v2011 = vsel %vm2001, %v1974, %v1653
      %v2012 = vsel %vm2001, %v1975, %v1655
      %v2013 = vsel %vm2001, %v1976, %v1657
      %v2014 = vsel %vm2001, %v1977, %v1659
      %v2015 = vsel %vm2001, %v1978, %v1661
      %v2016 = vsel %vm2001, %v1979, %v1663
      %v2017 = vsel %vm2001, %v1980, %v1665
      %v2018 = vsel %vm2001, %v1981, %v1667
      %v2019 = vsel %vm2001, %v1982, %v1669
      %v2020 = vsel %vm2001, %v1983, %v1671
      %v2021 = vsel %vm2001, %v1984, %v1673
      %v2022 = vsel %vm2001, %v1985, %v1675
      %v2023 = vsel %vm2001, %v1986, %v1677
      %v2024 = vsel %vm2001, %v1987, %v1679
      %v2025 = vsel %vm2001, %v1988, %v1681
      %v2026 = vsel %vm2001, %v1989, %v1683
      %v2027 = vsel %vm2001, %v1990, %v1685
      %v2028 = vsel %vm2001, %v1991, %v1687
      %v2029 = vsel %vm2001, %v1992, %v1689
      %v2030 = vsel %vm2001, %v1993, %v1691
      %v2031 = vsel %vm2001, %v1994, %v1693
      %v2032 = vsel %vm2001, %v1995, %v1695
      %v2033 = vsel %vm2001, %v1996, %v1697
      %v2034 = vsel %vm2001, %v1997, %v1699
      %v2035 = vsel %vm2001, %v1998, %v1701
      %v2036 = vsel %vm2001, %v1999, %v1703
      %v2037 = vsel %vm2001, %v2000, %v1705
      %v2038 = vld [vmem:[%s1] sm:$0xff]
      %v2039 = vld [vmem:[%s1 + $0x8] sm:$0xff]
      %v2040 = vld [vmem:[%s1 + $0x10] sm:$0xff]
      %v2041 = vld [vmem:[%s1 + $0x18] sm:$0xff]
      %v2042 = vld [vmem:[%s1 + $0x20] sm:$0xf]
      %vm2043 = vcmask 293888
      %v2045 = vsel %vm2043, %v2002, 0
      %v2048 = vsel %vm2043, %v2003, 0
      %v2051 = vsel %vm2043, %v2004, 0
      %v2054 = vsel %vm2043, %v2005, 0
      %v2057 = vsel %vm2043, %v2006, 0
      %v2060 = vsel %vm2043, %v2007, 0
      %v2063 = vsel %vm2043, %v2008, 0
      %v2066 = vsel %vm2043, %v2009, 0
      %v2069 = vsel %vm2043, %v2010, 0
      %v2072 = vsel %vm2043, %v2011, 0
      %v2075 = vsel %vm2043, %v2012, 0
      %v2078 = vsel %vm2043, %v2013, 0
      %v2081 = vsel %vm2043, %v2014, 0
      %v2084 = vsel %vm2043, %v2015, 0
      %v2087 = vsel %vm2043, %v2016, 0
      %v2090 = vsel %vm2043, %v2017, 0
      %v2093 = vsel %vm2043, %v2018, 0
      %v2096 = vsel %vm2043, %v2019, 0
      %v2099 = vsel %vm2043, %v2020, 0
      %v2102 = vsel %vm2043, %v2021, 0
      %v2105 = vsel %vm2043, %v2022, 0
      %v2108 = vsel %vm2043, %v2023, 0
      %v2111 = vsel %vm2043, %v2024, 0
      %v2114 = vsel %vm2043, %v2025, 0
      %v2117 = vsel %vm2043, %v2026, 0
      %v2120 = vsel %vm2043, %v2027, 0
      %v2123 = vsel %vm2043, %v2028, 0
      %v2126 = vsel %vm2043, %v2029, 0
      %v2129 = vsel %vm2043, %v2030, 0
      %v2132 = vsel %vm2043, %v2031, 0
      %v2135 = vsel %vm2043, %v2032, 0
      %v2138 = vsel %vm2043, %v2033, 0
      %v2141 = vsel %vm2043, %v2034, 0
      %v2144 = vsel %vm2043, %v2035, 0
      %v2147 = vsel %vm2043, %v2036, 0
      %v2150 = vsel %vm2043, %v2037, 0
      %vm2152 = vcmask 1043456
      %v2154 = vsel %vm2152, %v2042, 0
      %2156 = vmatprep.subr.mxu0 0.0
      %2157 = vmatpush1.msra.mxu0 %v2038
      %2158 = vmatprep.subr.mxu0 0.0
      %2159 = vmatpush1.msra.mxu0 %v2039
      %2160 = vmatprep.subr.mxu0 0.0
      %2161 = vmatpush1.msra.mxu0 %v2040
      %2162 = vmatprep.subr.mxu0 0.0
      %2163 = vmatpush1.msra.mxu0 %v2041
      %2164 = vmatprep.subr.mxu0 0.0
      %2165 = vmatpush1.msra.mxu0 %v2154
      %2166 = vmatprep.subr.mxu0 0.0
      %2167 = vmatpush1.msra.mxu0 0.0
      %2168 = vmatprep.subr.mxu0 0.0
      %2169 = vmatpush1.msra.mxu0 0.0
      %2170 = vmatprep.subr.mxu0 0.0
      %2171 = vmatpush1.msra.mxu0 0.0
      %2172 = vmatprep.subr.mxu0 0.0
      %2173 = vmatpush1.msra.mxu0 0.0
      %2174 = vmatprep.subr.mxu0 0.0
      %2175 = vmatpush1.msra.mxu0 0.0
      %2176 = vmatprep.subr.mxu0 0.0
      %2177 = vmatpush1.msra.mxu0 0.0
      %2178 = vmatprep.subr.mxu0 0.0
      %2179 = vmatpush1.msra.mxu0 0.0
      %2180 = vmatprep.subr.mxu0 0.0
      %2181 = vmatpush1.msra.mxu0 0.0
      %2182 = vmatprep.subr.mxu0 0.0
      %2183 = vmatpush1.msra.mxu0 0.0
      %2184 = vmatprep.subr.mxu0 0.0
      %2185 = vmatpush1.msra.mxu0 0.0
      %2186 = vmatprep.subr.mxu0 0.0
      %2187 = vmatpush1.msra.mxu0 0.0
      %2188 = vmatprep.subr.mxu0 0.0
      %2189 = vmatpush1.msra.mxu0 0.0
      %2190 = vmatprep.subr.mxu0 0.0
      %2191 = vmatpush1.msra.mxu0 0.0
      %2192 = vmatprep.subr.mxu0 0.0
      %2193 = vmatpush1.msra.mxu0 0.0
      %2194 = vmatprep.subr.mxu0 0.0
      %2195 = vmatpush1.msra.mxu0 0.0
      %2196 = vmatprep.subr.mxu0 0.0
      %2197 = vmatpush1.msra.mxu0 0.0
      %2198 = vmatprep.subr.mxu0 0.0
      %2199 = vmatpush1.msra.mxu0 0.0
      %2200 = vmatprep.subr.mxu0 0.0
      %2201 = vmatpush1.msra.mxu0 0.0
      %2202 = vmatprep.subr.mxu0 0.0
      %2203 = vmatpush1.msra.mxu0 0.0
      %2204 = vmatprep.subr.mxu0 0.0
      %2205 = vmatpush1.msra.mxu0 0.0
      %2206 = vmatprep.subr.mxu0 0.0
      %2207 = vmatpush1.msra.mxu0 0.0
      %2208 = vmatprep.subr.mxu0 0.0
      %2209 = vmatpush1.msra.mxu0 0.0
      %2210 = vmatprep.subr.mxu0 0.0
      %2211 = vmatpush1.msra.mxu0 0.0
      %2212 = vmatprep.subr.mxu0 0.0
      %2213 = vmatpush1.msra.mxu0 0.0
      %2214 = vmatprep.subr.mxu0 0.0
      %2215 = vmatpush1.msra.mxu0 0.0
      %2216 = vmatprep.subr.mxu0 0.0
      %2217 = vmatpush1.msra.mxu0 0.0
      %2218 = vmatprep.subr.mxu0 0.0
      %2219 = vmatpush1.msra.mxu0 0.0
      %2220 = vmatprep.mubr.f32.mxu0 0.0
      %2221 = vmatmul.mubr.f32.gmra.mrb[0].mxu0 %v2045
      %v2222 = vpop.f32.mrb[0].mxu0
      %v2223 = vadd.f32 0.0, %v2222
      %v2224 = vpop.f32.mrb[0].mxu0
      %2225 = vmatprep.mubr.f32.mxu0 0.0
      %2226 = vmatmul.mubr.f32.gmra.mrb[0].mxu0 %v2048
      %v2227 = vpop.f32.mrb[0].mxu0
      %v2228 = vadd.f32 0.0, %v2227
      %v2229 = vpop.f32.mrb[0].mxu0
      %2230 = vmatprep.mubr.f32.mxu0 0.0
      %2231 = vmatmul.mubr.f32.gmra.mrb[0].mxu0 %v2051
      %v2232 = vpop.f32.mrb[0].mxu0
      %v2233 = vadd.f32 0.0, %v2232
      %v2234 = vpop.f32.mrb[0].mxu0
      %2235 = vmatprep.mubr.f32.mxu0 0.0
      %2236 = vmatmul.mubr.f32.gmra.mrb[0].mxu0 %v2054
      %v2237 = vpop.f32.mrb[0].mxu0
      %v2238 = vadd.f32 0.0, %v2237
      %v2239 = vpop.f32.mrb[0].mxu0
      %2240 = vmatprep.mubr.f32.mxu0 0.0
      %2241 = vmatmul.mubr.f32.gmra.mrb[0].mxu0 %v2057
      %v2242 = vpop.f32.mrb[0].mxu0
      %v2243 = vadd.f32 0.0, %v2242
      %v2244 = vpop.f32.mrb[0].mxu0
      %2245 = vmatprep.mubr.f32.mxu0 0.0
      %2246 = vmatmul.mubr.f32.gmra.mrb[0].mxu0 %v2060
      %v2247 = vpop.f32.mrb[0].mxu0
      %v2248 = vadd.f32 0.0, %v2247
      %v2249 = vpop.f32.mrb[0].mxu0
      %2250 = vmatprep.mubr.f32.mxu0 0.0
      %2251 = vmatmul.mubr.f32.gmra.mrb[0].mxu0 %v2063
      %v2252 = vpop.f32.mrb[0].mxu0
      %v2253 = vadd.f32 0.0, %v2252
      %v2254 = vpop.f32.mrb[0].mxu0
      %2255 = vmatprep.mubr.f32.mxu0 0.0
      %2256 = vmatmul.mubr.f32.gmra.mrb[0].mxu0 %v2066
      %v2257 = vpop.f32.mrb[0].mxu0
      %v2258 = vadd.f32 0.0, %v2257
      %v2259 = vpop.f32.mrb[0].mxu0
      %2260 = vmatprep.mubr.f32.mxu0 0.0
      %2261 = vmatmul.mubr.f32.gmra.mrb[0].mxu0 %v2069
      %v2262 = vpop.f32.mrb[0].mxu0
      %v2263 = vadd.f32 0.0, %v2262
      %v2264 = vpop.f32.mrb[0].mxu0
      %2265 = vmatprep.mubr.f32.mxu0 0.0
      %2266 = vmatmul.mubr.f32.gmra.mrb[0].mxu0 %v2072
      %v2267 = vpop.f32.mrb[0].mxu0
      %v2268 = vadd.f32 0.0, %v2267
      %v2269 = vpop.f32.mrb[0].mxu0
      %2270 = vmatprep.mubr.f32.mxu0 0.0
      %2271 = vmatmul.mubr.f32.gmra.mrb[0].mxu0 %v2075
      %v2272 = vpop.f32.mrb[0].mxu0
      %v2273 = vadd.f32 0.0, %v2272
      %v2274 = vpop.f32.mrb[0].mxu0
      %2275 = vmatprep.mubr.f32.mxu0 0.0
      %2276 = vmatmul.mubr.f32.gmra.mrb[0].mxu0 %v2078
      %v2277 = vpop.f32.mrb[0].mxu0
      %v2278 = vadd.f32 0.0, %v2277
      %v2279 = vpop.f32.mrb[0].mxu0
      %2280 = vmatprep.mubr.f32.mxu0 0.0
      %2281 = vmatmul.mubr.f32.gmra.mrb[0].mxu0 %v2081
      %v2282 = vpop.f32.mrb[0].mxu0
      %v2283 = vadd.f32 0.0, %v2282
      %v2284 = vpop.f32.mrb[0].mxu0
      %2285 = vmatprep.mubr.f32.mxu0 0.0
      %2286 = vmatmul.mubr.f32.gmra.mrb[0].mxu0 %v2084
      %v2287 = vpop.f32.mrb[0].mxu0
      %v2288 = vadd.f32 0.0, %v2287
      %v2289 = vpop.f32.mrb[0].mxu0
      %2290 = vmatprep.mubr.f32.mxu0 0.0
      %2291 = vmatmul.mubr.f32.gmra.mrb[0].mxu0 %v2087
      %v2292 = vpop.f32.mrb[0].mxu0
      %v2293 = vadd.f32 0.0, %v2292
      %v2294 = vpop.f32.mrb[0].mxu0
      %2295 = vmatprep.mubr.f32.mxu0 0.0
      %2296 = vmatmul.mubr.f32.gmra.mrb[0].mxu0 %v2090
      %v2297 = vpop.f32.mrb[0].mxu0
      %v2298 = vadd.f32 0.0, %v2297
      %v2299 = vpop.f32.mrb[0].mxu0
      %2300 = vmatprep.mubr.f32.mxu0 0.0
      %2301 = vmatmul.mubr.f32.gmra.mrb[0].mxu0 %v2093
      %v2302 = vpop.f32.mrb[0].mxu0
      %v2303 = vadd.f32 0.0, %v2302
      %v2304 = vpop.f32.mrb[0].mxu0
      %2305 = vmatprep.mubr.f32.mxu0 0.0
      %2306 = vmatmul.mubr.f32.gmra.mrb[0].mxu0 %v2096
      %v2307 = vpop.f32.mrb[0].mxu0
      %v2308 = vadd.f32 0.0, %v2307
      %v2309 = vpop.f32.mrb[0].mxu0
      %2310 = vmatprep.mubr.f32.mxu0 0.0
      %2311 = vmatmul.mubr.f32.gmra.mrb[0].mxu0 %v2099
      %v2312 = vpop.f32.mrb[0].mxu0
      %v2313 = vadd.f32 0.0, %v2312
      %v2314 = vpop.f32.mrb[0].mxu0
      %2315 = vmatprep.mubr.f32.mxu0 0.0
      %2316 = vmatmul.mubr.f32.gmra.mrb[0].mxu0 %v2102
      %v2317 = vpop.f32.mrb[0].mxu0
      %v2318 = vadd.f32 0.0, %v2317
      %v2319 = vpop.f32.mrb[0].mxu0
      %2320 = vmatprep.mubr.f32.mxu0 0.0
      %2321 = vmatmul.mubr.f32.gmra.mrb[0].mxu0 %v2105
      %v2322 = vpop.f32.mrb[0].mxu0
      %v2323 = vadd.f32 0.0, %v2322
      %v2324 = vpop.f32.mrb[0].mxu0
      %2325 = vmatprep.mubr.f32.mxu0 0.0
      %2326 = vmatmul.mubr.f32.gmra.mrb[0].mxu0 %v2108
      %v2327 = vpop.f32.mrb[0].mxu0
      %v2328 = vadd.f32 0.0, %v2327
      %v2329 = vpop.f32.mrb[0].mxu0
      %2330 = vmatprep.mubr.f32.mxu0 0.0
      %2331 = vmatmul.mubr.f32.gmra.mrb[0].mxu0 %v2111
      %v2332 = vpop.f32.mrb[0].mxu0
      %v2333 = vadd.f32 0.0, %v2332
      %v2334 = vpop.f32.mrb[0].mxu0
      %2335 = vmatprep.mubr.f32.mxu0 0.0
      %2336 = vmatmul.mubr.f32.gmra.mrb[0].mxu0 %v2114
      %v2337 = vpop.f32.mrb[0].mxu0
      %v2338 = vadd.f32 0.0, %v2337
      %v2339 = vpop.f32.mrb[0].mxu0
      %2340 = vmatprep.mubr.f32.mxu0 0.0
      %2341 = vmatmul.mubr.f32.gmra.mrb[0].mxu0 %v2117
      %v2342 = vpop.f32.mrb[0].mxu0
      %v2343 = vadd.f32 0.0, %v2342
      %v2344 = vpop.f32.mrb[0].mxu0
      %2345 = vmatprep.mubr.f32.mxu0 0.0
      %2346 = vmatmul.mubr.f32.gmra.mrb[0].mxu0 %v2120
      %v2347 = vpop.f32.mrb[0].mxu0
      %v2348 = vadd.f32 0.0, %v2347
      %v2349 = vpop.f32.mrb[0].mxu0
      %2350 = vmatprep.mubr.f32.mxu0 0.0
      %2351 = vmatmul.mubr.f32.gmra.mrb[0].mxu0 %v2123
      %v2352 = vpop.f32.mrb[0].mxu0
      %v2353 = vadd.f32 0.0, %v2352
      %v2354 = vpop.f32.mrb[0].mxu0
      %2355 = vmatprep.mubr.f32.mxu0 0.0
      %2356 = vmatmul.mubr.f32.gmra.mrb[0].mxu0 %v2126
      %v2357 = vpop.f32.mrb[0].mxu0
      %v2358 = vadd.f32 0.0, %v2357
      %v2359 = vpop.f32.mrb[0].mxu0
      %2360 = vmatprep.mubr.f32.mxu0 0.0
      %2361 = vmatmul.mubr.f32.gmra.mrb[0].mxu0 %v2129
      %v2362 = vpop.f32.mrb[0].mxu0
      %v2363 = vadd.f32 0.0, %v2362
      %v2364 = vpop.f32.mrb[0].mxu0
      %2365 = vmatprep.mubr.f32.mxu0 0.0
      %2366 = vmatmul.mubr.f32.gmra.mrb[0].mxu0 %v2132
      %v2367 = vpop.f32.mrb[0].mxu0
      %v2368 = vadd.f32 0.0, %v2367
      %v2369 = vpop.f32.mrb[0].mxu0
      %2370 = vmatprep.mubr.f32.mxu0 0.0
      %2371 = vmatmul.mubr.f32.gmra.mrb[0].mxu0 %v2135
      %v2372 = vpop.f32.mrb[0].mxu0
      %v2373 = vadd.f32 0.0, %v2372
      %v2374 = vpop.f32.mrb[0].mxu0
      %2375 = vmatprep.mubr.f32.mxu0 0.0
      %2376 = vmatmul.mubr.f32.gmra.mrb[0].mxu0 %v2138
      %v2377 = vpop.f32.mrb[0].mxu0
      %v2378 = vadd.f32 0.0, %v2377
      %v2379 = vpop.f32.mrb[0].mxu0
      %2380 = vmatprep.mubr.f32.mxu0 0.0
      %2381 = vmatmul.mubr.f32.gmra.mrb[0].mxu0 %v2141
      %v2382 = vpop.f32.mrb[0].mxu0
      %v2383 = vadd.f32 0.0, %v2382
      %v2384 = vpop.f32.mrb[0].mxu0
      %2385 = vmatprep.mubr.f32.mxu0 0.0
      %2386 = vmatmul.mubr.f32.gmra.mrb[0].mxu0 %v2144
      %v2387 = vpop.f32.mrb[0].mxu0
      %v2388 = vadd.f32 0.0, %v2387
      %v2389 = vpop.f32.mrb[0].mxu0
      %2390 = vmatprep.mubr.f32.mxu0 0.0
      %2391 = vmatmul.mubr.f32.gmra.mrb[0].mxu0 %v2147
      %v2392 = vpop.f32.mrb[0].mxu0
      %v2393 = vadd.f32 0.0, %v2392
      %v2394 = vpop.f32.mrb[0].mxu0
      %2395 = vmatprep.mubr.f32.mxu0 0.0
      %2396 = vmatmul.mubr.f32.gmra.mrb[0].mxu0 %v2150
      %v2397 = vpop.f32.mrb[0].mxu0
      %v2398 = vadd.f32 0.0, %v2397
      %v2399 = vpop.f32.mrb[0].mxu0
      %2400 = vdwg.mxu0
      %v2401 = vld [vmem:[%s2] sm:$0x1]
      %v2403 = vlaneseq
      %v2404 = vshrl.u32 %v2403, 7
      %v2405 = vsub.s32 0, %v2404
      %v2406 = vrot.slane %v2401, %v2405
      %v2408 = vadd.f32 %v2223, %v2406
      %v2409 = vadd.f32 %v2228, %v2406
      %v2410 = vadd.f32 %v2233, %v2406
      %v2411 = vadd.f32 %v2238, %v2406
      %v2412 = vadd.f32 %v2243, %v2406
      %v2413 = vadd.f32 %v2248, %v2406
      %v2414 = vadd.f32 %v2253, %v2406
      %v2415 = vadd.f32 %v2258, %v2406
      %v2416 = vadd.f32 %v2263, %v2406
      %v2417 = vadd.f32 %v2268, %v2406
      %v2418 = vadd.f32 %v2273, %v2406
      %v2419 = vadd.f32 %v2278, %v2406
      %v2420 = vadd.f32 %v2283, %v2406
      %v2421 = vadd.f32 %v2288, %v2406
      %v2422 = vadd.f32 %v2293, %v2406
      %v2423 = vadd.f32 %v2298, %v2406
      %v2424 = vadd.f32 %v2303, %v2406
      %v2425 = vadd.f32 %v2308, %v2406
      %v2426 = vadd.f32 %v2313, %v2406
      %v2427 = vadd.f32 %v2318, %v2406
      %v2428 = vadd.f32 %v2323, %v2406
      %v2429 = vadd.f32 %v2328, %v2406
      %v2430 = vadd.f32 %v2333, %v2406
      %v2431 = vadd.f32 %v2338, %v2406
      %v2432 = vadd.f32 %v2343, %v2406
      %v2433 = vadd.f32 %v2348, %v2406
      %v2434 = vadd.f32 %v2353, %v2406
      %v2435 = vadd.f32 %v2358, %v2406
      %v2436 = vadd.f32 %v2363, %v2406
      %v2437 = vadd.f32 %v2368, %v2406
      %v2438 = vadd.f32 %v2373, %v2406
      %v2439 = vadd.f32 %v2378, %v2406
      %v2440 = vadd.f32 %v2383, %v2406
      %v2441 = vadd.f32 %v2388, %v2406
      %v2442 = vadd.f32 %v2393, %v2406
      %v2443 = vadd.f32 %v2398, %v2406
      %v2444 = vmax.f32 %v2408, 0.0
      %v2445 = vmax.f32 %v2409, 0.0
      %v2446 = vmax.f32 %v2410, 0.0
      %v2447 = vmax.f32 %v2411, 0.0
      %v2448 = vmax.f32 %v2412, 0.0
      %v2449 = vmax.f32 %v2413, 0.0
      %v2450 = vmax.f32 %v2414, 0.0
      %v2451 = vmax.f32 %v2415, 0.0
      %v2452 = vmax.f32 %v2416, 0.0
      %v2453 = vmax.f32 %v2417, 0.0
      %v2454 = vmax.f32 %v2418, 0.0
      %v2455 = vmax.f32 %v2419, 0.0
      %v2456 = vmax.f32 %v2420, 0.0
      %v2457 = vmax.f32 %v2421, 0.0
      %v2458 = vmax.f32 %v2422, 0.0
      %v2459 = vmax.f32 %v2423, 0.0
      %v2460 = vmax.f32 %v2424, 0.0
      %v2461 = vmax.f32 %v2425, 0.0
      %v2462 = vmax.f32 %v2426, 0.0
      %v2463 = vmax.f32 %v2427, 0.0
      %v2464 = vmax.f32 %v2428, 0.0
      %v2465 = vmax.f32 %v2429, 0.0
      %v2466 = vmax.f32 %v2430, 0.0
      %v2467 = vmax.f32 %v2431, 0.0
      %v2468 = vmax.f32 %v2432, 0.0
      %v2469 = vmax.f32 %v2433, 0.0
      %v2470 = vmax.f32 %v2434, 0.0
      %v2471 = vmax.f32 %v2435, 0.0
      %v2472 = vmax.f32 %v2436, 0.0
      %v2473 = vmax.f32 %v2437, 0.0
      %v2474 = vmax.f32 %v2438, 0.0
      %v2475 = vmax.f32 %v2439, 0.0
      %v2476 = vmax.f32 %v2440, 0.0
      %v2477 = vmax.f32 %v2441, 0.0
      %v2478 = vmax.f32 %v2442, 0.0
      %v2479 = vmax.f32 %v2443, 0.0
      %s2480 = smul.u32 %s21, 16
      %s2481 = ssub.s32 %s2480, 1
      %v2482 = vstv %s2481
      %v2483 = vadd.s32 %v2482, 1
      %v2484 = vadd.s32 %v2482, 2
      %v2485 = vadd.s32 %v2482, 3
      %v2486 = vadd.s32 %v2482, 4
      %v2487 = vadd.s32 %v2482, 5
      %v2488 = vadd.s32 %v2482, 6
      %v2489 = vadd.s32 %v2482, 7
      %v2490 = vadd.s32 %v2482, 8
      %v2491 = vadd.s32 %v2482, 9
      %v2492 = vadd.s32 %v2482, 10
      %v2493 = vadd.s32 %v2482, 11
      %v2494 = vadd.s32 %v2482, 12
      %v2495 = vadd.s32 %v2482, 13
      %v2496 = vadd.s32 %v2482, 14
      %v2497 = vadd.s32 %v2482, 15
      %v2498 = vadd.s32 %v2482, 16
      %v2499 = vadd.s32 %v2482, 17
      %vm2500 = vcmp.ge.s32.totalorder %v2482, 0
      %vm2501 = vcmp.ge.s32.totalorder %v2483, 0
      %vm2502 = vcmp.ge.s32.totalorder %v2484, 0
      %vm2503 = vcmp.ge.s32.totalorder %v2485, 0
      %vm2504 = vcmp.ge.s32.totalorder %v2486, 0
      %vm2505 = vcmp.ge.s32.totalorder %v2487, 0
      %vm2506 = vcmp.ge.s32.totalorder %v2488, 0
      %vm2507 = vcmp.ge.s32.totalorder %v2489, 0
      %vm2508 = vcmp.ge.s32.totalorder %v2490, 0
      %vm2509 = vcmp.ge.s32.totalorder %v2491, 0
      %vm2510 = vcmp.ge.s32.totalorder %v2492, 0
      %vm2511 = vcmp.ge.s32.totalorder %v2493, 0
      %vm2512 = vcmp.ge.s32.totalorder %v2494, 0
      %vm2513 = vcmp.ge.s32.totalorder %v2495, 0
      %vm2514 = vcmp.ge.s32.totalorder %v2496, 0
      %vm2515 = vcmp.ge.s32.totalorder %v2497, 0
      %vm2516 = vcmp.ge.s32.totalorder %v2498, 0
      %vm2517 = vcmp.ge.s32.totalorder %v2499, 0
      %vm2518 = vcmp.lt.s32.totalorder %v2482, 16
      %vm2519 = vcmp.lt.s32.totalorder %v2483, 16
      %vm2520 = vcmp.lt.s32.totalorder %v2484, 16
      %vm2521 = vcmp.lt.s32.totalorder %v2485, 16
      %vm2522 = vcmp.lt.s32.totalorder %v2486, 16
      %vm2523 = vcmp.lt.s32.totalorder %v2487, 16
      %vm2524 = vcmp.lt.s32.totalorder %v2488, 16
      %vm2525 = vcmp.lt.s32.totalorder %v2489, 16
      %vm2526 = vcmp.lt.s32.totalorder %v2490, 16
      %vm2527 = vcmp.lt.s32.totalorder %v2491, 16
      %vm2528 = vcmp.lt.s32.totalorder %v2492, 16
      %vm2529 = vcmp.lt.s32.totalorder %v2493, 16
      %vm2530 = vcmp.lt.s32.totalorder %v2494, 16
      %vm2531 = vcmp.lt.s32.totalorder %v2495, 16
      %vm2532 = vcmp.lt.s32.totalorder %v2496, 16
      %vm2533 = vcmp.lt.s32.totalorder %v2497, 16
      %vm2534 = vcmp.lt.s32.totalorder %v2498, 16
      %vm2535 = vcmp.lt.s32.totalorder %v2499, 16
      %vm2536 = vmand %vm2500, %vm2518
      %vm2537 = vmand %vm2501, %vm2519
      %vm2538 = vmand %vm2502, %vm2520
      %vm2539 = vmand %vm2503, %vm2521
      %vm2540 = vmand %vm2504, %vm2522
      %vm2541 = vmand %vm2505, %vm2523
      %vm2542 = vmand %vm2506, %vm2524
      %vm2543 = vmand %vm2507, %vm2525
      %vm2544 = vmand %vm2508, %vm2526
      %vm2545 = vmand %vm2509, %vm2527
      %vm2546 = vmand %vm2510, %vm2528
      %vm2547 = vmand %vm2511, %vm2529
      %vm2548 = vmand %vm2512, %vm2530
      %vm2549 = vmand %vm2513, %vm2531
      %vm2550 = vmand %vm2514, %vm2532
      %vm2551 = vmand %vm2515, %vm2533
      %vm2552 = vmand %vm2516, %vm2534
      %vm2553 = vmand %vm2517, %vm2535
      %v2554 = vsel %vm2536, 1, 0
      %v2555 = vsel %vm2537, 1, 0
      %v2556 = vsel %vm2538, 1, 0
      %v2557 = vsel %vm2539, 1, 0
      %v2558 = vsel %vm2540, 1, 0
      %v2559 = vsel %vm2541, 1, 0
      %v2560 = vsel %vm2542, 1, 0
      %v2561 = vsel %vm2543, 1, 0
      %v2562 = vsel %vm2544, 1, 0
      %v2563 = vsel %vm2545, 1, 0
      %v2564 = vsel %vm2546, 1, 0
      %v2565 = vsel %vm2547, 1, 0
      %v2566 = vsel %vm2548, 1, 0
      %v2567 = vsel %vm2549, 1, 0
      %v2568 = vsel %vm2550, 1, 0
      %v2569 = vsel %vm2551, 1, 0
      %v2570 = vsel %vm2552, 1, 0
      %v2571 = vsel %vm2553, 1, 0
      %vm2572 = vcmp.eq.s32.totalorder %v2554, 1
      %vm2573 = vcmp.eq.s32.totalorder %v2555, 1
      %vm2574 = vcmp.eq.s32.totalorder %v2556, 1
      %vm2575 = vcmp.eq.s32.totalorder %v2557, 1
      %vm2576 = vcmp.eq.s32.totalorder %v2558, 1
      %vm2577 = vcmp.eq.s32.totalorder %v2559, 1
      %vm2578 = vcmp.eq.s32.totalorder %v2560, 1
      %vm2579 = vcmp.eq.s32.totalorder %v2561, 1
      %vm2580 = vcmp.eq.s32.totalorder %v2562, 1
      %vm2581 = vcmp.eq.s32.totalorder %v2563, 1
      %vm2582 = vcmp.eq.s32.totalorder %v2564, 1
      %vm2583 = vcmp.eq.s32.totalorder %v2565, 1
      %vm2584 = vcmp.eq.s32.totalorder %v2566, 1
      %vm2585 = vcmp.eq.s32.totalorder %v2567, 1
      %vm2586 = vcmp.eq.s32.totalorder %v2568, 1
      %vm2587 = vcmp.eq.s32.totalorder %v2569, 1
      %vm2588 = vcmp.eq.s32.totalorder %v2570, 1
      %vm2589 = vcmp.eq.s32.totalorder %v2571, 1
      %v2590 = vsel %vm2572, %v2444, 0.0
      %v2591 = vsel %vm2572, %v2445, 0.0
      %v2592 = vsel %vm2573, %v2446, 0.0
      %v2593 = vsel %vm2573, %v2447, 0.0
      %v2594 = vsel %vm2574, %v2448, 0.0
      %v2595 = vsel %vm2574, %v2449, 0.0
      %v2596 = vsel %vm2575, %v2450, 0.0
      %v2597 = vsel %vm2575, %v2451, 0.0
      %v2598 = vsel %vm2576, %v2452, 0.0
      %v2599 = vsel %vm2576, %v2453, 0.0
      %v2600 = vsel %vm2577, %v2454, 0.0
      %v2601 = vsel %vm2577, %v2455, 0.0
      %v2602 = vsel %vm2578, %v2456, 0.0
      %v2603 = vsel %vm2578, %v2457, 0.0
      %v2604 = vsel %vm2579, %v2458, 0.0
      %v2605 = vsel %vm2579, %v2459, 0.0
      %v2606 = vsel %vm2580, %v2460, 0.0
      %v2607 = vsel %vm2580, %v2461, 0.0
      %v2608 = vsel %vm2581, %v2462, 0.0
      %v2609 = vsel %vm2581, %v2463, 0.0
      %v2610 = vsel %vm2582, %v2464, 0.0
      %v2611 = vsel %vm2582, %v2465, 0.0
      %v2612 = vsel %vm2583, %v2466, 0.0
      %v2613 = vsel %vm2583, %v2467, 0.0
      %v2614 = vsel %vm2584, %v2468, 0.0
      %v2615 = vsel %vm2584, %v2469, 0.0
      %v2616 = vsel %vm2585, %v2470, 0.0
      %v2617 = vsel %vm2585, %v2471, 0.0
      %v2618 = vsel %vm2586, %v2472, 0.0
      %v2619 = vsel %vm2586, %v2473, 0.0
      %v2620 = vsel %vm2587, %v2474, 0.0
      %v2621 = vsel %vm2587, %v2475, 0.0
      %v2622 = vsel %vm2588, %v2476, 0.0
      %v2623 = vsel %vm2588, %v2477, 0.0
      %v2624 = vsel %vm2589, %v2478, 0.0
      %v2625 = vsel %vm2589, %v2479, 0.0
      %vm2662 = vcmask 1040384
      %v2663 = vrot.slane %v2590, 7
      %v2664 = vrot.slane %v2591, 7
      %v2665 = vsel %vm2662, %v2663, %v2664
      %v2666 = vrot.slane %v2592, 7
      %v2667 = vrot.slane %v2593, 7
      %v2668 = vsel %vm2662, %v2666, %v2667
      %v2669 = vrot.slane %v2594, 7
      %v2670 = vrot.slane %v2595, 7
      %v2671 = vsel %vm2662, %v2669, %v2670
      %v2672 = vrot.slane %v2596, 7
      %v2673 = vrot.slane %v2597, 7
      %v2674 = vsel %vm2662, %v2672, %v2673
      %v2675 = vrot.slane %v2598, 7
      %v2676 = vrot.slane %v2599, 7
      %v2677 = vsel %vm2662, %v2675, %v2676
      %v2678 = vrot.slane %v2600, 7
      %v2679 = vrot.slane %v2601, 7
      %v2680 = vsel %vm2662, %v2678, %v2679
      %v2681 = vrot.slane %v2602, 7
      %v2682 = vrot.slane %v2603, 7
      %v2683 = vsel %vm2662, %v2681, %v2682
      %v2684 = vrot.slane %v2604, 7
      %v2685 = vrot.slane %v2605, 7
      %v2686 = vsel %vm2662, %v2684, %v2685
      %v2687 = vrot.slane %v2606, 7
      %v2688 = vrot.slane %v2607, 7
      %v2689 = vsel %vm2662, %v2687, %v2688
      %v2690 = vrot.slane %v2608, 7
      %v2691 = vrot.slane %v2609, 7
      %v2692 = vsel %vm2662, %v2690, %v2691
      %v2693 = vrot.slane %v2610, 7
      %v2694 = vrot.slane %v2611, 7
      %v2695 = vsel %vm2662, %v2693, %v2694
      %v2696 = vrot.slane %v2612, 7
      %v2697 = vrot.slane %v2613, 7
      %v2698 = vsel %vm2662, %v2696, %v2697
      %v2699 = vrot.slane %v2614, 7
      %v2700 = vrot.slane %v2615, 7
      %v2701 = vsel %vm2662, %v2699, %v2700
      %v2702 = vrot.slane %v2616, 7
      %v2703 = vrot.slane %v2617, 7
      %v2704 = vsel %vm2662, %v2702, %v2703
      %v2705 = vrot.slane %v2618, 7
      %v2706 = vrot.slane %v2619, 7
      %v2707 = vsel %vm2662, %v2705, %v2706
      %v2708 = vrot.slane %v2620, 7
      %v2709 = vrot.slane %v2621, 7
      %v2710 = vsel %vm2662, %v2708, %v2709
      %v2711 = vrot.slane %v2622, 7
      %v2712 = vrot.slane %v2623, 7
      %v2713 = vsel %vm2662, %v2711, %v2712
      %v2714 = vrot.slane %v2624, 7
      %v2715 = vrot.slane %v2625, 7
      %v2716 = vsel %vm2662, %v2714, %v2715
      %v2769 = vsel %vm2662, 0.0, %v2663
      %v2770 = vsel %vm2662, 0.0, %v2666
      %v2771 = vsel %vm2662, 0.0, %v2669
      %v2772 = vsel %vm2662, 0.0, %v2672
      %v2773 = vsel %vm2662, 0.0, %v2675
      %v2774 = vsel %vm2662, 0.0, %v2678
      %v2775 = vsel %vm2662, 0.0, %v2681
      %v2776 = vsel %vm2662, 0.0, %v2684
      %v2777 = vsel %vm2662, 0.0, %v2687
      %v2778 = vsel %vm2662, 0.0, %v2690
      %v2779 = vsel %vm2662, 0.0, %v2693
      %v2780 = vsel %vm2662, 0.0, %v2696
      %v2781 = vsel %vm2662, 0.0, %v2699
      %v2782 = vsel %vm2662, 0.0, %v2702
      %v2783 = vsel %vm2662, 0.0, %v2705
      %v2784 = vsel %vm2662, 0.0, %v2708
      %v2785 = vsel %vm2662, 0.0, %v2711
      %v2786 = vsel %vm2662, 0.0, %v2714
      %v2787 = vsel %vm2662, %v2664, 0.0
      %v2788 = vsel %vm2662, %v2667, 0.0
      %v2789 = vsel %vm2662, %v2670, 0.0
      %v2790 = vsel %vm2662, %v2673, 0.0
      %v2791 = vsel %vm2662, %v2676, 0.0
      %v2792 = vsel %vm2662, %v2679, 0.0
      %v2793 = vsel %vm2662, %v2682, 0.0
      %v2794 = vsel %vm2662, %v2685, 0.0
      %v2795 = vsel %vm2662, %v2688, 0.0
      %v2796 = vsel %vm2662, %v2691, 0.0
      %v2797 = vsel %vm2662, %v2694, 0.0
      %v2798 = vsel %vm2662, %v2697, 0.0
      %v2799 = vsel %vm2662, %v2700, 0.0
      %v2800 = vsel %vm2662, %v2703, 0.0
      %v2801 = vsel %vm2662, %v2706, 0.0
      %v2802 = vsel %vm2662, %v2709, 0.0
      %v2803 = vsel %vm2662, %v2712, 0.0
      %v2804 = vsel %vm2662, %v2715, 0.0
      %vm2837 = vcmask 1046528
      %v2838 = vrot.slane %v2769, 1
      %v2839 = vrot.slane %v2665, 1
      %v2840 = vsel %vm2837, %v2838, %v2839
      %v2841 = vrot.slane %v2787, 1
      %v2842 = vsel %vm2837, %v2839, %v2841
      %v2843 = vrot.slane %v2770, 1
      %v2844 = vrot.slane %v2668, 1
      %v2845 = vsel %vm2837, %v2843, %v2844
      %v2846 = vrot.slane %v2788, 1
      %v2847 = vsel %vm2837, %v2844, %v2846
      %v2848 = vrot.slane %v2771, 1
      %v2849 = vrot.slane %v2671, 1
      %v2850 = vsel %vm2837, %v2848, %v2849
      %v2851 = vrot.slane %v2789, 1
      %v2852 = vsel %vm2837, %v2849, %v2851
      %v2853 = vrot.slane %v2772, 1
      %v2854 = vrot.slane %v2674, 1
      %v2855 = vsel %vm2837, %v2853, %v2854
      %v2856 = vrot.slane %v2790, 1
      %v2857 = vsel %vm2837, %v2854, %v2856
      %v2858 = vrot.slane %v2773, 1
      %v2859 = vrot.slane %v2677, 1
      %v2860 = vsel %vm2837, %v2858, %v2859
      %v2861 = vrot.slane %v2791, 1
      %v2862 = vsel %vm2837, %v2859, %v2861
      %v2863 = vrot.slane %v2774, 1
      %v2864 = vrot.slane %v2680, 1
      %v2865 = vsel %vm2837, %v2863, %v2864
      %v2866 = vrot.slane %v2792, 1
      %v2867 = vsel %vm2837, %v2864, %v2866
      %v2868 = vrot.slane %v2775, 1
      %v2869 = vrot.slane %v2683, 1
      %v2870 = vsel %vm2837, %v2868, %v2869
      %v2871 = vrot.slane %v2793, 1
      %v2872 = vsel %vm2837, %v2869, %v2871
      %v2873 = vrot.slane %v2776, 1
      %v2874 = vrot.slane %v2686, 1
      %v2875 = vsel %vm2837, %v2873, %v2874
      %v2876 = vrot.slane %v2794, 1
      %v2877 = vsel %vm2837, %v2874, %v2876
      %v2878 = vrot.slane %v2777, 1
      %v2879 = vrot.slane %v2689, 1
      %v2880 = vsel %vm2837, %v2878, %v2879
      %v2881 = vrot.slane %v2795, 1
      %v2882 = vsel %vm2837, %v2879, %v2881
      %v2883 = vrot.slane %v2778, 1
      %v2884 = vrot.slane %v2692, 1
      %v2885 = vsel %vm2837, %v2883, %v2884
      %v2886 = vrot.slane %v2796, 1
      %v2887 = vsel %vm2837, %v2884, %v2886
      %v2888 = vrot.slane %v2779, 1
      %v2889 = vrot.slane %v2695, 1
      %v2890 = vsel %vm2837, %v2888, %v2889
      %v2891 = vrot.slane %v2797, 1
      %v2892 = vsel %vm2837, %v2889, %v2891
      %v2893 = vrot.slane %v2780, 1
      %v2894 = vrot.slane %v2698, 1
      %v2895 = vsel %vm2837, %v2893, %v2894
      %v2896 = vrot.slane %v2798, 1
      %v2897 = vsel %vm2837, %v2894, %v2896
      %v2898 = vrot.slane %v2781, 1
      %v2899 = vrot.slane %v2701, 1
      %v2900 = vsel %vm2837, %v2898, %v2899
      %v2901 = vrot.slane %v2799, 1
      %v2902 = vsel %vm2837, %v2899, %v2901
      %v2903 = vrot.slane %v2782, 1
      %v2904 = vrot.slane %v2704, 1
      %v2905 = vsel %vm2837, %v2903, %v2904
      %v2906 = vrot.slane %v2800, 1
      %v2907 = vsel %vm2837, %v2904, %v2906
      %v2908 = vrot.slane %v2783, 1
      %v2909 = vrot.slane %v2707, 1
      %v2910 = vsel %vm2837, %v2908, %v2909
      %v2911 = vrot.slane %v2801, 1
      %v2912 = vsel %vm2837, %v2909, %v2911
      %v2913 = vrot.slane %v2784, 1
      %v2914 = vrot.slane %v2710, 1
      %v2915 = vsel %vm2837, %v2913, %v2914
      %v2916 = vrot.slane %v2802, 1
      %v2917 = vsel %vm2837, %v2914, %v2916
      %2918 = vrot.lane.b32.xlu0 %v2840, 4
      %v2919 = vpop.permute.xlu0 %2918
      %2920 = vrot.lane.b32.xlu0 %v2842, 4
      %v2921 = vpop.permute.xlu0 %2920
      %2922 = vrot.lane.b32.xlu0 %v2845, 4
      %v2923 = vpop.permute.xlu0 %2922
      %2924 = vrot.lane.b32.xlu0 %v2847, 4
      %v2925 = vpop.permute.xlu0 %2924
      %2926 = vrot.lane.b32.xlu0 %v2850, 4
      %v2927 = vpop.permute.xlu0 %2926
      %2928 = vrot.lane.b32.xlu0 %v2852, 4
      %v2929 = vpop.permute.xlu0 %2928
      %2930 = vrot.lane.b32.xlu0 %v2855, 4
      %v2931 = vpop.permute.xlu0 %2930
      %2932 = vrot.lane.b32.xlu0 %v2857, 4
      %v2933 = vpop.permute.xlu0 %2932
      %2934 = vrot.lane.b32.xlu0 %v2860, 4
      %v2935 = vpop.permute.xlu0 %2934
      %2936 = vrot.lane.b32.xlu0 %v2862, 4
      %v2937 = vpop.permute.xlu0 %2936
      %2938 = vrot.lane.b32.xlu0 %v2865, 4
      %v2939 = vpop.permute.xlu0 %2938
      %2940 = vrot.lane.b32.xlu0 %v2867, 4
      %v2941 = vpop.permute.xlu0 %2940
      %2942 = vrot.lane.b32.xlu0 %v2870, 4
      %v2943 = vpop.permute.xlu0 %2942
      %2944 = vrot.lane.b32.xlu0 %v2872, 4
      %v2945 = vpop.permute.xlu0 %2944
      %2946 = vrot.lane.b32.xlu0 %v2875, 4
      %v2947 = vpop.permute.xlu0 %2946
      %2948 = vrot.lane.b32.xlu0 %v2877, 4
      %v2949 = vpop.permute.xlu0 %2948
      %2950 = vrot.lane.b32.xlu0 %v2880, 4
      %v2951 = vpop.permute.xlu0 %2950
      %2952 = vrot.lane.b32.xlu0 %v2882, 4
      %v2953 = vpop.permute.xlu0 %2952
      %2954 = vrot.lane.b32.xlu0 %v2885, 4
      %v2955 = vpop.permute.xlu0 %2954
      %2956 = vrot.lane.b32.xlu0 %v2887, 4
      %v2957 = vpop.permute.xlu0 %2956
      %2958 = vrot.lane.b32.xlu0 %v2890, 4
      %v2959 = vpop.permute.xlu0 %2958
      %2960 = vrot.lane.b32.xlu0 %v2892, 4
      %v2961 = vpop.permute.xlu0 %2960
      %2962 = vrot.lane.b32.xlu0 %v2895, 4
      %v2963 = vpop.permute.xlu0 %2962
      %2964 = vrot.lane.b32.xlu0 %v2897, 4
      %v2965 = vpop.permute.xlu0 %2964
      %2966 = vrot.lane.b32.xlu0 %v2900, 4
      %v2967 = vpop.permute.xlu0 %2966
      %2968 = vrot.lane.b32.xlu0 %v2902, 4
      %v2969 = vpop.permute.xlu0 %2968
      %2970 = vrot.lane.b32.xlu0 %v2905, 4
      %v2971 = vpop.permute.xlu0 %2970
      %2972 = vrot.lane.b32.xlu0 %v2907, 4
      %v2973 = vpop.permute.xlu0 %2972
      %2974 = vrot.lane.b32.xlu0 %v2910, 4
      %v2975 = vpop.permute.xlu0 %2974
      %2976 = vrot.lane.b32.xlu0 %v2912, 4
      %v2977 = vpop.permute.xlu0 %2976
      %2978 = vrot.lane.b32.xlu0 %v2915, 4
      %v2979 = vpop.permute.xlu0 %2978
      %2980 = vrot.lane.b32.xlu0 %v2917, 4
      %v2981 = vpop.permute.xlu0 %2980
      %vm3014 = vcmask 1045504
      %v3015 = vrot.slane %v2769, 2
      %v3016 = vrot.slane %v2665, 2
      %v3017 = vsel %vm3014, %v3015, %v3016
      %v3018 = vrot.slane %v2787, 2
      %v3019 = vsel %vm3014, %v3016, %v3018
      %v3020 = vrot.slane %v2770, 2
      %v3021 = vrot.slane %v2668, 2
      %v3022 = vsel %vm3014, %v3020, %v3021
      %v3023 = vrot.slane %v2788, 2
      %v3024 = vsel %vm3014, %v3021, %v3023
      %v3025 = vrot.slane %v2771, 2
      %v3026 = vrot.slane %v2671, 2
      %v3027 = vsel %vm3014, %v3025, %v3026
      %v3028 = vrot.slane %v2789, 2
      %v3029 = vsel %vm3014, %v3026, %v3028
      %v3030 = vrot.slane %v2772, 2
      %v3031 = vrot.slane %v2674, 2
      %v3032 = vsel %vm3014, %v3030, %v3031
      %v3033 = vrot.slane %v2790, 2
      %v3034 = vsel %vm3014, %v3031, %v3033
      %v3035 = vrot.slane %v2773, 2
      %v3036 = vrot.slane %v2677, 2
      %v3037 = vsel %vm3014, %v3035, %v3036
      %v3038 = vrot.slane %v2791, 2
      %v3039 = vsel %vm3014, %v3036, %v3038
      %v3040 = vrot.slane %v2774, 2
      %v3041 = vrot.slane %v2680, 2
      %v3042 = vsel %vm3014, %v3040, %v3041
      %v3043 = vrot.slane %v2792, 2
      %v3044 = vsel %vm3014, %v3041, %v3043
      %v3045 = vrot.slane %v2775, 2
      %v3046 = vrot.slane %v2683, 2
      %v3047 = vsel %vm3014, %v3045, %v3046
      %v3048 = vrot.slane %v2793, 2
      %v3049 = vsel %vm3014, %v3046, %v3048
      %v3050 = vrot.slane %v2776, 2
      %v3051 = vrot.slane %v2686, 2
      %v3052 = vsel %vm3014, %v3050, %v3051
      %v3053 = vrot.slane %v2794, 2
      %v3054 = vsel %vm3014, %v3051, %v3053
      %v3055 = vrot.slane %v2777, 2
      %v3056 = vrot.slane %v2689, 2
      %v3057 = vsel %vm3014, %v3055, %v3056
      %v3058 = vrot.slane %v2795, 2
      %v3059 = vsel %vm3014, %v3056, %v3058
      %v3060 = vrot.slane %v2778, 2
      %v3061 = vrot.slane %v2692, 2
      %v3062 = vsel %vm3014, %v3060, %v3061
      %v3063 = vrot.slane %v2796, 2
      %v3064 = vsel %vm3014, %v3061, %v3063
      %v3065 = vrot.slane %v2779, 2
      %v3066 = vrot.slane %v2695, 2
      %v3067 = vsel %vm3014, %v3065, %v3066
      %v3068 = vrot.slane %v2797, 2
      %v3069 = vsel %vm3014, %v3066, %v3068
      %v3070 = vrot.slane %v2780, 2
      %v3071 = vrot.slane %v2698, 2
      %v3072 = vsel %vm3014, %v3070, %v3071
      %v3073 = vrot.slane %v2798, 2
      %v3074 = vsel %vm3014, %v3071, %v3073
      %v3075 = vrot.slane %v2781, 2
      %v3076 = vrot.slane %v2701, 2
      %v3077 = vsel %vm3014, %v3075, %v3076
      %v3078 = vrot.slane %v2799, 2
      %v3079 = vsel %vm3014, %v3076, %v3078
      %v3080 = vrot.slane %v2782, 2
      %v3081 = vrot.slane %v2704, 2
      %v3082 = vsel %vm3014, %v3080, %v3081
      %v3083 = vrot.slane %v2800, 2
      %v3084 = vsel %vm3014, %v3081, %v3083
      %v3085 = vrot.slane %v2783, 2
      %v3086 = vrot.slane %v2707, 2
      %v3087 = vsel %vm3014, %v3085, %v3086
      %v3088 = vrot.slane %v2801, 2
      %v3089 = vsel %vm3014, %v3086, %v3088
      %v3090 = vrot.slane %v2784, 2
      %v3091 = vrot.slane %v2710, 2
      %v3092 = vsel %vm3014, %v3090, %v3091
      %v3093 = vrot.slane %v2802, 2
      %v3094 = vsel %vm3014, %v3091, %v3093
      %3095 = vrot.lane.b32.xlu0 %v3017, 8
      %v3096 = vpop.permute.xlu0 %3095
      %3097 = vrot.lane.b32.xlu0 %v3019, 8
      %v3098 = vpop.permute.xlu0 %3097
      %3099 = vrot.lane.b32.xlu0 %v3022, 8
      %v3100 = vpop.permute.xlu0 %3099
      %3101 = vrot.lane.b32.xlu0 %v3024, 8
      %v3102 = vpop.permute.xlu0 %3101
      %3103 = vrot.lane.b32.xlu0 %v3027, 8
      %v3104 = vpop.permute.xlu0 %3103
      %3105 = vrot.lane.b32.xlu0 %v3029, 8
      %v3106 = vpop.permute.xlu0 %3105
      %3107 = vrot.lane.b32.xlu0 %v3032, 8
      %v3108 = vpop.permute.xlu0 %3107
      %3109 = vrot.lane.b32.xlu0 %v3034, 8
      %v3110 = vpop.permute.xlu0 %3109
      %3111 = vrot.lane.b32.xlu0 %v3037, 8
      %v3112 = vpop.permute.xlu0 %3111
      %3113 = vrot.lane.b32.xlu0 %v3039, 8
      %v3114 = vpop.permute.xlu0 %3113
      %3115 = vrot.lane.b32.xlu0 %v3042, 8
      %v3116 = vpop.permute.xlu0 %3115
      %3117 = vrot.lane.b32.xlu0 %v3044, 8
      %v3118 = vpop.permute.xlu0 %3117
      %3119 = vrot.lane.b32.xlu0 %v3047, 8
      %v3120 = vpop.permute.xlu0 %3119
      %3121 = vrot.lane.b32.xlu0 %v3049, 8
      %v3122 = vpop.permute.xlu0 %3121
      %3123 = vrot.lane.b32.xlu0 %v3052, 8
      %v3124 = vpop.permute.xlu0 %3123
      %3125 = vrot.lane.b32.xlu0 %v3054, 8
      %v3126 = vpop.permute.xlu0 %3125
      %3127 = vrot.lane.b32.xlu0 %v3057, 8
      %v3128 = vpop.permute.xlu0 %3127
      %3129 = vrot.lane.b32.xlu0 %v3059, 8
      %v3130 = vpop.permute.xlu0 %3129
      %3131 = vrot.lane.b32.xlu0 %v3062, 8
      %v3132 = vpop.permute.xlu0 %3131
      %3133 = vrot.lane.b32.xlu0 %v3064, 8
      %v3134 = vpop.permute.xlu0 %3133
      %3135 = vrot.lane.b32.xlu0 %v3067, 8
      %v3136 = vpop.permute.xlu0 %3135
      %3137 = vrot.lane.b32.xlu0 %v3069, 8
      %v3138 = vpop.permute.xlu0 %3137
      %3139 = vrot.lane.b32.xlu0 %v3072, 8
      %v3140 = vpop.permute.xlu0 %3139
      %3141 = vrot.lane.b32.xlu0 %v3074, 8
      %v3142 = vpop.permute.xlu0 %3141
      %3143 = vrot.lane.b32.xlu0 %v3077, 8
      %v3144 = vpop.permute.xlu0 %3143
      %3145 = vrot.lane.b32.xlu0 %v3079, 8
      %v3146 = vpop.permute.xlu0 %3145
      %3147 = vrot.lane.b32.xlu0 %v3082, 8
      %v3148 = vpop.permute.xlu0 %3147
      %3149 = vrot.lane.b32.xlu0 %v3084, 8
      %v3150 = vpop.permute.xlu0 %3149
      %3151 = vrot.lane.b32.xlu0 %v3087, 8
      %v3152 = vpop.permute.xlu0 %3151
      %3153 = vrot.lane.b32.xlu0 %v3089, 8
      %v3154 = vpop.permute.xlu0 %3153
      %3155 = vrot.lane.b32.xlu0 %v3092, 8
      %v3156 = vpop.permute.xlu0 %3155
      %3157 = vrot.lane.b32.xlu0 %v3094, 8
      %v3158 = vpop.permute.xlu0 %3157
      %3192 = vrot.lane.b32.xlu0 %v2770, 12
      %v3193 = vpop.permute.xlu0 %3192
      %3194 = vrot.lane.b32.xlu0 %v2668, 12
      %v3195 = vpop.permute.xlu0 %3194
      %3196 = vrot.lane.b32.xlu0 %v2771, 12
      %v3197 = vpop.permute.xlu0 %3196
      %3198 = vrot.lane.b32.xlu0 %v2671, 12
      %v3199 = vpop.permute.xlu0 %3198
      %3200 = vrot.lane.b32.xlu0 %v2772, 12
      %v3201 = vpop.permute.xlu0 %3200
      %3202 = vrot.lane.b32.xlu0 %v2674, 12
      %v3203 = vpop.permute.xlu0 %3202
      %3204 = vrot.lane.b32.xlu0 %v2773, 12
      %v3205 = vpop.permute.xlu0 %3204
      %3206 = vrot.lane.b32.xlu0 %v2677, 12
      %v3207 = vpop.permute.xlu0 %3206
      %3208 = vrot.lane.b32.xlu0 %v2774, 12
      %v3209 = vpop.permute.xlu0 %3208
      %3210 = vrot.lane.b32.xlu0 %v2680, 12
      %v3211 = vpop.permute.xlu0 %3210
      %3212 = vrot.lane.b32.xlu0 %v2775, 12
      %v3213 = vpop.permute.xlu0 %3212
      %3214 = vrot.lane.b32.xlu0 %v2683, 12
      %v3215 = vpop.permute.xlu0 %3214
      %3216 = vrot.lane.b32.xlu0 %v2776, 12
      %v3217 = vpop.permute.xlu0 %3216
      %3218 = vrot.lane.b32.xlu0 %v2686, 12
      %v3219 = vpop.permute.xlu0 %3218
      %3220 = vrot.lane.b32.xlu0 %v2777, 12
      %v3221 = vpop.permute.xlu0 %3220
      %3222 = vrot.lane.b32.xlu0 %v2689, 12
      %v3223 = vpop.permute.xlu0 %3222
      %3224 = vrot.lane.b32.xlu0 %v2778, 12
      %v3225 = vpop.permute.xlu0 %3224
      %3226 = vrot.lane.b32.xlu0 %v2692, 12
      %v3227 = vpop.permute.xlu0 %3226
      %3228 = vrot.lane.b32.xlu0 %v2779, 12
      %v3229 = vpop.permute.xlu0 %3228
      %3230 = vrot.lane.b32.xlu0 %v2695, 12
      %v3231 = vpop.permute.xlu0 %3230
      %3232 = vrot.lane.b32.xlu0 %v2780, 12
      %v3233 = vpop.permute.xlu0 %3232
      %3234 = vrot.lane.b32.xlu0 %v2698, 12
      %v3235 = vpop.permute.xlu0 %3234
      %3236 = vrot.lane.b32.xlu0 %v2781, 12
      %v3237 = vpop.permute.xlu0 %3236
      %3238 = vrot.lane.b32.xlu0 %v2701, 12
      %v3239 = vpop.permute.xlu0 %3238
      %3240 = vrot.lane.b32.xlu0 %v2782, 12
      %v3241 = vpop.permute.xlu0 %3240
      %3242 = vrot.lane.b32.xlu0 %v2704, 12
      %v3243 = vpop.permute.xlu0 %3242
      %3244 = vrot.lane.b32.xlu0 %v2783, 12
      %v3245 = vpop.permute.xlu0 %3244
      %3246 = vrot.lane.b32.xlu0 %v2707, 12
      %v3247 = vpop.permute.xlu0 %3246
      %3248 = vrot.lane.b32.xlu0 %v2784, 12
      %v3249 = vpop.permute.xlu0 %3248
      %3250 = vrot.lane.b32.xlu0 %v2710, 12
      %v3251 = vpop.permute.xlu0 %3250
      %3252 = vrot.lane.b32.xlu0 %v2785, 12
      %v3253 = vpop.permute.xlu0 %3252
      %3254 = vrot.lane.b32.xlu0 %v2713, 12
      %v3255 = vpop.permute.xlu0 %3254
      %v3289 = vrot.slane %v2785, 1
      %v3290 = vrot.slane %v2713, 1
      %v3291 = vsel %vm2837, %v3289, %v3290
      %v3292 = vrot.slane %v2803, 1
      %v3293 = vsel %vm2837, %v3290, %v3292
      %3294 = vrot.lane.b32.xlu0 %v2845, 16
      %v3295 = vpop.permute.xlu0 %3294
      %3296 = vrot.lane.b32.xlu0 %v2847, 16
      %v3297 = vpop.permute.xlu0 %3296
      %3298 = vrot.lane.b32.xlu0 %v2850, 16
      %v3299 = vpop.permute.xlu0 %3298
      %3300 = vrot.lane.b32.xlu0 %v2852, 16
      %v3301 = vpop.permute.xlu0 %3300
      %3302 = vrot.lane.b32.xlu0 %v2855, 16
      %v3303 = vpop.permute.xlu0 %3302
      %3304 = vrot.lane.b32.xlu0 %v2857, 16
      %v3305 = vpop.permute.xlu0 %3304
      %3306 = vrot.lane.b32.xlu0 %v2860, 16
      %v3307 = vpop.permute.xlu0 %3306
      %3308 = vrot.lane.b32.xlu0 %v2862, 16
      %v3309 = vpop.permute.xlu0 %3308
      %3310 = vrot.lane.b32.xlu0 %v2865, 16
      %v3311 = vpop.permute.xlu0 %3310
      %3312 = vrot.lane.b32.xlu0 %v2867, 16
      %v3313 = vpop.permute.xlu0 %3312
      %3314 = vrot.lane.b32.xlu0 %v2870, 16
      %v3315 = vpop.permute.xlu0 %3314
      %3316 = vrot.lane.b32.xlu0 %v2872, 16
      %v3317 = vpop.permute.xlu0 %3316
      %3318 = vrot.lane.b32.xlu0 %v2875, 16
      %v3319 = vpop.permute.xlu0 %3318
      %3320 = vrot.lane.b32.xlu0 %v2877, 16
      %v3321 = vpop.permute.xlu0 %3320
      %3322 = vrot.lane.b32.xlu0 %v2880, 16
      %v3323 = vpop.permute.xlu0 %3322
      %3324 = vrot.lane.b32.xlu0 %v2882, 16
      %v3325 = vpop.permute.xlu0 %3324
      %3326 = vrot.lane.b32.xlu0 %v2885, 16
      %v3327 = vpop.permute.xlu0 %3326
      %3328 = vrot.lane.b32.xlu0 %v2887, 16
      %v3329 = vpop.permute.xlu0 %3328
      %3330 = vrot.lane.b32.xlu0 %v2890, 16
      %v3331 = vpop.permute.xlu0 %3330
      %3332 = vrot.lane.b32.xlu0 %v2892, 16
      %v3333 = vpop.permute.xlu0 %3332
      %3334 = vrot.lane.b32.xlu0 %v2895, 16
      %v3335 = vpop.permute.xlu0 %3334
      %3336 = vrot.lane.b32.xlu0 %v2897, 16
      %v3337 = vpop.permute.xlu0 %3336
      %3338 = vrot.lane.b32.xlu0 %v2900, 16
      %v3339 = vpop.permute.xlu0 %3338
      %3340 = vrot.lane.b32.xlu0 %v2902, 16
      %v3341 = vpop.permute.xlu0 %3340
      %3342 = vrot.lane.b32.xlu0 %v2905, 16
      %v3343 = vpop.permute.xlu0 %3342
      %3344 = vrot.lane.b32.xlu0 %v2907, 16
      %v3345 = vpop.permute.xlu0 %3344
      %3346 = vrot.lane.b32.xlu0 %v2910, 16
      %v3347 = vpop.permute.xlu0 %3346
      %3348 = vrot.lane.b32.xlu0 %v2912, 16
      %v3349 = vpop.permute.xlu0 %3348
      %3350 = vrot.lane.b32.xlu0 %v2915, 16
      %v3351 = vpop.permute.xlu0 %3350
      %3352 = vrot.lane.b32.xlu0 %v2917, 16
      %v3353 = vpop.permute.xlu0 %3352
      %3354 = vrot.lane.b32.xlu0 %v3291, 16
      %v3355 = vpop.permute.xlu0 %3354
      %3356 = vrot.lane.b32.xlu0 %v3293, 16
      %v3357 = vpop.permute.xlu0 %3356
      %v3390 = vrot.slane %v2785, 2
      %v3391 = vrot.slane %v2713, 2
      %v3392 = vsel %vm3014, %v3390, %v3391
      %v3393 = vrot.slane %v2803, 2
      %v3394 = vsel %vm3014, %v3391, %v3393
      %3395 = vrot.lane.b32.xlu0 %v3022, 20
      %v3396 = vpop.permute.xlu0 %3395
      %3397 = vrot.lane.b32.xlu0 %v3024, 20
      %v3398 = vpop.permute.xlu0 %3397
      %3399 = vrot.lane.b32.xlu0 %v3027, 20
      %v3400 = vpop.permute.xlu0 %3399
      %3401 = vrot.lane.b32.xlu0 %v3029, 20
      %v3402 = vpop.permute.xlu0 %3401
      %3403 = vrot.lane.b32.xlu0 %v3032, 20
      %v3404 = vpop.permute.xlu0 %3403
      %3405 = vrot.lane.b32.xlu0 %v3034, 20
      %v3406 = vpop.permute.xlu0 %3405
      %3407 = vrot.lane.b32.xlu0 %v3037, 20
      %v3408 = vpop.permute.xlu0 %3407
      %3409 = vrot.lane.b32.xlu0 %v3039, 20
      %v3410 = vpop.permute.xlu0 %3409
      %3411 = vrot.lane.b32.xlu0 %v3042, 20
      %v3412 = vpop.permute.xlu0 %3411
      %3413 = vrot.lane.b32.xlu0 %v3044, 20
      %v3414 = vpop.permute.xlu0 %3413
      %3415 = vrot.lane.b32.xlu0 %v3047, 20
      %v3416 = vpop.permute.xlu0 %3415
      %3417 = vrot.lane.b32.xlu0 %v3049, 20
      %v3418 = vpop.permute.xlu0 %3417
      %3419 = vrot.lane.b32.xlu0 %v3052, 20
      %v3420 = vpop.permute.xlu0 %3419
      %3421 = vrot.lane.b32.xlu0 %v3054, 20
      %v3422 = vpop.permute.xlu0 %3421
      %3423 = vrot.lane.b32.xlu0 %v3057, 20
      %v3424 = vpop.permute.xlu0 %3423
      %3425 = vrot.lane.b32.xlu0 %v3059, 20
      %v3426 = vpop.permute.xlu0 %3425
      %3427 = vrot.lane.b32.xlu0 %v3062, 20
      %v3428 = vpop.permute.xlu0 %3427
      %3429 = vrot.lane.b32.xlu0 %v3064, 20
      %v3430 = vpop.permute.xlu0 %3429
      %3431 = vrot.lane.b32.xlu0 %v3067, 20
      %v3432 = vpop.permute.xlu0 %3431
      %3433 = vrot.lane.b32.xlu0 %v3069, 20
      %v3434 = vpop.permute.xlu0 %3433
      %3435 = vrot.lane.b32.xlu0 %v3072, 20
      %v3436 = vpop.permute.xlu0 %3435
      %3437 = vrot.lane.b32.xlu0 %v3074, 20
      %v3438 = vpop.permute.xlu0 %3437
      %3439 = vrot.lane.b32.xlu0 %v3077, 20
      %v3440 = vpop.permute.xlu0 %3439
      %3441 = vrot.lane.b32.xlu0 %v3079, 20
      %v3442 = vpop.permute.xlu0 %3441
      %3443 = vrot.lane.b32.xlu0 %v3082, 20
      %v3444 = vpop.permute.xlu0 %3443
      %3445 = vrot.lane.b32.xlu0 %v3084, 20
      %v3446 = vpop.permute.xlu0 %3445
      %3447 = vrot.lane.b32.xlu0 %v3087, 20
      %v3448 = vpop.permute.xlu0 %3447
      %3449 = vrot.lane.b32.xlu0 %v3089, 20
      %v3450 = vpop.permute.xlu0 %3449
      %3451 = vrot.lane.b32.xlu0 %v3092, 20
      %v3452 = vpop.permute.xlu0 %3451
      %3453 = vrot.lane.b32.xlu0 %v3094, 20
      %v3454 = vpop.permute.xlu0 %3453
      %3455 = vrot.lane.b32.xlu0 %v3392, 20
      %v3456 = vpop.permute.xlu0 %3455
      %3457 = vrot.lane.b32.xlu0 %v3394, 20
      %v3458 = vpop.permute.xlu0 %3457
      %3492 = vrot.lane.b32.xlu0 %v2771, 24
      %v3493 = vpop.permute.xlu0 %3492
      %3494 = vrot.lane.b32.xlu0 %v2671, 24
      %v3495 = vpop.permute.xlu0 %3494
      %3496 = vrot.lane.b32.xlu0 %v2772, 24
      %v3497 = vpop.permute.xlu0 %3496
      %3498 = vrot.lane.b32.xlu0 %v2674, 24
      %v3499 = vpop.permute.xlu0 %3498
      %3500 = vrot.lane.b32.xlu0 %v2773, 24
      %v3501 = vpop.permute.xlu0 %3500
      %3502 = vrot.lane.b32.xlu0 %v2677, 24
      %v3503 = vpop.permute.xlu0 %3502
      %3504 = vrot.lane.b32.xlu0 %v2774, 24
      %v3505 = vpop.permute.xlu0 %3504
      %3506 = vrot.lane.b32.xlu0 %v2680, 24
      %v3507 = vpop.permute.xlu0 %3506
      %3508 = vrot.lane.b32.xlu0 %v2775, 24
      %v3509 = vpop.permute.xlu0 %3508
      %3510 = vrot.lane.b32.xlu0 %v2683, 24
      %v3511 = vpop.permute.xlu0 %3510
      %3512 = vrot.lane.b32.xlu0 %v2776, 24
      %v3513 = vpop.permute.xlu0 %3512
      %3514 = vrot.lane.b32.xlu0 %v2686, 24
      %v3515 = vpop.permute.xlu0 %3514
      %3516 = vrot.lane.b32.xlu0 %v2777, 24
      %v3517 = vpop.permute.xlu0 %3516
      %3518 = vrot.lane.b32.xlu0 %v2689, 24
      %v3519 = vpop.permute.xlu0 %3518
      %3520 = vrot.lane.b32.xlu0 %v2778, 24
      %v3521 = vpop.permute.xlu0 %3520
      %3522 = vrot.lane.b32.xlu0 %v2692, 24
      %v3523 = vpop.permute.xlu0 %3522
      %3524 = vrot.lane.b32.xlu0 %v2779, 24
      %v3525 = vpop.permute.xlu0 %3524
      %3526 = vrot.lane.b32.xlu0 %v2695, 24
      %v3527 = vpop.permute.xlu0 %3526
      %3528 = vrot.lane.b32.xlu0 %v2780, 24
      %v3529 = vpop.permute.xlu0 %3528
      %3530 = vrot.lane.b32.xlu0 %v2698, 24
      %v3531 = vpop.permute.xlu0 %3530
      %3532 = vrot.lane.b32.xlu0 %v2781, 24
      %v3533 = vpop.permute.xlu0 %3532
      %3534 = vrot.lane.b32.xlu0 %v2701, 24
      %v3535 = vpop.permute.xlu0 %3534
      %3536 = vrot.lane.b32.xlu0 %v2782, 24
      %v3537 = vpop.permute.xlu0 %3536
      %3538 = vrot.lane.b32.xlu0 %v2704, 24
      %v3539 = vpop.permute.xlu0 %3538
      %3540 = vrot.lane.b32.xlu0 %v2783, 24
      %v3541 = vpop.permute.xlu0 %3540
      %3542 = vrot.lane.b32.xlu0 %v2707, 24
      %v3543 = vpop.permute.xlu0 %3542
      %3544 = vrot.lane.b32.xlu0 %v2784, 24
      %v3545 = vpop.permute.xlu0 %3544
      %3546 = vrot.lane.b32.xlu0 %v2710, 24
      %v3547 = vpop.permute.xlu0 %3546
      %3548 = vrot.lane.b32.xlu0 %v2785, 24
      %v3549 = vpop.permute.xlu0 %3548
      %3550 = vrot.lane.b32.xlu0 %v2713, 24
      %v3551 = vpop.permute.xlu0 %3550
      %3552 = vrot.lane.b32.xlu0 %v2786, 24
      %v3553 = vpop.permute.xlu0 %3552
      %3554 = vrot.lane.b32.xlu0 %v2716, 24
      %v3555 = vpop.permute.xlu0 %3554
      %v3589 = vrot.slane %v2786, 1
      %v3590 = vrot.slane %v2716, 1
      %v3591 = vsel %vm2837, %v3589, %v3590
      %v3592 = vrot.slane %v2804, 1
      %v3593 = vsel %vm2837, %v3590, %v3592
      %3594 = vrot.lane.b32.xlu0 %v2850, 28
      %v3595 = vpop.permute.xlu0 %3594
      %3596 = vrot.lane.b32.xlu0 %v2852, 28
      %v3597 = vpop.permute.xlu0 %3596
      %3598 = vrot.lane.b32.xlu0 %v2855, 28
      %v3599 = vpop.permute.xlu0 %3598
      %3600 = vrot.lane.b32.xlu0 %v2857, 28
      %v3601 = vpop.permute.xlu0 %3600
      %3602 = vrot.lane.b32.xlu0 %v2860, 28
      %v3603 = vpop.permute.xlu0 %3602
      %3604 = vrot.lane.b32.xlu0 %v2862, 28
      %v3605 = vpop.permute.xlu0 %3604
      %3606 = vrot.lane.b32.xlu0 %v2865, 28
      %v3607 = vpop.permute.xlu0 %3606
      %3608 = vrot.lane.b32.xlu0 %v2867, 28
      %v3609 = vpop.permute.xlu0 %3608
      %3610 = vrot.lane.b32.xlu0 %v2870, 28
      %v3611 = vpop.permute.xlu0 %3610
      %3612 = vrot.lane.b32.xlu0 %v2872, 28
      %v3613 = vpop.permute.xlu0 %3612
      %3614 = vrot.lane.b32.xlu0 %v2875, 28
      %v3615 = vpop.permute.xlu0 %3614
      %3616 = vrot.lane.b32.xlu0 %v2877, 28
      %v3617 = vpop.permute.xlu0 %3616
      %3618 = vrot.lane.b32.xlu0 %v2880, 28
      %v3619 = vpop.permute.xlu0 %3618
      %3620 = vrot.lane.b32.xlu0 %v2882, 28
      %v3621 = vpop.permute.xlu0 %3620
      %3622 = vrot.lane.b32.xlu0 %v2885, 28
      %v3623 = vpop.permute.xlu0 %3622
      %3624 = vrot.lane.b32.xlu0 %v2887, 28
      %v3625 = vpop.permute.xlu0 %3624
      %3626 = vrot.lane.b32.xlu0 %v2890, 28
      %v3627 = vpop.permute.xlu0 %3626
      %3628 = vrot.lane.b32.xlu0 %v2892, 28
      %v3629 = vpop.permute.xlu0 %3628
      %3630 = vrot.lane.b32.xlu0 %v2895, 28
      %v3631 = vpop.permute.xlu0 %3630
      %3632 = vrot.lane.b32.xlu0 %v2897, 28
      %v3633 = vpop.permute.xlu0 %3632
      %3634 = vrot.lane.b32.xlu0 %v2900, 28
      %v3635 = vpop.permute.xlu0 %3634
      %3636 = vrot.lane.b32.xlu0 %v2902, 28
      %v3637 = vpop.permute.xlu0 %3636
      %3638 = vrot.lane.b32.xlu0 %v2905, 28
      %v3639 = vpop.permute.xlu0 %3638
      %3640 = vrot.lane.b32.xlu0 %v2907, 28
      %v3641 = vpop.permute.xlu0 %3640
      %3642 = vrot.lane.b32.xlu0 %v2910, 28
      %v3643 = vpop.permute.xlu0 %3642
      %3644 = vrot.lane.b32.xlu0 %v2912, 28
      %v3645 = vpop.permute.xlu0 %3644
      %3646 = vrot.lane.b32.xlu0 %v2915, 28
      %v3647 = vpop.permute.xlu0 %3646
      %3648 = vrot.lane.b32.xlu0 %v2917, 28
      %v3649 = vpop.permute.xlu0 %3648
      %3650 = vrot.lane.b32.xlu0 %v3291, 28
      %v3651 = vpop.permute.xlu0 %3650
      %3652 = vrot.lane.b32.xlu0 %v3293, 28
      %v3653 = vpop.permute.xlu0 %3652
      %3654 = vrot.lane.b32.xlu0 %v3591, 28
      %v3655 = vpop.permute.xlu0 %3654
      %3656 = vrot.lane.b32.xlu0 %v3593, 28
      %v3657 = vpop.permute.xlu0 %3656
      %v3690 = vrot.slane %v2786, 2
      %v3691 = vrot.slane %v2716, 2
      %v3692 = vsel %vm3014, %v3690, %v3691
      %v3693 = vrot.slane %v2804, 2
      %v3694 = vsel %vm3014, %v3691, %v3693
      %3695 = vrot.lane.b32.xlu0 %v3027, 32
      %v3696 = vpop.permute.xlu0 %3695
      %3697 = vrot.lane.b32.xlu0 %v3029, 32
      %v3698 = vpop.permute.xlu0 %3697
      %3699 = vrot.lane.b32.xlu0 %v3032, 32
      %v3700 = vpop.permute.xlu0 %3699
      %3701 = vrot.lane.b32.xlu0 %v3034, 32
      %v3702 = vpop.permute.xlu0 %3701
      %3703 = vrot.lane.b32.xlu0 %v3037, 32
      %v3704 = vpop.permute.xlu0 %3703
      %3705 = vrot.lane.b32.xlu0 %v3039, 32
      %v3706 = vpop.permute.xlu0 %3705
      %3707 = vrot.lane.b32.xlu0 %v3042, 32
      %v3708 = vpop.permute.xlu0 %3707
      %3709 = vrot.lane.b32.xlu0 %v3044, 32
      %v3710 = vpop.permute.xlu0 %3709
      %3711 = vrot.lane.b32.xlu0 %v3047, 32
      %v3712 = vpop.permute.xlu0 %3711
      %3713 = vrot.lane.b32.xlu0 %v3049, 32
      %v3714 = vpop.permute.xlu0 %3713
      %3715 = vrot.lane.b32.xlu0 %v3052, 32
      %v3716 = vpop.permute.xlu0 %3715
      %3717 = vrot.lane.b32.xlu0 %v3054, 32
      %v3718 = vpop.permute.xlu0 %3717
      %3719 = vrot.lane.b32.xlu0 %v3057, 32
      %v3720 = vpop.permute.xlu0 %3719
      %3721 = vrot.lane.b32.xlu0 %v3059, 32
      %v3722 = vpop.permute.xlu0 %3721
      %3723 = vrot.lane.b32.xlu0 %v3062, 32
      %v3724 = vpop.permute.xlu0 %3723
      %3725 = vrot.lane.b32.xlu0 %v3064, 32
      %v3726 = vpop.permute.xlu0 %3725
      %3727 = vrot.lane.b32.xlu0 %v3067, 32
      %v3728 = vpop.permute.xlu0 %3727
      %3729 = vrot.lane.b32.xlu0 %v3069, 32
      %v3730 = vpop.permute.xlu0 %3729
      %3731 = vrot.lane.b32.xlu0 %v3072, 32
      %v3732 = vpop.permute.xlu0 %3731
      %3733 = vrot.lane.b32.xlu0 %v3074, 32
      %v3734 = vpop.permute.xlu0 %3733
      %3735 = vrot.lane.b32.xlu0 %v3077, 32
      %v3736 = vpop.permute.xlu0 %3735
      %3737 = vrot.lane.b32.xlu0 %v3079, 32
      %v3738 = vpop.permute.xlu0 %3737
      %3739 = vrot.lane.b32.xlu0 %v3082, 32
      %v3740 = vpop.permute.xlu0 %3739
      %3741 = vrot.lane.b32.xlu0 %v3084, 32
      %v3742 = vpop.permute.xlu0 %3741
      %3743 = vrot.lane.b32.xlu0 %v3087, 32
      %v3744 = vpop.permute.xlu0 %3743
      %3745 = vrot.lane.b32.xlu0 %v3089, 32
      %v3746 = vpop.permute.xlu0 %3745
      %3747 = vrot.lane.b32.xlu0 %v3092, 32
      %v3748 = vpop.permute.xlu0 %3747
      %3749 = vrot.lane.b32.xlu0 %v3094, 32
      %v3750 = vpop.permute.xlu0 %3749
      %3751 = vrot.lane.b32.xlu0 %v3392, 32
      %v3752 = vpop.permute.xlu0 %3751
      %3753 = vrot.lane.b32.xlu0 %v3394, 32
      %v3754 = vpop.permute.xlu0 %3753
      %3755 = vrot.lane.b32.xlu0 %v3692, 32
      %v3756 = vpop.permute.xlu0 %3755
      %3757 = vrot.lane.b32.xlu0 %v3694, 32
      %v3758 = vpop.permute.xlu0 %3757
      %v3791 = vsel %vm1742, %v2769, %v2919
      %v3792 = vsel %vm1742, %v2665, %v2921
      %v3793 = vsel %vm1742, %v2770, %v2923
      %v3794 = vsel %vm1742, %v2668, %v2925
      %v3795 = vsel %vm1742, %v2771, %v2927
      %v3796 = vsel %vm1742, %v2671, %v2929
      %v3797 = vsel %vm1742, %v2772, %v2931
      %v3798 = vsel %vm1742, %v2674, %v2933
      %v3799 = vsel %vm1742, %v2773, %v2935
      %v3800 = vsel %vm1742, %v2677, %v2937
      %v3801 = vsel %vm1742, %v2774, %v2939
      %v3802 = vsel %vm1742, %v2680, %v2941
      %v3803 = vsel %vm1742, %v2775, %v2943
      %v3804 = vsel %vm1742, %v2683, %v2945
      %v3805 = vsel %vm1742, %v2776, %v2947
      %v3806 = vsel %vm1742, %v2686, %v2949
      %v3807 = vsel %vm1742, %v2777, %v2951
      %v3808 = vsel %vm1742, %v2689, %v2953
      %v3809 = vsel %vm1742, %v2778, %v2955
      %v3810 = vsel %vm1742, %v2692, %v2957
      %v3811 = vsel %vm1742, %v2779, %v2959
      %v3812 = vsel %vm1742, %v2695, %v2961
      %v3813 = vsel %vm1742, %v2780, %v2963
      %v3814 = vsel %vm1742, %v2698, %v2965
      %v3815 = vsel %vm1742, %v2781, %v2967
      %v3816 = vsel %vm1742, %v2701, %v2969
      %v3817 = vsel %vm1742, %v2782, %v2971
      %v3818 = vsel %vm1742, %v2704, %v2973
      %v3819 = vsel %vm1742, %v2783, %v2975
      %v3820 = vsel %vm1742, %v2707, %v2977
      %v3821 = vsel %vm1742, %v2784, %v2979
      %v3822 = vsel %vm1742, %v2710, %v2981
      %v3823 = vsel %vm1779, %v3791, %v3096
      %v3824 = vsel %vm1779, %v3792, %v3098
      %v3825 = vsel %vm1779, %v3793, %v3100
      %v3826 = vsel %vm1779, %v3794, %v3102
      %v3827 = vsel %vm1779, %v3795, %v3104
      %v3828 = vsel %vm1779, %v3796, %v3106
      %v3829 = vsel %vm1779, %v3797, %v3108
      %v3830 = vsel %vm1779, %v3798, %v3110
      %v3831 = vsel %vm1779, %v3799, %v3112
      %v3832 = vsel %vm1779, %v3800, %v3114
      %v3833 = vsel %vm1779, %v3801, %v3116
      %v3834 = vsel %vm1779, %v3802, %v3118
      %v3835 = vsel %vm1779, %v3803, %v3120
      %v3836 = vsel %vm1779, %v3804, %v3122
      %v3837 = vsel %vm1779, %v3805, %v3124
      %v3838 = vsel %vm1779, %v3806, %v3126
      %v3839 = vsel %vm1779, %v3807, %v3128
      %v3840 = vsel %vm1779, %v3808, %v3130
      %v3841 = vsel %vm1779, %v3809, %v3132
      %v3842 = vsel %vm1779, %v3810, %v3134
      %v3843 = vsel %vm1779, %v3811, %v3136
      %v3844 = vsel %vm1779, %v3812, %v3138
      %v3845 = vsel %vm1779, %v3813, %v3140
      %v3846 = vsel %vm1779, %v3814, %v3142
      %v3847 = vsel %vm1779, %v3815, %v3144
      %v3848 = vsel %vm1779, %v3816, %v3146
      %v3849 = vsel %vm1779, %v3817, %v3148
      %v3850 = vsel %vm1779, %v3818, %v3150
      %v3851 = vsel %vm1779, %v3819, %v3152
      %v3852 = vsel %vm1779, %v3820, %v3154
      %v3853 = vsel %vm1779, %v3821, %v3156
      %v3854 = vsel %vm1779, %v3822, %v3158
      %v3855 = vsel %vm1816, %v3823, %v3193
      %v3856 = vsel %vm1816, %v3824, %v3195
      %v3857 = vsel %vm1816, %v3825, %v3197
      %v3858 = vsel %vm1816, %v3826, %v3199
      %v3859 = vsel %vm1816, %v3827, %v3201
      %v3860 = vsel %vm1816, %v3828, %v3203
      %v3861 = vsel %vm1816, %v3829, %v3205
      %v3862 = vsel %vm1816, %v3830, %v3207
      %v3863 = vsel %vm1816, %v3831, %v3209
      %v3864 = vsel %vm1816, %v3832, %v3211
      %v3865 = vsel %vm1816, %v3833, %v3213
      %v3866 = vsel %vm1816, %v3834, %v3215
      %v3867 = vsel %vm1816, %v3835, %v3217
      %v3868 = vsel %vm1816, %v3836, %v3219
      %v3869 = vsel %vm1816, %v3837, %v3221
      %v3870 = vsel %vm1816, %v3838, %v3223
      %v3871 = vsel %vm1816, %v3839, %v3225
      %v3872 = vsel %vm1816, %v3840, %v3227
      %v3873 = vsel %vm1816, %v3841, %v3229
      %v3874 = vsel %vm1816, %v3842, %v3231
      %v3875 = vsel %vm1816, %v3843, %v3233
      %v3876 = vsel %vm1816, %v3844, %v3235
      %v3877 = vsel %vm1816, %v3845, %v3237
      %v3878 = vsel %vm1816, %v3846, %v3239
      %v3879 = vsel %vm1816, %v3847, %v3241
      %v3880 = vsel %vm1816, %v3848, %v3243
      %v3881 = vsel %vm1816, %v3849, %v3245
      %v3882 = vsel %vm1816, %v3850, %v3247
      %v3883 = vsel %vm1816, %v3851, %v3249
      %v3884 = vsel %vm1816, %v3852, %v3251
      %v3885 = vsel %vm1816, %v3853, %v3253
      %v3886 = vsel %vm1816, %v3854, %v3255
      %v3887 = vsel %vm1853, %v3855, %v3295
      %v3888 = vsel %vm1853, %v3856, %v3297
      %v3889 = vsel %vm1853, %v3857, %v3299
      %v3890 = vsel %vm1853, %v3858, %v3301
      %v3891 = vsel %vm1853, %v3859, %v3303
      %v3892 = vsel %vm1853, %v3860, %v3305
      %v3893 = vsel %vm1853, %v3861, %v3307
      %v3894 = vsel %vm1853, %v3862, %v3309
      %v3895 = vsel %vm1853, %v3863, %v3311
      %v3896 = vsel %vm1853, %v3864, %v3313
      %v3897 = vsel %vm1853, %v3865, %v3315
      %v3898 = vsel %vm1853, %v3866, %v3317
      %v3899 = vsel %vm1853, %v3867, %v3319
      %v3900 = vsel %vm1853, %v3868, %v3321
      %v3901 = vsel %vm1853, %v3869, %v3323
      %v3902 = vsel %vm1853, %v3870, %v3325
      %v3903 = vsel %vm1853, %v3871, %v3327
      %v3904 = vsel %vm1853, %v3872, %v3329
      %v3905 = vsel %vm1853, %v3873, %v3331
      %v3906 = vsel %vm1853, %v3874, %v3333
      %v3907 = vsel %vm1853, %v3875, %v3335
      %v3908 = vsel %vm1853, %v3876, %v3337
      %v3909 = vsel %vm1853, %v3877, %v3339
      %v3910 = vsel %vm1853, %v3878, %v3341
      %v3911 = vsel %vm1853, %v3879, %v3343
      %v3912 = vsel %vm1853, %v3880, %v3345
      %v3913 = vsel %vm1853, %v3881, %v3347
      %v3914 = vsel %vm1853, %v3882, %v3349
      %v3915 = vsel %vm1853, %v3883, %v3351
      %v3916 = vsel %vm1853, %v3884, %v3353
      %v3917 = vsel %vm1853, %v3885, %v3355
      %v3918 = vsel %vm1853, %v3886, %v3357
      %v3919 = vsel %vm1890, %v3887, %v3396
      %v3920 = vsel %vm1890, %v3888, %v3398
      %v3921 = vsel %vm1890, %v3889, %v3400
      %v3922 = vsel %vm1890, %v3890, %v3402
      %v3923 = vsel %vm1890, %v3891, %v3404
      %v3924 = vsel %vm1890, %v3892, %v3406
      %v3925 = vsel %vm1890, %v3893, %v3408
      %v3926 = vsel %vm1890, %v3894, %v3410
      %v3927 = vsel %vm1890, %v3895, %v3412
      %v3928 = vsel %vm1890, %v3896, %v3414
      %v3929 = vsel %vm1890, %v3897, %v3416
      %v3930 = vsel %vm1890, %v3898, %v3418
      %v3931 = vsel %vm1890, %v3899, %v3420
      %v3932 = vsel %vm1890, %v3900, %v3422
      %v3933 = vsel %vm1890, %v3901, %v3424
      %v3934 = vsel %vm1890, %v3902, %v3426
      %v3935 = vsel %vm1890, %v3903, %v3428
      %v3936 = vsel %vm1890, %v3904, %v3430
      %v3937 = vsel %vm1890, %v3905, %v3432
      %v3938 = vsel %vm1890, %v3906, %v3434
      %v3939 = vsel %vm1890, %v3907, %v3436
      %v3940 = vsel %vm1890, %v3908, %v3438
      %v3941 = vsel %vm1890, %v3909, %v3440
      %v3942 = vsel %vm1890, %v3910, %v3442
      %v3943 = vsel %vm1890, %v3911, %v3444
      %v3944 = vsel %vm1890, %v3912, %v3446
      %v3945 = vsel %vm1890, %v3913, %v3448
      %v3946 = vsel %vm1890, %v3914, %v3450
      %v3947 = vsel %vm1890, %v3915, %v3452
      %v3948 = vsel %vm1890, %v3916, %v3454
      %v3949 = vsel %vm1890, %v3917, %v3456
      %v3950 = vsel %vm1890, %v3918, %v3458
      %v3951 = vsel %vm1927, %v3919, %v3493
      %v3952 = vsel %vm1927, %v3920, %v3495
      %v3953 = vsel %vm1927, %v3921, %v3497
      %v3954 = vsel %vm1927, %v3922, %v3499
      %v3955 = vsel %vm1927, %v3923, %v3501
      %v3956 = vsel %vm1927, %v3924, %v3503
      %v3957 = vsel %vm1927, %v3925, %v3505
      %v3958 = vsel %vm1927, %v3926, %v3507
      %v3959 = vsel %vm1927, %v3927, %v3509
      %v3960 = vsel %vm1927, %v3928, %v3511
      %v3961 = vsel %vm1927, %v3929, %v3513
      %v3962 = vsel %vm1927, %v3930, %v3515
      %v3963 = vsel %vm1927, %v3931, %v3517
      %v3964 = vsel %vm1927, %v3932, %v3519
      %v3965 = vsel %vm1927, %v3933, %v3521
      %v3966 = vsel %vm1927, %v3934, %v3523
      %v3967 = vsel %vm1927, %v3935, %v3525
      %v3968 = vsel %vm1927, %v3936, %v3527
      %v3969 = vsel %vm1927, %v3937, %v3529
      %v3970 = vsel %vm1927, %v3938, %v3531
      %v3971 = vsel %vm1927, %v3939, %v3533
      %v3972 = vsel %vm1927, %v3940, %v3535
      %v3973 = vsel %vm1927, %v3941, %v3537
      %v3974 = vsel %vm1927, %v3942, %v3539
      %v3975 = vsel %vm1927, %v3943, %v3541
      %v3976 = vsel %vm1927, %v3944, %v3543
      %v3977 = vsel %vm1927, %v3945, %v3545
      %v3978 = vsel %vm1927, %v3946, %v3547
      %v3979 = vsel %vm1927, %v3947, %v3549
      %v3980 = vsel %vm1927, %v3948, %v3551
      %v3981 = vsel %vm1927, %v3949, %v3553
      %v3982 = vsel %vm1927, %v3950, %v3555
      %v3983 = vsel %vm1964, %v3951, %v3595
      %v3984 = vsel %vm1964, %v3952, %v3597
      %v3985 = vsel %vm1964, %v3953, %v3599
      %v3986 = vsel %vm1964, %v3954, %v3601
      %v3987 = vsel %vm1964, %v3955, %v3603
      %v3988 = vsel %vm1964, %v3956, %v3605
      %v3989 = vsel %vm1964, %v3957, %v3607
      %v3990 = vsel %vm1964, %v3958, %v3609
      %v3991 = vsel %vm1964, %v3959, %v3611
      %v3992 = vsel %vm1964, %v3960, %v3613
      %v3993 = vsel %vm1964, %v3961, %v3615
      %v3994 = vsel %vm1964, %v3962, %v3617
      %v3995 = vsel %vm1964, %v3963, %v3619
      %v3996 = vsel %vm1964, %v3964, %v3621
      %v3997 = vsel %vm1964, %v3965, %v3623
      %v3998 = vsel %vm1964, %v3966, %v3625
      %v3999 = vsel %vm1964, %v3967, %v3627
      %v4000 = vsel %vm1964, %v3968, %v3629
      %v4001 = vsel %vm1964, %v3969, %v3631
      %v4002 = vsel %vm1964, %v3970, %v3633
      %v4003 = vsel %vm1964, %v3971, %v3635
      %v4004 = vsel %vm1964, %v3972, %v3637
      %v4005 = vsel %vm1964, %v3973, %v3639
      %v4006 = vsel %vm1964, %v3974, %v3641
      %v4007 = vsel %vm1964, %v3975, %v3643
      %v4008 = vsel %vm1964, %v3976, %v3645
      %v4009 = vsel %vm1964, %v3977, %v3647
      %v4010 = vsel %vm1964, %v3978, %v3649
      %v4011 = vsel %vm1964, %v3979, %v3651
      %v4012 = vsel %vm1964, %v3980, %v3653
      %v4013 = vsel %vm1964, %v3981, %v3655
      %v4014 = vsel %vm1964, %v3982, %v3657
      %v4015 = vsel %vm2001, %v3983, %v3696
      %v4016 = vsel %vm2001, %v3984, %v3698
      %v4017 = vsel %vm2001, %v3985, %v3700
      %v4018 = vsel %vm2001, %v3986, %v3702
      %v4019 = vsel %vm2001, %v3987, %v3704
      %v4020 = vsel %vm2001, %v3988, %v3706
      %v4021 = vsel %vm2001, %v3989, %v3708
      %v4022 = vsel %vm2001, %v3990, %v3710
      %v4023 = vsel %vm2001, %v3991, %v3712
      %v4024 = vsel %vm2001, %v3992, %v3714
      %v4025 = vsel %vm2001, %v3993, %v3716
      %v4026 = vsel %vm2001, %v3994, %v3718
      %v4027 = vsel %vm2001, %v3995, %v3720
      %v4028 = vsel %vm2001, %v3996, %v3722
      %v4029 = vsel %vm2001, %v3997, %v3724
      %v4030 = vsel %vm2001, %v3998, %v3726
      %v4031 = vsel %vm2001, %v3999, %v3728
      %v4032 = vsel %vm2001, %v4000, %v3730
      %v4033 = vsel %vm2001, %v4001, %v3732
      %v4034 = vsel %vm2001, %v4002, %v3734
      %v4035 = vsel %vm2001, %v4003, %v3736
      %v4036 = vsel %vm2001, %v4004, %v3738
      %v4037 = vsel %vm2001, %v4005, %v3740
      %v4038 = vsel %vm2001, %v4006, %v3742
      %v4039 = vsel %vm2001, %v4007, %v3744
      %v4040 = vsel %vm2001, %v4008, %v3746
      %v4041 = vsel %vm2001, %v4009, %v3748
      %v4042 = vsel %vm2001, %v4010, %v3750
      %v4043 = vsel %vm2001, %v4011, %v3752
      %v4044 = vsel %vm2001, %v4012, %v3754
      %v4045 = vsel %vm2001, %v4013, %v3756
      %v4046 = vsel %vm2001, %v4014, %v3758
      %v4047 = vld [vmem:[%s3] sm:$0xff]
      %v4048 = vld [vmem:[%s3 + $0x8] sm:$0xff]
      %v4049 = vld [vmem:[%s3 + $0x10] sm:$0xff]
      %v4050 = vld [vmem:[%s3 + $0x18] sm:$0xff]
      %v4051 = vld [vmem:[%s3 + $0x20] sm:$0xf]
      %v4053 = vsel %vm2043, %v4015, 0
      %v4056 = vsel %vm2043, %v4016, 0
      %v4059 = vsel %vm2043, %v4017, 0
      %v4062 = vsel %vm2043, %v4018, 0
      %v4065 = vsel %vm2043, %v4019, 0
      %v4068 = vsel %vm2043, %v4020, 0
      %v4071 = vsel %vm2043, %v4021, 0
      %v4074 = vsel %vm2043, %v4022, 0
      %v4077 = vsel %vm2043, %v4023, 0
      %v4080 = vsel %vm2043, %v4024, 0
      %v4083 = vsel %vm2043, %v4025, 0
      %v4086 = vsel %vm2043, %v4026, 0
      %v4089 = vsel %vm2043, %v4027, 0
      %v4092 = vsel %vm2043, %v4028, 0
      %v4095 = vsel %vm2043, %v4029, 0
      %v4098 = vsel %vm2043, %v4030, 0
      %v4101 = vsel %vm2043, %v4031, 0
      %v4104 = vsel %vm2043, %v4032, 0
      %v4107 = vsel %vm2043, %v4033, 0
      %v4110 = vsel %vm2043, %v4034, 0
      %v4113 = vsel %vm2043, %v4035, 0
      %v4116 = vsel %vm2043, %v4036, 0
      %v4119 = vsel %vm2043, %v4037, 0
      %v4122 = vsel %vm2043, %v4038, 0
      %v4125 = vsel %vm2043, %v4039, 0
      %v4128 = vsel %vm2043, %v4040, 0
      %v4131 = vsel %vm2043, %v4041, 0
      %v4134 = vsel %vm2043, %v4042, 0
      %v4137 = vsel %vm2043, %v4043, 0
      %v4140 = vsel %vm2043, %v4044, 0
      %v4143 = vsel %vm2043, %v4045, 0
      %v4146 = vsel %vm2043, %v4046, 0
      %v4149 = vsel %vm2152, %v4051, 0
      %4151 = vmatprep.subr.mxu0 0.0
      %4152 = vmatpush1.msra.mxu0 %v4047
      %4153 = vmatprep.subr.mxu0 0.0
      %4154 = vmatpush1.msra.mxu0 %v4048
      %4155 = vmatprep.subr.mxu0 0.0
      %4156 = vmatpush1.msra.mxu0 %v4049
      %4157 = vmatprep.subr.mxu0 0.0
      %4158 = vmatpush1.msra.mxu0 %v4050
      %4159 = vmatprep.subr.mxu0 0.0
      %4160 = vmatpush1.msra.mxu0 %v4149
      %4161 = vmatprep.subr.mxu0 0.0
      %4162 = vmatpush1.msra.mxu0 0.0
      %4163 = vmatprep.subr.mxu0 0.0
      %4164 = vmatpush1.msra.mxu0 0.0
      %4165 = vmatprep.subr.mxu0 0.0
      %4166 = vmatpush1.msra.mxu0 0.0
      %4167 = vmatprep.subr.mxu0 0.0
      %4168 = vmatpush1.msra.mxu0 0.0
      %4169 = vmatprep.subr.mxu0 0.0
      %4170 = vmatpush1.msra.mxu0 0.0
      %4171 = vmatprep.subr.mxu0 0.0
      %4172 = vmatpush1.msra.mxu0 0.0
      %4173 = vmatprep.subr.mxu0 0.0
      %4174 = vmatpush1.msra.mxu0 0.0
      %4175 = vmatprep.subr.mxu0 0.0
      %4176 = vmatpush1.msra.mxu0 0.0
      %4177 = vmatprep.subr.mxu0 0.0
      %4178 = vmatpush1.msra.mxu0 0.0
      %4179 = vmatprep.subr.mxu0 0.0
      %4180 = vmatpush1.msra.mxu0 0.0
      %4181 = vmatprep.subr.mxu0 0.0
      %4182 = vmatpush1.msra.mxu0 0.0
      %4183 = vmatprep.subr.mxu0 0.0
      %4184 = vmatpush1.msra.mxu0 0.0
      %4185 = vmatprep.subr.mxu0 0.0
      %4186 = vmatpush1.msra.mxu0 0.0
      %4187 = vmatprep.subr.mxu0 0.0
      %4188 = vmatpush1.msra.mxu0 0.0
      %4189 = vmatprep.subr.mxu0 0.0
      %4190 = vmatpush1.msra.mxu0 0.0
      %4191 = vmatprep.subr.mxu0 0.0
      %4192 = vmatpush1.msra.mxu0 0.0
      %4193 = vmatprep.subr.mxu0 0.0
      %4194 = vmatpush1.msra.mxu0 0.0
      %4195 = vmatprep.subr.mxu0 0.0
      %4196 = vmatpush1.msra.mxu0 0.0
      %4197 = vmatprep.subr.mxu0 0.0
      %4198 = vmatpush1.msra.mxu0 0.0
      %4199 = vmatprep.subr.mxu0 0.0
      %4200 = vmatpush1.msra.mxu0 0.0
      %4201 = vmatprep.subr.mxu0 0.0
      %4202 = vmatpush1.msra.mxu0 0.0
      %4203 = vmatprep.subr.mxu0 0.0
      %4204 = vmatpush1.msra.mxu0 0.0
      %4205 = vmatprep.subr.mxu0 0.0
      %4206 = vmatpush1.msra.mxu0 0.0
      %4207 = vmatprep.subr.mxu0 0.0
      %4208 = vmatpush1.msra.mxu0 0.0
      %4209 = vmatprep.subr.mxu0 0.0
      %4210 = vmatpush1.msra.mxu0 0.0
      %4211 = vmatprep.subr.mxu0 0.0
      %4212 = vmatpush1.msra.mxu0 0.0
      %4213 = vmatprep.subr.mxu0 0.0
      %4214 = vmatpush1.msra.mxu0 0.0
      %4215 = vmatprep.mubr.f32.mxu0 0.0
      %4216 = vmatmul.mubr.f32.gmra.mrb[0].mxu0 %v4053
      %v4217 = vpop.f32.mrb[0].mxu0
      %v4218 = vadd.f32 0.0, %v4217
      %v4219 = vpop.f32.mrb[0].mxu0
      %4220 = vmatprep.mubr.f32.mxu0 0.0
      %4221 = vmatmul.mubr.f32.gmra.mrb[0].mxu0 %v4056
      %v4222 = vpop.f32.mrb[0].mxu0
      %v4223 = vadd.f32 0.0, %v4222
      %v4224 = vpop.f32.mrb[0].mxu0
      %4225 = vmatprep.mubr.f32.mxu0 0.0
      %4226 = vmatmul.mubr.f32.gmra.mrb[0].mxu0 %v4059
      %v4227 = vpop.f32.mrb[0].mxu0
      %v4228 = vadd.f32 0.0, %v4227
      %v4229 = vpop.f32.mrb[0].mxu0
      %4230 = vmatprep.mubr.f32.mxu0 0.0
      %4231 = vmatmul.mubr.f32.gmra.mrb[0].mxu0 %v4062
      %v4232 = vpop.f32.mrb[0].mxu0
      %v4233 = vadd.f32 0.0, %v4232
      %v4234 = vpop.f32.mrb[0].mxu0
      %4235 = vmatprep.mubr.f32.mxu0 0.0
      %4236 = vmatmul.mubr.f32.gmra.mrb[0].mxu0 %v4065
      %v4237 = vpop.f32.mrb[0].mxu0
      %v4238 = vadd.f32 0.0, %v4237
      %v4239 = vpop.f32.mrb[0].mxu0
      %4240 = vmatprep.mubr.f32.mxu0 0.0
      %4241 = vmatmul.mubr.f32.gmra.mrb[0].mxu0 %v4068
      %v4242 = vpop.f32.mrb[0].mxu0
      %v4243 = vadd.f32 0.0, %v4242
      %v4244 = vpop.f32.mrb[0].mxu0
      %4245 = vmatprep.mubr.f32.mxu0 0.0
      %4246 = vmatmul.mubr.f32.gmra.mrb[0].mxu0 %v4071
      %v4247 = vpop.f32.mrb[0].mxu0
      %v4248 = vadd.f32 0.0, %v4247
      %v4249 = vpop.f32.mrb[0].mxu0
      %4250 = vmatprep.mubr.f32.mxu0 0.0
      %4251 = vmatmul.mubr.f32.gmra.mrb[0].mxu0 %v4074
      %v4252 = vpop.f32.mrb[0].mxu0
      %v4253 = vadd.f32 0.0, %v4252
      %v4254 = vpop.f32.mrb[0].mxu0
      %4255 = vmatprep.mubr.f32.mxu0 0.0
      %4256 = vmatmul.mubr.f32.gmra.mrb[0].mxu0 %v4077
      %v4257 = vpop.f32.mrb[0].mxu0
      %v4258 = vadd.f32 0.0, %v4257
      %v4259 = vpop.f32.mrb[0].mxu0
      %4260 = vmatprep.mubr.f32.mxu0 0.0
      %4261 = vmatmul.mubr.f32.gmra.mrb[0].mxu0 %v4080
      %v4262 = vpop.f32.mrb[0].mxu0
      %v4263 = vadd.f32 0.0, %v4262
      %v4264 = vpop.f32.mrb[0].mxu0
      %4265 = vmatprep.mubr.f32.mxu0 0.0
      %4266 = vmatmul.mubr.f32.gmra.mrb[0].mxu0 %v4083
      %v4267 = vpop.f32.mrb[0].mxu0
      %v4268 = vadd.f32 0.0, %v4267
      %v4269 = vpop.f32.mrb[0].mxu0
      %4270 = vmatprep.mubr.f32.mxu0 0.0
      %4271 = vmatmul.mubr.f32.gmra.mrb[0].mxu0 %v4086
      %v4272 = vpop.f32.mrb[0].mxu0
      %v4273 = vadd.f32 0.0, %v4272
      %v4274 = vpop.f32.mrb[0].mxu0
      %4275 = vmatprep.mubr.f32.mxu0 0.0
      %4276 = vmatmul.mubr.f32.gmra.mrb[0].mxu0 %v4089
      %v4277 = vpop.f32.mrb[0].mxu0
      %v4278 = vadd.f32 0.0, %v4277
      %v4279 = vpop.f32.mrb[0].mxu0
      %4280 = vmatprep.mubr.f32.mxu0 0.0
      %4281 = vmatmul.mubr.f32.gmra.mrb[0].mxu0 %v4092
      %v4282 = vpop.f32.mrb[0].mxu0
      %v4283 = vadd.f32 0.0, %v4282
      %v4284 = vpop.f32.mrb[0].mxu0
      %4285 = vmatprep.mubr.f32.mxu0 0.0
      %4286 = vmatmul.mubr.f32.gmra.mrb[0].mxu0 %v4095
      %v4287 = vpop.f32.mrb[0].mxu0
      %v4288 = vadd.f32 0.0, %v4287
      %v4289 = vpop.f32.mrb[0].mxu0
      %4290 = vmatprep.mubr.f32.mxu0 0.0
      %4291 = vmatmul.mubr.f32.gmra.mrb[0].mxu0 %v4098
      %v4292 = vpop.f32.mrb[0].mxu0
      %v4293 = vadd.f32 0.0, %v4292
      %v4294 = vpop.f32.mrb[0].mxu0
      %4295 = vmatprep.mubr.f32.mxu0 0.0
      %4296 = vmatmul.mubr.f32.gmra.mrb[0].mxu0 %v4101
      %v4297 = vpop.f32.mrb[0].mxu0
      %v4298 = vadd.f32 0.0, %v4297
      %v4299 = vpop.f32.mrb[0].mxu0
      %4300 = vmatprep.mubr.f32.mxu0 0.0
      %4301 = vmatmul.mubr.f32.gmra.mrb[0].mxu0 %v4104
      %v4302 = vpop.f32.mrb[0].mxu0
      %v4303 = vadd.f32 0.0, %v4302
      %v4304 = vpop.f32.mrb[0].mxu0
      %4305 = vmatprep.mubr.f32.mxu0 0.0
      %4306 = vmatmul.mubr.f32.gmra.mrb[0].mxu0 %v4107
      %v4307 = vpop.f32.mrb[0].mxu0
      %v4308 = vadd.f32 0.0, %v4307
      %v4309 = vpop.f32.mrb[0].mxu0
      %4310 = vmatprep.mubr.f32.mxu0 0.0
      %4311 = vmatmul.mubr.f32.gmra.mrb[0].mxu0 %v4110
      %v4312 = vpop.f32.mrb[0].mxu0
      %v4313 = vadd.f32 0.0, %v4312
      %v4314 = vpop.f32.mrb[0].mxu0
      %4315 = vmatprep.mubr.f32.mxu0 0.0
      %4316 = vmatmul.mubr.f32.gmra.mrb[0].mxu0 %v4113
      %v4317 = vpop.f32.mrb[0].mxu0
      %v4318 = vadd.f32 0.0, %v4317
      %v4319 = vpop.f32.mrb[0].mxu0
      %4320 = vmatprep.mubr.f32.mxu0 0.0
      %4321 = vmatmul.mubr.f32.gmra.mrb[0].mxu0 %v4116
      %v4322 = vpop.f32.mrb[0].mxu0
      %v4323 = vadd.f32 0.0, %v4322
      %v4324 = vpop.f32.mrb[0].mxu0
      %4325 = vmatprep.mubr.f32.mxu0 0.0
      %4326 = vmatmul.mubr.f32.gmra.mrb[0].mxu0 %v4119
      %v4327 = vpop.f32.mrb[0].mxu0
      %v4328 = vadd.f32 0.0, %v4327
      %v4329 = vpop.f32.mrb[0].mxu0
      %4330 = vmatprep.mubr.f32.mxu0 0.0
      %4331 = vmatmul.mubr.f32.gmra.mrb[0].mxu0 %v4122
      %v4332 = vpop.f32.mrb[0].mxu0
      %v4333 = vadd.f32 0.0, %v4332
      %v4334 = vpop.f32.mrb[0].mxu0
      %4335 = vmatprep.mubr.f32.mxu0 0.0
      %4336 = vmatmul.mubr.f32.gmra.mrb[0].mxu0 %v4125
      %v4337 = vpop.f32.mrb[0].mxu0
      %v4338 = vadd.f32 0.0, %v4337
      %v4339 = vpop.f32.mrb[0].mxu0
      %4340 = vmatprep.mubr.f32.mxu0 0.0
      %4341 = vmatmul.mubr.f32.gmra.mrb[0].mxu0 %v4128
      %v4342 = vpop.f32.mrb[0].mxu0
      %v4343 = vadd.f32 0.0, %v4342
      %v4344 = vpop.f32.mrb[0].mxu0
      %4345 = vmatprep.mubr.f32.mxu0 0.0
      %4346 = vmatmul.mubr.f32.gmra.mrb[0].mxu0 %v4131
      %v4347 = vpop.f32.mrb[0].mxu0
      %v4348 = vadd.f32 0.0, %v4347
      %v4349 = vpop.f32.mrb[0].mxu0
      %4350 = vmatprep.mubr.f32.mxu0 0.0
      %4351 = vmatmul.mubr.f32.gmra.mrb[0].mxu0 %v4134
      %v4352 = vpop.f32.mrb[0].mxu0
      %v4353 = vadd.f32 0.0, %v4352
      %v4354 = vpop.f32.mrb[0].mxu0
      %4355 = vmatprep.mubr.f32.mxu0 0.0
      %4356 = vmatmul.mubr.f32.gmra.mrb[0].mxu0 %v4137
      %v4357 = vpop.f32.mrb[0].mxu0
      %v4358 = vadd.f32 0.0, %v4357
      %v4359 = vpop.f32.mrb[0].mxu0
      %4360 = vmatprep.mubr.f32.mxu0 0.0
      %4361 = vmatmul.mubr.f32.gmra.mrb[0].mxu0 %v4140
      %v4362 = vpop.f32.mrb[0].mxu0
      %v4363 = vadd.f32 0.0, %v4362
      %v4364 = vpop.f32.mrb[0].mxu0
      %4365 = vmatprep.mubr.f32.mxu0 0.0
      %4366 = vmatmul.mubr.f32.gmra.mrb[0].mxu0 %v4143
      %v4367 = vpop.f32.mrb[0].mxu0
      %v4368 = vadd.f32 0.0, %v4367
      %v4369 = vpop.f32.mrb[0].mxu0
      %4370 = vmatprep.mubr.f32.mxu0 0.0
      %4371 = vmatmul.mubr.f32.gmra.mrb[0].mxu0 %v4146
      %v4372 = vpop.f32.mrb[0].mxu0
      %v4373 = vadd.f32 0.0, %v4372
      %v4374 = vpop.f32.mrb[0].mxu0
      %4375 = vdwg.mxu0
      %v4376 = vld [vmem:[%s4] sm:$0x1]
      %v4378 = vlaneseq
      %v4379 = vshrl.u32 %v4378, 7
      %v4380 = vsub.s32 0, %v4379
      %v4381 = vrot.slane %v4376, %v4380
      %v4383 = vadd.f32 %v4218, %v4381
      %v4384 = vadd.f32 %v4223, %v4381
      %v4385 = vadd.f32 %v4228, %v4381
      %v4386 = vadd.f32 %v4233, %v4381
      %v4387 = vadd.f32 %v4238, %v4381
      %v4388 = vadd.f32 %v4243, %v4381
      %v4389 = vadd.f32 %v4248, %v4381
      %v4390 = vadd.f32 %v4253, %v4381
      %v4391 = vadd.f32 %v4258, %v4381
      %v4392 = vadd.f32 %v4263, %v4381
      %v4393 = vadd.f32 %v4268, %v4381
      %v4394 = vadd.f32 %v4273, %v4381
      %v4395 = vadd.f32 %v4278, %v4381
      %v4396 = vadd.f32 %v4283, %v4381
      %v4397 = vadd.f32 %v4288, %v4381
      %v4398 = vadd.f32 %v4293, %v4381
      %v4399 = vadd.f32 %v4298, %v4381
      %v4400 = vadd.f32 %v4303, %v4381
      %v4401 = vadd.f32 %v4308, %v4381
      %v4402 = vadd.f32 %v4313, %v4381
      %v4403 = vadd.f32 %v4318, %v4381
      %v4404 = vadd.f32 %v4323, %v4381
      %v4405 = vadd.f32 %v4328, %v4381
      %v4406 = vadd.f32 %v4333, %v4381
      %v4407 = vadd.f32 %v4338, %v4381
      %v4408 = vadd.f32 %v4343, %v4381
      %v4409 = vadd.f32 %v4348, %v4381
      %v4410 = vadd.f32 %v4353, %v4381
      %v4411 = vadd.f32 %v4358, %v4381
      %v4412 = vadd.f32 %v4363, %v4381
      %v4413 = vadd.f32 %v4368, %v4381
      %v4414 = vadd.f32 %v4373, %v4381
      %v4415 = vld [vmem:[%s481 + $0x1] sm:$0xff]
      %v4416 = vld [vmem:[%s481 + $0x9] sm:$0xff]
      %v4417 = vld [vmem:[%s481 + $0x19] sm:$0xff]
      %v4418 = vld [vmem:[%s481 + $0x21] sm:$0xff]
      %v4419 = vld [vmem:[%s481 + $0x31] sm:$0xff]
      %v4420 = vld [vmem:[%s481 + $0x39] sm:$0xff]
      %v4421 = vld [vmem:[%s481 + $0x49] sm:$0xff]
      %v4422 = vld [vmem:[%s481 + $0x51] sm:$0xff]
      %v4423 = vld [vmem:[%s481 + $0x61] sm:$0xff]
      %v4424 = vld [vmem:[%s481 + $0x69] sm:$0xff]
      %v4425 = vld [vmem:[%s481 + $0x79] sm:$0xff]
      %v4426 = vld [vmem:[%s481 + $0x81] sm:$0xff]
      %v4427 = vld [vmem:[%s481 + $0x91] sm:$0xff]
      %v4428 = vld [vmem:[%s481 + $0x99] sm:$0xff]
      %v4429 = vld [vmem:[%s481 + $0xa9] sm:$0xff]
      %v4430 = vld [vmem:[%s481 + $0xb1] sm:$0xff]
      %v4431 = vld [vmem:[%s481 + $0xc1] sm:$0xff]
      %v4432 = vld [vmem:[%s481 + $0xc9] sm:$0xff]
      %v4433 = vld [vmem:[%s481 + $0xd9] sm:$0xff]
      %v4434 = vld [vmem:[%s481 + $0xe1] sm:$0xff]
      %v4435 = vld [vmem:[%s481 + $0xf1] sm:$0xff]
      %v4436 = vld [vmem:[%s481 + $0xf9] sm:$0xff]
      %v4437 = vld [vmem:[%s481 + $0x109] sm:$0xff]
      %v4438 = vld [vmem:[%s481 + $0x111] sm:$0xff]
      %v4439 = vld [vmem:[%s481 + $0x121] sm:$0xff]
      %v4440 = vld [vmem:[%s481 + $0x129] sm:$0xff]
      %v4441 = vld [vmem:[%s481 + $0x139] sm:$0xff]
      %v4442 = vld [vmem:[%s481 + $0x141] sm:$0xff]
      %v4443 = vld [vmem:[%s481 + $0x151] sm:$0xff]
      %v4444 = vld [vmem:[%s481 + $0x159] sm:$0xff]
      %v4445 = vld [vmem:[%s481 + $0x169] sm:$0xff]
      %v4446 = vld [vmem:[%s481 + $0x171] sm:$0xff]
      %v4447 = vadd.f32 %v4383, %v4415
      %v4448 = vadd.f32 %v4384, %v4416
      %v4449 = vadd.f32 %v4385, %v4417
      %v4450 = vadd.f32 %v4386, %v4418
      %v4451 = vadd.f32 %v4387, %v4419
      %v4452 = vadd.f32 %v4388, %v4420
      %v4453 = vadd.f32 %v4389, %v4421
      %v4454 = vadd.f32 %v4390, %v4422
      %v4455 = vadd.f32 %v4391, %v4423
      %v4456 = vadd.f32 %v4392, %v4424
      %v4457 = vadd.f32 %v4393, %v4425
      %v4458 = vadd.f32 %v4394, %v4426
      %v4459 = vadd.f32 %v4395, %v4427
      %v4460 = vadd.f32 %v4396, %v4428
      %v4461 = vadd.f32 %v4397, %v4429
      %v4462 = vadd.f32 %v4398, %v4430
      %v4463 = vadd.f32 %v4399, %v4431
      %v4464 = vadd.f32 %v4400, %v4432
      %v4465 = vadd.f32 %v4401, %v4433
      %v4466 = vadd.f32 %v4402, %v4434
      %v4467 = vadd.f32 %v4403, %v4435
      %v4468 = vadd.f32 %v4404, %v4436
      %v4469 = vadd.f32 %v4405, %v4437
      %v4470 = vadd.f32 %v4406, %v4438
      %v4471 = vadd.f32 %v4407, %v4439
      %v4472 = vadd.f32 %v4408, %v4440
      %v4473 = vadd.f32 %v4409, %v4441
      %v4474 = vadd.f32 %v4410, %v4442
      %v4475 = vadd.f32 %v4411, %v4443
      %v4476 = vadd.f32 %v4412, %v4444
      %v4477 = vadd.f32 %v4413, %v4445
      %v4478 = vadd.f32 %v4414, %v4446
      %v4479 = vmax.f32 %v4447, 0.0
      %v4480 = vmax.f32 %v4448, 0.0
      %v4481 = vmax.f32 %v4449, 0.0
      %v4482 = vmax.f32 %v4450, 0.0
      %v4483 = vmax.f32 %v4451, 0.0
      %v4484 = vmax.f32 %v4452, 0.0
      %v4485 = vmax.f32 %v4453, 0.0
      %v4486 = vmax.f32 %v4454, 0.0
      %v4487 = vmax.f32 %v4455, 0.0
      %v4488 = vmax.f32 %v4456, 0.0
      %v4489 = vmax.f32 %v4457, 0.0
      %v4490 = vmax.f32 %v4458, 0.0
      %v4491 = vmax.f32 %v4459, 0.0
      %v4492 = vmax.f32 %v4460, 0.0
      %v4493 = vmax.f32 %v4461, 0.0
      %v4494 = vmax.f32 %v4462, 0.0
      %v4495 = vmax.f32 %v4463, 0.0
      %v4496 = vmax.f32 %v4464, 0.0
      %v4497 = vmax.f32 %v4465, 0.0
      %v4498 = vmax.f32 %v4466, 0.0
      %v4499 = vmax.f32 %v4467, 0.0
      %v4500 = vmax.f32 %v4468, 0.0
      %v4501 = vmax.f32 %v4469, 0.0
      %v4502 = vmax.f32 %v4470, 0.0
      %v4503 = vmax.f32 %v4471, 0.0
      %v4504 = vmax.f32 %v4472, 0.0
      %v4505 = vmax.f32 %v4473, 0.0
      %v4506 = vmax.f32 %v4474, 0.0
      %v4507 = vmax.f32 %v4475, 0.0
      %v4508 = vmax.f32 %v4476, 0.0
      %v4509 = vmax.f32 %v4477, 0.0
      %v4510 = vmax.f32 %v4478, 0.0
      %4511 = vst.msk [vmem:[%s262] sm:$0xff] %vm1742, %v4479
      %4512 = vst.msk [vmem:[%s262 + $0x8] sm:$0xff] %vm1742, %v4480
      %4513 = vst.msk [vmem:[%s262 + $0x10] sm:$0xff] %vm1742, %v4481
      %4514 = vst.msk [vmem:[%s262 + $0x18] sm:$0xff] %vm1742, %v4482
      %4515 = vst.msk [vmem:[%s262 + $0x20] sm:$0xff] %vm1742, %v4483
      %4516 = vst.msk [vmem:[%s262 + $0x28] sm:$0xff] %vm1742, %v4484
      %4517 = vst.msk [vmem:[%s262 + $0x30] sm:$0xff] %vm1742, %v4485
      %4518 = vst.msk [vmem:[%s262 + $0x38] sm:$0xff] %vm1742, %v4486
      %4519 = vst.msk [vmem:[%s262 + $0x40] sm:$0xff] %vm1742, %v4487
      %4520 = vst.msk [vmem:[%s262 + $0x48] sm:$0xff] %vm1742, %v4488
      %4521 = vst.msk [vmem:[%s262 + $0x50] sm:$0xff] %vm1742, %v4489
      %4522 = vst.msk [vmem:[%s262 + $0x58] sm:$0xff] %vm1742, %v4490
      %4523 = vst.msk [vmem:[%s262 + $0x60] sm:$0xff] %vm1742, %v4491
      %4524 = vst.msk [vmem:[%s262 + $0x68] sm:$0xff] %vm1742, %v4492
      %4525 = vst.msk [vmem:[%s262 + $0x70] sm:$0xff] %vm1742, %v4493
      %4526 = vst.msk [vmem:[%s262 + $0x78] sm:$0xff] %vm1742, %v4494
      %4527 = vst.msk [vmem:[%s262 + $0x80] sm:$0xff] %vm1742, %v4495
      %4528 = vst.msk [vmem:[%s262 + $0x88] sm:$0xff] %vm1742, %v4496
      %4529 = vst.msk [vmem:[%s262 + $0x90] sm:$0xff] %vm1742, %v4497
      %4530 = vst.msk [vmem:[%s262 + $0x98] sm:$0xff] %vm1742, %v4498
      %4531 = vst.msk [vmem:[%s262 + $0xa0] sm:$0xff] %vm1742, %v4499
      %4532 = vst.msk [vmem:[%s262 + $0xa8] sm:$0xff] %vm1742, %v4500
      %4533 = vst.msk [vmem:[%s262 + $0xb0] sm:$0xff] %vm1742, %v4501
      %4534 = vst.msk [vmem:[%s262 + $0xb8] sm:$0xff] %vm1742, %v4502
      %4535 = vst.msk [vmem:[%s262 + $0xc0] sm:$0xff] %vm1742, %v4503
      %4536 = vst.msk [vmem:[%s262 + $0xc8] sm:$0xff] %vm1742, %v4504
      %4537 = vst.msk [vmem:[%s262 + $0xd0] sm:$0xff] %vm1742, %v4505
      %4538 = vst.msk [vmem:[%s262 + $0xd8] sm:$0xff] %vm1742, %v4506
      %4539 = vst.msk [vmem:[%s262 + $0xe0] sm:$0xff] %vm1742, %v4507
      %4540 = vst.msk [vmem:[%s262 + $0xe8] sm:$0xff] %vm1742, %v4508
      %4541 = vst.msk [vmem:[%s262 + $0xf0] sm:$0xff] %vm1742, %v4509
      %4542 = vst.msk [vmem:[%s262 + $0xf8] sm:$0xff] %vm1742, %v4510
      %s4543 = smul.u32 16, %s21
      %p4544 = scmp.lt.s32.totalorder %s20, 1
      %s4545 = scalar_select %p4544, %s20, 1
      %p4546 = scmp.lt.s32.totalorder %s4543, 15
      %s4547 = scalar_select %p4546, %s4543, 15
      %s4548 = smul.addr %s4547, 2
      %s4549 = smul.addr %s4545, 32
      %s4550 = sadd.s32 %s4548, %s4549
      %s4551 = smul.addr %s4550, 8
      %s4552 = scalar_lea.vmem %s5, %s4551
      // Predicated region
      $region41: #{tpu_custom_call.1} parent=39 // pred_check
        %p4553 = pneg %p160
      $region42: #{tpu_custom_call.1} parent=39 // pred_check_branch
        %4555 = sbr.rel (%p4553) target = $region44
      $region43: #{tpu_custom_call.1} parent=39 // pred_region
        %s4556 = smul.u32 16, %s21
      $region44: #{tpu_custom_call.1} parent=39 // pred_fallthru
        _
    $region40: #{tpu_custom_call.1} parent=5 // pred_fallthru
      _
    %p4557 = scmp.le.s32.totalorder 2, %s11
    // Predicated region
    $region45: #{tpu_custom_call.1} parent=5 // pred_check
      %p4558 = pneg %p4557
    $region46: #{tpu_custom_call.1} parent=5 // pred_check_branch
      %4560 = sbr.rel (%p4558) target = $region48
    $region47: #{tpu_custom_call.1} parent=5 // pred_region
      %s4561 = ssub.s32 %s11, 2
      // Predicated region
      $region49: #{tpu_custom_call.1} parent=47 // pred_check
        %p4562 = pneg %p166
      $region50: #{tpu_custom_call.1} parent=47 // pred_check_branch
        %4564 = sbr.rel (%p4562) target = $region52
      $region51: #{tpu_custom_call.1} parent=47 // pred_region
        %s4565 = smul.u32 16, %s23
        %p4566 = scmp.lt.s32.totalorder %s22, 1
        %s4567 = scalar_select %p4566, %s22, 1
        %p4568 = scmp.lt.s32.totalorder %s4565, 15
        %s4569 = scalar_select %p4568, %s4565, 15
        %s4570 = smul.addr %s4569, 2
        %s4571 = smul.addr %s4567, 32
        %s4572 = sadd.s32 %s4570, %s4571
        %s4573 = smul.addr %s4572, 8
        %s4574 = scalar_lea.vmem %s5, %s4573
      $region52: #{tpu_custom_call.1} parent=47 // pred_fallthru
        _
    $region48: #{tpu_custom_call.1} parent=5 // pred_fallthru
      _
  $region6: #{tpu_custom_call.1} parent=0 // loop_footer
    %s15 = sadd.s32 1, %s11
  $region7: #{tpu_custom_call.1} parent=0 // loop_footer_branch
    %10 = sbr.rel target = $region3
  $region8: #{tpu_custom_call.1} parent=0 // loop_exit
    _

</llo_original>
